<compile_context>
chip_gen: v7x
topology: tpu7x:2x2x1
jax: 0.10.0
libtpu: 0.0.40
codegen_flags: <defaults>
</compile_context>

<pallas_src>
import functools

import jax
import jax.numpy as jnp
from jax import lax
from jax.experimental import pallas as pl
from jax.experimental.pallas import tpu as pltpu

START_TAG = "<START>"
STOP_TAG = "<STOP>"


# ----------------------------------------------------------------------------
# Fused kernel: HBM embedding gather + packed BiLSTM + hidden2tag + Viterbi
# ----------------------------------------------------------------------------
def _bilstm_crf_kernel(ids_ref,                       # SMEM (B, T) int32 (scalar prefetch)
                       emb_hbm,                       # HBM  (V, E) f32   (pl.ANY)
                       wih_ref, whh_ref, b_ref,       # (E,8H2) bf16, (2H2,8H2) bf16, (1,8H2) f32
                       wtag_ref, btag_ref, trans_ref, # (2H2,NT) bf16, (1,NT) f32, (NT,NT) f32
                       score_ref, path_ref,           # (1,1,1) f32, (1,1,T) int32
                       x_s, dma_sems,                 # VMEM (T,E) f32, DMA sems (T,)
                       *, start_idx, stop_idx):
    b = pl.program_id(0)
    T, E = x_s.shape
    H2x2, G = whh_ref.shape          # 2*H2, 8*H2
    H2 = H2x2 // 2
    NT = trans_ref.shape[0]

    # ---- embedding gather: per-row DMAs straight from HBM -------------------
    copies = []
    for t in range(T):
        idx = ids_ref[b, t]
        cp = pltpu.make_async_copy(emb_hbm.at[pl.ds(idx, 1), :],
                                   x_s.at[pl.ds(t, 1), :],
                                   dma_sems.at[t])
        cp.start()
        copies.append(cp)
    for cp in copies:
        cp.wait()

    # ---- hoisted input projection for BOTH directions and all gates --------
    x_bf = x_s[...].astype(jnp.bfloat16)
    xg = (jnp.dot(x_bf, wih_ref[...], preferred_element_type=jnp.float32)
          + b_ref[...])                                             # (T, 8*H2) f32

    whh = whh_ref[...]                                              # bf16, block-diag per dir
    lanes_g = lax.broadcasted_iota(jnp.int32, (1, G), 1)
    fwd_lane = (lanes_g % H2x2) < H2        # gate-major, direction-minor layout

    zeros = jnp.zeros((1, H2x2), jnp.float32)
    h, c = zeros, zeros                      # lanes [0:H2]=fwd, [H2:2H2]=bwd
    h_steps = []
    for i in range(T):
        tf, tb = i, T - 1 - i
        # per-step pre-activation: fwd lanes from token tf, bwd lanes from tb
        pre = jnp.where(fwd_lane, xg[tf:tf + 1, :], xg[tb:tb + 1, :])   # (1, G)
        g = pre + jnp.dot(h.astype(jnp.bfloat16), whh,
                          preferred_element_type=jnp.float32)           # one MXU dot
        s_all = jax.nn.sigmoid(g)            # one 128-lane EUP pass
        t_all = jnp.tanh(g)                  # one 128-lane EUP pass
        i_g = s_all[:, 0 * H2x2:1 * H2x2]
        f_g = s_all[:, 1 * H2x2:2 * H2x2]
        g_g = t_all[:, 2 * H2x2:3 * H2x2]
        o_g = s_all[:, 3 * H2x2:4 * H2x2]
        c = f_g * c + i_g * g_g
        h = o_g * jnp.tanh(c)
        h_steps.append(h)                    # [h_fwd(token tf) | h_bwd(token tb)]

    # ---- reassemble per-token rows [h_fwd(t) | h_bwd(t)] with lane selects --
    lanes_h = lax.broadcasted_iota(jnp.int32, (1, H2x2), 1)
    fwd_half = lanes_h < H2
    rows = [jnp.where(fwd_half, h_steps[t], h_steps[T - 1 - t]) for t in range(T)]
    hs = jnp.concatenate(rows, axis=0)                               # (T, 2*H2) f32

    # ---- hidden2tag: single dot with concatenated tag weight ----------------
    feats = (jnp.dot(hs.astype(jnp.bfloat16), wtag_ref[...],
                     preferred_element_type=jnp.float32)
             + btag_ref[...])                                        # (T, NT) f32

    # ---- Viterbi recursion (f32, fully unrolled, backpointers in vregs) -----
    trans = trans_ref[...]                                           # (NT, NT)
    lane_nt = lax.broadcasted_iota(jnp.int32, (1, NT), 1)
    col_nn = lax.broadcasted_iota(jnp.int32, (NT, NT), 1)
    fv = jnp.where(lane_nt == start_idx,
                   jnp.float32(0.0), jnp.float32(-10000.0))          # (1, NT)

    bptrs_all = []
    for t in range(T):
        M = trans + fv                                               # [next, prev]
        vmax = jnp.max(M, axis=1, keepdims=True)                     # (NT, 1)
        # first-argmax tie-break (lowest index); benign difference vs torch
        bptrs = jnp.min(jnp.where(M == vmax, col_nn, NT), axis=1)    # (NT,)
        bptrs_all.append(bptrs[None, :].astype(jnp.int32))           # (1, NT)
        fv = jnp.max(M, axis=1)[None, :] + feats[t:t + 1, :]         # (1, NT)

    terminal = fv + trans[stop_idx:stop_idx + 1, :]                  # (1, NT)
    best_score = jnp.max(terminal, axis=1, keepdims=True)            # (1, 1)
    best = jnp.min(jnp.where(terminal == best_score, lane_nt, NT),
                   axis=1, keepdims=True)                            # (1, 1) int32
    score_ref[0, :, :] = best_score

    # ---- in-kernel backtrace (bptrs_all[0] unused == torch pops START) ------
    lane_t = lax.broadcasted_iota(jnp.int32, (1, T), 1)
    path = jnp.where(lane_t == (T - 1), best, 0)                     # (1, T) int32
    for t in range(T - 1, 0, -1):
        row = bptrs_all[t]                                           # (1, NT)
        best = jnp.sum(jnp.where(lane_nt == best, row, 0),
                       axis=1, keepdims=True)                        # (1, 1)
        path = jnp.where(lane_t == (t - 1), best, path)
    path_ref[0, :, :] = path


# ----------------------------------------------------------------------------
# Forward pass: (B, T) int32 sentences -> (B,) scores, (B, T) best tag paths
# ----------------------------------------------------------------------------
def bilstm_crf_forward(sentences, params, start_idx, stop_idx):
    B, T = sentences.shape
    V, E = params["embedding"].shape
    H2x2, G = params["whh"].shape
    NT = params["transitions"].shape[0]

    kernel = functools.partial(_bilstm_crf_kernel,
                               start_idx=start_idx, stop_idx=stop_idx)

    grid_spec = pltpu.PrefetchScalarGridSpec(
        num_scalar_prefetch=1,                       # sentence ids -> SMEM
        grid=(B,),
        in_specs=[
            pl.BlockSpec(memory_space=pl.ANY),               # embedding stays in HBM
            pl.BlockSpec((E, G), lambda b, ids: (0, 0)),     # resident packed weights
            pl.BlockSpec((H2x2, G), lambda b, ids: (0, 0)),
            pl.BlockSpec((1, G), lambda b, ids: (0, 0)),
            pl.BlockSpec((H2x2, NT), lambda b, ids: (0, 0)),
            pl.BlockSpec((1, NT), lambda b, ids: (0, 0)),
            pl.BlockSpec((NT, NT), lambda b, ids: (0, 0)),
        ],
        out_specs=(
            pl.BlockSpec((1, 1, 1), lambda b, ids: (b, 0, 0)),
            pl.BlockSpec((1, 1, T), lambda b, ids: (b, 0, 0)),
        ),
        scratch_shapes=[
            pltpu.VMEM((T, E), jnp.float32),      # gathered embedding rows
            pltpu.SemaphoreType.DMA((T,)),        # one sem per row DMA
        ],
    )

    score, path = pl.pallas_call(
        kernel,
        out_shape=(jax.ShapeDtypeStruct((B, 1, 1), jnp.float32),
                   jax.ShapeDtypeStruct((B, 1, T), jnp.int32)),
        grid_spec=grid_spec,
        compiler_params=pltpu.CompilerParams(
            dimension_semantics=("parallel",)),   # batch across TCs on v7x
    )(sentences, params["embedding"],
      params["wih"], params["whh"], params["b"],
      params["wtag"], params["btag"], params["transitions"])
    return score[:, 0, 0], path[:, 0, :]


# ----------------------------------------------------------------------------
# Deterministic parameter init (shapes follow BiLSTM_CRF.__init__), weights
# pre-packed along the lane axis: gate-major [i|f|g|o], direction-minor.
# ----------------------------------------------------------------------------
def init_params(key, vocab_size, embedding_dim, hidden_dim, tagset_size,
                start_idx, stop_idx):
    H2 = hidden_dim // 2
    ks = jax.random.split(key, 10)

    def rnd(k, shape, scale=0.1):
        return (scale * jax.random.normal(k, shape)).astype(jnp.float32)

    emb = rnd(ks[0], (vocab_size, embedding_dim), 1.0)
    wih_f = rnd(ks[1], (embedding_dim, 4 * H2))
    wih_b = rnd(ks[2], (embedding_dim, 4 * H2))
    whh_f = rnd(ks[3], (H2, 4 * H2))
    whh_b = rnd(ks[4], (H2, 4 * H2))
    b_f = rnd(ks[5], (1, 4 * H2))                 # (= b_ih + b_hh)
    b_b = rnd(ks[6], (1, 4 * H2))
    wtag = rnd(ks[7], (hidden_dim, tagset_size))  # hidden2tag.weight.T
    btag = rnd(ks[8], (1, tagset_size))

    def pack_cols(a_f, a_b):                      # gate-major, direction-minor
        blocks = []
        for g in range(4):
            blocks.append(a_f[:, g * H2:(g + 1) * H2])
            blocks.append(a_b[:, g * H2:(g + 1) * H2])
        return jnp.concatenate(blocks, axis=1)

    wih = pack_cols(wih_f, wih_b)                 # (E, 8*H2)
    bias = pack_cols(b_f, b_b)                    # (1, 8*H2)

    z = jnp.zeros((H2, H2), jnp.float32)          # block-diagonal recurrent weight
    blocks = []
    for g in range(4):
        blocks.append(jnp.concatenate([whh_f[:, g * H2:(g + 1) * H2], z], axis=0))
        blocks.append(jnp.concatenate([z, whh_b[:, g * H2:(g + 1) * H2]], axis=0))
    whh = jnp.concatenate(blocks, axis=1)         # (2*H2, 8*H2)

    trans = jax.random.normal(ks[9], (tagset_size, tagset_size)).astype(jnp.float32)
    trans = trans.at[start_idx, :].set(-10000.0)
    trans = trans.at[:, stop_idx].set(-10000.0)

    return dict(
        embedding=emb,                            # f32 in HBM (gathered per row)
        wih=wih.astype(jnp.bfloat16),             # MXU operands in bf16
        whh=whh.astype(jnp.bfloat16),
        b=bias,                                   # f32 (added on the VPU)
        wtag=wtag.astype(jnp.bfloat16),
        btag=btag,
        transitions=trans,                        # CRF math stays f32
    )


if __name__ == "__main__":
    label_map = {"O": 0, "B-PER": 1, "I-PER": 2, "B-LOC": 3,
                 "I-LOC": 4, "B-ORG": 5, START_TAG: 6, STOP_TAG: 7}
    vocab_size, embedding_dim, hidden_dim, seq_len, batch = 100, 32, 32, 8, 2
    tagset_size = len(label_map)
    start_idx, stop_idx = label_map[START_TAG], label_map[STOP_TAG]

    key = jax.random.PRNGKey(0)
    pkey, skey = jax.random.split(key)
    params = init_params(pkey, vocab_size, embedding_dim, hidden_dim,
                         tagset_size, start_idx, stop_idx)
    sentences = jax.random.randint(skey, (batch, seq_len), 0, vocab_size,
                                   dtype=jnp.int32)

    scores, tag_seqs = bilstm_crf_forward(sentences, params, start_idx, stop_idx)
    jax.block_until_ready((scores, tag_seqs))
    print("KERNEL_OK")
</pallas_src>

<mosaic_0001>
module attributes {stable_mosaic.version = 11 : i64} {
  func.func @_bilstm_crf_kernel(%arg0: i32, %arg1: memref<2x8xi32, #tpu.memory_space<smem>>, %arg2: memref<100x32xf32, #tpu.memory_space<any>>, %arg3: memref<32x128xbf16, #tpu.memory_space<vmem>>, %arg4: memref<32x128xbf16, #tpu.memory_space<vmem>>, %arg5: memref<1x128xf32, #tpu.memory_space<vmem>>, %arg6: memref<32x8xbf16, #tpu.memory_space<vmem>>, %arg7: memref<1x8xf32, #tpu.memory_space<vmem>>, %arg8: memref<8x8xf32, #tpu.memory_space<vmem>>, %arg9: memref<1x1x1xf32, #tpu.memory_space<vmem>>, %arg10: memref<1x1x8xi32, #tpu.memory_space<vmem>>, %arg11: memref<8x32xf32, #tpu.memory_space<vmem>>, %arg12: memref<8x!tpu.dma_semaphore, #tpu.memory_space<semaphore_mem>>) attributes {dimension_semantics = [#tpu.dimension_semantics<parallel>], iteration_bounds = array<i64: 2>, scalar_prefetch = 1 : i64, scratch_operands = 2 : i64, tpu.core_type = #tpu.core_type<tc>, window_params = [{}, {pipeline_mode = #tpu.pipeline_mode<synchronous>, transform_indices = @transform_1, window_bounds = array<i64: 32, 128>}, {pipeline_mode = #tpu.pipeline_mode<synchronous>, transform_indices = @transform_2, window_bounds = array<i64: 32, 128>}, {pipeline_mode = #tpu.pipeline_mode<synchronous>, transform_indices = @transform_3, window_bounds = array<i64: 1, 128>}, {pipeline_mode = #tpu.pipeline_mode<synchronous>, transform_indices = @transform_4, window_bounds = array<i64: 32, 8>}, {pipeline_mode = #tpu.pipeline_mode<synchronous>, transform_indices = @transform_5, window_bounds = array<i64: 1, 8>}, {pipeline_mode = #tpu.pipeline_mode<synchronous>, transform_indices = @transform_6, window_bounds = array<i64: 8, 8>}, {transform_indices = @transform_7, window_bounds = array<i64: 1, 1, 1>}, {transform_indices = @transform_8, window_bounds = array<i64: 1, 1, 8>}]} {
    %0 = arith.index_cast %arg0 : i32 to index
    %c0 = arith.constant 0 : index
    %1 = memref.load %arg1[%0, %c0] : memref<2x8xi32, #tpu.memory_space<smem>>
    %c0_i32 = arith.constant 0 : i32
    %c0_i32_0 = arith.constant 0 : i32
    %2 = tpu.memref_slice %arg2[%1, %c0_i32_0] : memref<100x32xf32, #tpu.memory_space<any>> -> memref<1x32xf32, #tpu.memory_space<any>>
    %c0_i32_1 = arith.constant 0 : i32
    %c0_i32_2 = arith.constant 0 : i32
    %3 = tpu.memref_slice %arg11[%c0_i32_1, %c0_i32_2] : memref<8x32xf32, #tpu.memory_space<vmem>> -> memref<1x32xf32, #tpu.memory_space<vmem>>
    %4 = tpu.memref_slice %arg12[%c0_i32] : memref<8x!tpu.dma_semaphore, #tpu.memory_space<semaphore_mem>> -> memref<1x!tpu.dma_semaphore, #tpu.memory_space<semaphore_mem>>
    %5 = tpu.memref_squeeze %4 : memref<1x!tpu.dma_semaphore, #tpu.memory_space<semaphore_mem>> -> memref<!tpu.dma_semaphore, #tpu.memory_space<semaphore_mem>>
    tpu.enqueue_dma source(%2 : memref<1x32xf32, #tpu.memory_space<any>>) target(%3 : memref<1x32xf32, #tpu.memory_space<vmem>>) target_semaphore(%5 : memref<!tpu.dma_semaphore, #tpu.memory_space<semaphore_mem>>)
    %6 = arith.index_cast %arg0 : i32 to index
    %c1 = arith.constant 1 : index
    %7 = memref.load %arg1[%6, %c1] : memref<2x8xi32, #tpu.memory_space<smem>>
    %c1_i32 = arith.constant 1 : i32
    %c0_i32_3 = arith.constant 0 : i32
    %8 = tpu.memref_slice %arg2[%7, %c0_i32_3] : memref<100x32xf32, #tpu.memory_space<any>> -> memref<1x32xf32, #tpu.memory_space<any>>
    %c1_i32_4 = arith.constant 1 : i32
    %c0_i32_5 = arith.constant 0 : i32
    %9 = tpu.memref_slice %arg11[%c1_i32_4, %c0_i32_5] : memref<8x32xf32, #tpu.memory_space<vmem>> -> memref<1x32xf32, #tpu.memory_space<vmem>>
    %10 = tpu.memref_slice %arg12[%c1_i32] : memref<8x!tpu.dma_semaphore, #tpu.memory_space<semaphore_mem>> -> memref<1x!tpu.dma_semaphore, #tpu.memory_space<semaphore_mem>>
    %11 = tpu.memref_squeeze %10 : memref<1x!tpu.dma_semaphore, #tpu.memory_space<semaphore_mem>> -> memref<!tpu.dma_semaphore, #tpu.memory_space<semaphore_mem>>
    tpu.enqueue_dma source(%8 : memref<1x32xf32, #tpu.memory_space<any>>) target(%9 : memref<1x32xf32, #tpu.memory_space<vmem>>) target_semaphore(%11 : memref<!tpu.dma_semaphore, #tpu.memory_space<semaphore_mem>>)
    %12 = arith.index_cast %arg0 : i32 to index
    %c2 = arith.constant 2 : index
    %13 = memref.load %arg1[%12, %c2] : memref<2x8xi32, #tpu.memory_space<smem>>
    %c2_i32 = arith.constant 2 : i32
    %c0_i32_6 = arith.constant 0 : i32
    %14 = tpu.memref_slice %arg2[%13, %c0_i32_6] : memref<100x32xf32, #tpu.memory_space<any>> -> memref<1x32xf32, #tpu.memory_space<any>>
    %c2_i32_7 = arith.constant 2 : i32
    %c0_i32_8 = arith.constant 0 : i32
    %15 = tpu.memref_slice %arg11[%c2_i32_7, %c0_i32_8] : memref<8x32xf32, #tpu.memory_space<vmem>> -> memref<1x32xf32, #tpu.memory_space<vmem>>
    %16 = tpu.memref_slice %arg12[%c2_i32] : memref<8x!tpu.dma_semaphore, #tpu.memory_space<semaphore_mem>> -> memref<1x!tpu.dma_semaphore, #tpu.memory_space<semaphore_mem>>
    %17 = tpu.memref_squeeze %16 : memref<1x!tpu.dma_semaphore, #tpu.memory_space<semaphore_mem>> -> memref<!tpu.dma_semaphore, #tpu.memory_space<semaphore_mem>>
    tpu.enqueue_dma source(%14 : memref<1x32xf32, #tpu.memory_space<any>>) target(%15 : memref<1x32xf32, #tpu.memory_space<vmem>>) target_semaphore(%17 : memref<!tpu.dma_semaphore, #tpu.memory_space<semaphore_mem>>)
    %18 = arith.index_cast %arg0 : i32 to index
    %c3 = arith.constant 3 : index
    %19 = memref.load %arg1[%18, %c3] : memref<2x8xi32, #tpu.memory_space<smem>>
    %c3_i32 = arith.constant 3 : i32
    %c0_i32_9 = arith.constant 0 : i32
    %20 = tpu.memref_slice %arg2[%19, %c0_i32_9] : memref<100x32xf32, #tpu.memory_space<any>> -> memref<1x32xf32, #tpu.memory_space<any>>
    %c3_i32_10 = arith.constant 3 : i32
    %c0_i32_11 = arith.constant 0 : i32
    %21 = tpu.memref_slice %arg11[%c3_i32_10, %c0_i32_11] : memref<8x32xf32, #tpu.memory_space<vmem>> -> memref<1x32xf32, #tpu.memory_space<vmem>>
    %22 = tpu.memref_slice %arg12[%c3_i32] : memref<8x!tpu.dma_semaphore, #tpu.memory_space<semaphore_mem>> -> memref<1x!tpu.dma_semaphore, #tpu.memory_space<semaphore_mem>>
    %23 = tpu.memref_squeeze %22 : memref<1x!tpu.dma_semaphore, #tpu.memory_space<semaphore_mem>> -> memref<!tpu.dma_semaphore, #tpu.memory_space<semaphore_mem>>
    tpu.enqueue_dma source(%20 : memref<1x32xf32, #tpu.memory_space<any>>) target(%21 : memref<1x32xf32, #tpu.memory_space<vmem>>) target_semaphore(%23 : memref<!tpu.dma_semaphore, #tpu.memory_space<semaphore_mem>>)
    %24 = arith.index_cast %arg0 : i32 to index
    %c4 = arith.constant 4 : index
    %25 = memref.load %arg1[%24, %c4] : memref<2x8xi32, #tpu.memory_space<smem>>
    %c4_i32 = arith.constant 4 : i32
    %c0_i32_12 = arith.constant 0 : i32
    %26 = tpu.memref_slice %arg2[%25, %c0_i32_12] : memref<100x32xf32, #tpu.memory_space<any>> -> memref<1x32xf32, #tpu.memory_space<any>>
    %c4_i32_13 = arith.constant 4 : i32
    %c0_i32_14 = arith.constant 0 : i32
    %27 = tpu.memref_slice %arg11[%c4_i32_13, %c0_i32_14] : memref<8x32xf32, #tpu.memory_space<vmem>> -> memref<1x32xf32, #tpu.memory_space<vmem>>
    %28 = tpu.memref_slice %arg12[%c4_i32] : memref<8x!tpu.dma_semaphore, #tpu.memory_space<semaphore_mem>> -> memref<1x!tpu.dma_semaphore, #tpu.memory_space<semaphore_mem>>
    %29 = tpu.memref_squeeze %28 : memref<1x!tpu.dma_semaphore, #tpu.memory_space<semaphore_mem>> -> memref<!tpu.dma_semaphore, #tpu.memory_space<semaphore_mem>>
    tpu.enqueue_dma source(%26 : memref<1x32xf32, #tpu.memory_space<any>>) target(%27 : memref<1x32xf32, #tpu.memory_space<vmem>>) target_semaphore(%29 : memref<!tpu.dma_semaphore, #tpu.memory_space<semaphore_mem>>)
    %30 = arith.index_cast %arg0 : i32 to index
    %c5 = arith.constant 5 : index
    %31 = memref.load %arg1[%30, %c5] : memref<2x8xi32, #tpu.memory_space<smem>>
    %c5_i32 = arith.constant 5 : i32
    %c0_i32_15 = arith.constant 0 : i32
    %32 = tpu.memref_slice %arg2[%31, %c0_i32_15] : memref<100x32xf32, #tpu.memory_space<any>> -> memref<1x32xf32, #tpu.memory_space<any>>
    %c5_i32_16 = arith.constant 5 : i32
    %c0_i32_17 = arith.constant 0 : i32
    %33 = tpu.memref_slice %arg11[%c5_i32_16, %c0_i32_17] : memref<8x32xf32, #tpu.memory_space<vmem>> -> memref<1x32xf32, #tpu.memory_space<vmem>>
    %34 = tpu.memref_slice %arg12[%c5_i32] : memref<8x!tpu.dma_semaphore, #tpu.memory_space<semaphore_mem>> -> memref<1x!tpu.dma_semaphore, #tpu.memory_space<semaphore_mem>>
    %35 = tpu.memref_squeeze %34 : memref<1x!tpu.dma_semaphore, #tpu.memory_space<semaphore_mem>> -> memref<!tpu.dma_semaphore, #tpu.memory_space<semaphore_mem>>
    tpu.enqueue_dma source(%32 : memref<1x32xf32, #tpu.memory_space<any>>) target(%33 : memref<1x32xf32, #tpu.memory_space<vmem>>) target_semaphore(%35 : memref<!tpu.dma_semaphore, #tpu.memory_space<semaphore_mem>>)
    %36 = arith.index_cast %arg0 : i32 to index
    %c6 = arith.constant 6 : index
    %37 = memref.load %arg1[%36, %c6] : memref<2x8xi32, #tpu.memory_space<smem>>
    %c6_i32 = arith.constant 6 : i32
    %c0_i32_18 = arith.constant 0 : i32
    %38 = tpu.memref_slice %arg2[%37, %c0_i32_18] : memref<100x32xf32, #tpu.memory_space<any>> -> memref<1x32xf32, #tpu.memory_space<any>>
    %c6_i32_19 = arith.constant 6 : i32
    %c0_i32_20 = arith.constant 0 : i32
    %39 = tpu.memref_slice %arg11[%c6_i32_19, %c0_i32_20] : memref<8x32xf32, #tpu.memory_space<vmem>> -> memref<1x32xf32, #tpu.memory_space<vmem>>
    %40 = tpu.memref_slice %arg12[%c6_i32] : memref<8x!tpu.dma_semaphore, #tpu.memory_space<semaphore_mem>> -> memref<1x!tpu.dma_semaphore, #tpu.memory_space<semaphore_mem>>
    %41 = tpu.memref_squeeze %40 : memref<1x!tpu.dma_semaphore, #tpu.memory_space<semaphore_mem>> -> memref<!tpu.dma_semaphore, #tpu.memory_space<semaphore_mem>>
    tpu.enqueue_dma source(%38 : memref<1x32xf32, #tpu.memory_space<any>>) target(%39 : memref<1x32xf32, #tpu.memory_space<vmem>>) target_semaphore(%41 : memref<!tpu.dma_semaphore, #tpu.memory_space<semaphore_mem>>)
    %42 = arith.index_cast %arg0 : i32 to index
    %c7 = arith.constant 7 : index
    %43 = memref.load %arg1[%42, %c7] : memref<2x8xi32, #tpu.memory_space<smem>>
    %c7_i32 = arith.constant 7 : i32
    %c0_i32_21 = arith.constant 0 : i32
    %44 = tpu.memref_slice %arg2[%43, %c0_i32_21] : memref<100x32xf32, #tpu.memory_space<any>> -> memref<1x32xf32, #tpu.memory_space<any>>
    %c7_i32_22 = arith.constant 7 : i32
    %c0_i32_23 = arith.constant 0 : i32
    %45 = tpu.memref_slice %arg11[%c7_i32_22, %c0_i32_23] : memref<8x32xf32, #tpu.memory_space<vmem>> -> memref<1x32xf32, #tpu.memory_space<vmem>>
    %46 = tpu.memref_slice %arg12[%c7_i32] : memref<8x!tpu.dma_semaphore, #tpu.memory_space<semaphore_mem>> -> memref<1x!tpu.dma_semaphore, #tpu.memory_space<semaphore_mem>>
    %47 = tpu.memref_squeeze %46 : memref<1x!tpu.dma_semaphore, #tpu.memory_space<semaphore_mem>> -> memref<!tpu.dma_semaphore, #tpu.memory_space<semaphore_mem>>
    tpu.enqueue_dma source(%44 : memref<1x32xf32, #tpu.memory_space<any>>) target(%45 : memref<1x32xf32, #tpu.memory_space<vmem>>) target_semaphore(%47 : memref<!tpu.dma_semaphore, #tpu.memory_space<semaphore_mem>>)
    %c0_i32_24 = arith.constant 0 : i32
    %c0_i32_25 = arith.constant 0 : i32
    %48 = tpu.memref_slice %arg2[%1, %c0_i32_25] : memref<100x32xf32, #tpu.memory_space<any>> -> memref<1x32xf32, #tpu.memory_space<any>>
    %c0_i32_26 = arith.constant 0 : i32
    %c0_i32_27 = arith.constant 0 : i32
    %49 = tpu.memref_slice %arg11[%c0_i32_26, %c0_i32_27] : memref<8x32xf32, #tpu.memory_space<vmem>> -> memref<1x32xf32, #tpu.memory_space<vmem>>
    %50 = tpu.memref_slice %arg12[%c0_i32_24] : memref<8x!tpu.dma_semaphore, #tpu.memory_space<semaphore_mem>> -> memref<1x!tpu.dma_semaphore, #tpu.memory_space<semaphore_mem>>
    %51 = tpu.memref_squeeze %50 : memref<1x!tpu.dma_semaphore, #tpu.memory_space<semaphore_mem>> -> memref<!tpu.dma_semaphore, #tpu.memory_space<semaphore_mem>>
    tpu.wait_dma2 semaphore(%51 : memref<!tpu.dma_semaphore, #tpu.memory_space<semaphore_mem>>) src(%48 : memref<1x32xf32, #tpu.memory_space<any>>) dst(%49 : memref<1x32xf32, #tpu.memory_space<vmem>>)
    %c1_i32_28 = arith.constant 1 : i32
    %c0_i32_29 = arith.constant 0 : i32
    %52 = tpu.memref_slice %arg2[%7, %c0_i32_29] : memref<100x32xf32, #tpu.memory_space<any>> -> memref<1x32xf32, #tpu.memory_space<any>>
    %c1_i32_30 = arith.constant 1 : i32
    %c0_i32_31 = arith.constant 0 : i32
    %53 = tpu.memref_slice %arg11[%c1_i32_30, %c0_i32_31] : memref<8x32xf32, #tpu.memory_space<vmem>> -> memref<1x32xf32, #tpu.memory_space<vmem>>
    %54 = tpu.memref_slice %arg12[%c1_i32_28] : memref<8x!tpu.dma_semaphore, #tpu.memory_space<semaphore_mem>> -> memref<1x!tpu.dma_semaphore, #tpu.memory_space<semaphore_mem>>
    %55 = tpu.memref_squeeze %54 : memref<1x!tpu.dma_semaphore, #tpu.memory_space<semaphore_mem>> -> memref<!tpu.dma_semaphore, #tpu.memory_space<semaphore_mem>>
    tpu.wait_dma2 semaphore(%55 : memref<!tpu.dma_semaphore, #tpu.memory_space<semaphore_mem>>) src(%52 : memref<1x32xf32, #tpu.memory_space<any>>) dst(%53 : memref<1x32xf32, #tpu.memory_space<vmem>>)
    %c2_i32_32 = arith.constant 2 : i32
    %c0_i32_33 = arith.constant 0 : i32
    %56 = tpu.memref_slice %arg2[%13, %c0_i32_33] : memref<100x32xf32, #tpu.memory_space<any>> -> memref<1x32xf32, #tpu.memory_space<any>>
    %c2_i32_34 = arith.constant 2 : i32
    %c0_i32_35 = arith.constant 0 : i32
    %57 = tpu.memref_slice %arg11[%c2_i32_34, %c0_i32_35] : memref<8x32xf32, #tpu.memory_space<vmem>> -> memref<1x32xf32, #tpu.memory_space<vmem>>
    %58 = tpu.memref_slice %arg12[%c2_i32_32] : memref<8x!tpu.dma_semaphore, #tpu.memory_space<semaphore_mem>> -> memref<1x!tpu.dma_semaphore, #tpu.memory_space<semaphore_mem>>
    %59 = tpu.memref_squeeze %58 : memref<1x!tpu.dma_semaphore, #tpu.memory_space<semaphore_mem>> -> memref<!tpu.dma_semaphore, #tpu.memory_space<semaphore_mem>>
    tpu.wait_dma2 semaphore(%59 : memref<!tpu.dma_semaphore, #tpu.memory_space<semaphore_mem>>) src(%56 : memref<1x32xf32, #tpu.memory_space<any>>) dst(%57 : memref<1x32xf32, #tpu.memory_space<vmem>>)
    %c3_i32_36 = arith.constant 3 : i32
    %c0_i32_37 = arith.constant 0 : i32
    %60 = tpu.memref_slice %arg2[%19, %c0_i32_37] : memref<100x32xf32, #tpu.memory_space<any>> -> memref<1x32xf32, #tpu.memory_space<any>>
    %c3_i32_38 = arith.constant 3 : i32
    %c0_i32_39 = arith.constant 0 : i32
    %61 = tpu.memref_slice %arg11[%c3_i32_38, %c0_i32_39] : memref<8x32xf32, #tpu.memory_space<vmem>> -> memref<1x32xf32, #tpu.memory_space<vmem>>
    %62 = tpu.memref_slice %arg12[%c3_i32_36] : memref<8x!tpu.dma_semaphore, #tpu.memory_space<semaphore_mem>> -> memref<1x!tpu.dma_semaphore, #tpu.memory_space<semaphore_mem>>
    %63 = tpu.memref_squeeze %62 : memref<1x!tpu.dma_semaphore, #tpu.memory_space<semaphore_mem>> -> memref<!tpu.dma_semaphore, #tpu.memory_space<semaphore_mem>>
    tpu.wait_dma2 semaphore(%63 : memref<!tpu.dma_semaphore, #tpu.memory_space<semaphore_mem>>) src(%60 : memref<1x32xf32, #tpu.memory_space<any>>) dst(%61 : memref<1x32xf32, #tpu.memory_space<vmem>>)
    %c4_i32_40 = arith.constant 4 : i32
    %c0_i32_41 = arith.constant 0 : i32
    %64 = tpu.memref_slice %arg2[%25, %c0_i32_41] : memref<100x32xf32, #tpu.memory_space<any>> -> memref<1x32xf32, #tpu.memory_space<any>>
    %c4_i32_42 = arith.constant 4 : i32
    %c0_i32_43 = arith.constant 0 : i32
    %65 = tpu.memref_slice %arg11[%c4_i32_42, %c0_i32_43] : memref<8x32xf32, #tpu.memory_space<vmem>> -> memref<1x32xf32, #tpu.memory_space<vmem>>
    %66 = tpu.memref_slice %arg12[%c4_i32_40] : memref<8x!tpu.dma_semaphore, #tpu.memory_space<semaphore_mem>> -> memref<1x!tpu.dma_semaphore, #tpu.memory_space<semaphore_mem>>
    %67 = tpu.memref_squeeze %66 : memref<1x!tpu.dma_semaphore, #tpu.memory_space<semaphore_mem>> -> memref<!tpu.dma_semaphore, #tpu.memory_space<semaphore_mem>>
    tpu.wait_dma2 semaphore(%67 : memref<!tpu.dma_semaphore, #tpu.memory_space<semaphore_mem>>) src(%64 : memref<1x32xf32, #tpu.memory_space<any>>) dst(%65 : memref<1x32xf32, #tpu.memory_space<vmem>>)
    %c5_i32_44 = arith.constant 5 : i32
    %c0_i32_45 = arith.constant 0 : i32
    %68 = tpu.memref_slice %arg2[%31, %c0_i32_45] : memref<100x32xf32, #tpu.memory_space<any>> -> memref<1x32xf32, #tpu.memory_space<any>>
    %c5_i32_46 = arith.constant 5 : i32
    %c0_i32_47 = arith.constant 0 : i32
    %69 = tpu.memref_slice %arg11[%c5_i32_46, %c0_i32_47] : memref<8x32xf32, #tpu.memory_space<vmem>> -> memref<1x32xf32, #tpu.memory_space<vmem>>
    %70 = tpu.memref_slice %arg12[%c5_i32_44] : memref<8x!tpu.dma_semaphore, #tpu.memory_space<semaphore_mem>> -> memref<1x!tpu.dma_semaphore, #tpu.memory_space<semaphore_mem>>
    %71 = tpu.memref_squeeze %70 : memref<1x!tpu.dma_semaphore, #tpu.memory_space<semaphore_mem>> -> memref<!tpu.dma_semaphore, #tpu.memory_space<semaphore_mem>>
    tpu.wait_dma2 semaphore(%71 : memref<!tpu.dma_semaphore, #tpu.memory_space<semaphore_mem>>) src(%68 : memref<1x32xf32, #tpu.memory_space<any>>) dst(%69 : memref<1x32xf32, #tpu.memory_space<vmem>>)
    %c6_i32_48 = arith.constant 6 : i32
    %c0_i32_49 = arith.constant 0 : i32
    %72 = tpu.memref_slice %arg2[%37, %c0_i32_49] : memref<100x32xf32, #tpu.memory_space<any>> -> memref<1x32xf32, #tpu.memory_space<any>>
    %c6_i32_50 = arith.constant 6 : i32
    %c0_i32_51 = arith.constant 0 : i32
    %73 = tpu.memref_slice %arg11[%c6_i32_50, %c0_i32_51] : memref<8x32xf32, #tpu.memory_space<vmem>> -> memref<1x32xf32, #tpu.memory_space<vmem>>
    %74 = tpu.memref_slice %arg12[%c6_i32_48] : memref<8x!tpu.dma_semaphore, #tpu.memory_space<semaphore_mem>> -> memref<1x!tpu.dma_semaphore, #tpu.memory_space<semaphore_mem>>
    %75 = tpu.memref_squeeze %74 : memref<1x!tpu.dma_semaphore, #tpu.memory_space<semaphore_mem>> -> memref<!tpu.dma_semaphore, #tpu.memory_space<semaphore_mem>>
    tpu.wait_dma2 semaphore(%75 : memref<!tpu.dma_semaphore, #tpu.memory_space<semaphore_mem>>) src(%72 : memref<1x32xf32, #tpu.memory_space<any>>) dst(%73 : memref<1x32xf32, #tpu.memory_space<vmem>>)
    %c7_i32_52 = arith.constant 7 : i32
    %c0_i32_53 = arith.constant 0 : i32
    %76 = tpu.memref_slice %arg2[%43, %c0_i32_53] : memref<100x32xf32, #tpu.memory_space<any>> -> memref<1x32xf32, #tpu.memory_space<any>>
    %c7_i32_54 = arith.constant 7 : i32
    %c0_i32_55 = arith.constant 0 : i32
    %77 = tpu.memref_slice %arg11[%c7_i32_54, %c0_i32_55] : memref<8x32xf32, #tpu.memory_space<vmem>> -> memref<1x32xf32, #tpu.memory_space<vmem>>
    %78 = tpu.memref_slice %arg12[%c7_i32_52] : memref<8x!tpu.dma_semaphore, #tpu.memory_space<semaphore_mem>> -> memref<1x!tpu.dma_semaphore, #tpu.memory_space<semaphore_mem>>
    %79 = tpu.memref_squeeze %78 : memref<1x!tpu.dma_semaphore, #tpu.memory_space<semaphore_mem>> -> memref<!tpu.dma_semaphore, #tpu.memory_space<semaphore_mem>>
    tpu.wait_dma2 semaphore(%79 : memref<!tpu.dma_semaphore, #tpu.memory_space<semaphore_mem>>) src(%76 : memref<1x32xf32, #tpu.memory_space<any>>) dst(%77 : memref<1x32xf32, #tpu.memory_space<vmem>>)
    %c0_56 = arith.constant 0 : index
    %c0_57 = arith.constant 0 : index
    %80 = vector.load %arg11[%c0_56, %c0_57] : memref<8x32xf32, #tpu.memory_space<vmem>>, vector<8x32xf32>
    %81 = arith.truncf %80 : vector<8x32xf32> to vector<8x32xbf16>
    %c0_58 = arith.constant 0 : index
    %c0_59 = arith.constant 0 : index
    %82 = vector.load %arg3[%c0_58, %c0_59] : memref<32x128xbf16, #tpu.memory_space<vmem>>, vector<32x128xbf16>
    %cst = arith.constant dense<0.000000e+00> : vector<8x128xf32>
    %83 = tpu.matmul %81, %82, %cst {dimension_numbers = #tpu.dot_dimension_numbers<[1], [0], [0], [1], [0, 0, 1, 1], [], []>} : vector<8x32xbf16>, vector<32x128xbf16>, vector<8x128xf32> -> vector<8x128xf32>
    %c0_60 = arith.constant 0 : index
    %c0_61 = arith.constant 0 : index
    %84 = vector.load %arg5[%c0_60, %c0_61] : memref<1x128xf32, #tpu.memory_space<vmem>>, vector<1x128xf32>
    %85 = vector.broadcast %84 : vector<1x128xf32> to vector<8x128xf32>
    %86 = arith.addf %83, %85 : vector<8x128xf32>
    %c0_62 = arith.constant 0 : index
    %c0_63 = arith.constant 0 : index
    %87 = vector.load %arg4[%c0_62, %c0_63] : memref<32x128xbf16, #tpu.memory_space<vmem>>, vector<32x128xbf16>
    %88 = tpu.iota {dimensions = array<i32: 1>} : vector<1x128xi32>
    %c32_i32 = arith.constant 32 : i32
    %c0_i32_64 = arith.constant 0 : i32
    %89 = arith.cmpi eq, %c32_i32, %c0_i32_64 : i32
    %c1_i32_65 = arith.constant 1 : i32
    %90 = arith.select %89, %c1_i32_65, %c32_i32 : i32
    %91 = vector.broadcast %90 : i32 to vector<1x128xi32>
    %92 = arith.remsi %88, %91 : vector<1x128xi32>
    %c0_i32_66 = arith.constant 0 : i32
    %93 = vector.broadcast %c0_i32_66 : i32 to vector<1x128xi32>
    %94 = arith.cmpi ne, %92, %93 : vector<1x128xi32>
    %c0_i32_67 = arith.constant 0 : i32
    %95 = vector.broadcast %c0_i32_67 : i32 to vector<1x128xi32>
    %96 = arith.cmpi slt, %92, %95 : vector<1x128xi32>
    %c0_i32_68 = arith.constant 0 : i32
    %97 = arith.cmpi slt, %90, %c0_i32_68 : i32
    %98 = vector.broadcast %97 : i1 to vector<1x128xi1>
    %99 = vector.broadcast %98 : vector<1x128xi1> to vector<1x128xi1>
    %100 = arith.xori %96, %99 : vector<1x128xi1>
    %101 = arith.andi %100, %94 : vector<1x128xi1>
    %102 = vector.broadcast %90 : i32 to vector<1x128xi32>
    %103 = arith.addi %92, %102 : vector<1x128xi32>
    %104 = arith.select %101, %103, %92 : vector<1x128xi1>, vector<1x128xi32>
    %c16_i32 = arith.constant 16 : i32
    %105 = vector.broadcast %c16_i32 : i32 to vector<1x128xi32>
    %106 = arith.cmpi slt, %104, %105 : vector<1x128xi32>
    %cst_69 = arith.constant 0.000000e+00 : f32
    %107 = vector.broadcast %cst_69 : f32 to vector<1x32xf32>
    %108 = vector.extract_strided_slice %86 {offsets = [0, 0], sizes = [1, 128], strides = [1, 1]} : vector<8x128xf32> to vector<1x128xf32>
    %109 = vector.extract_strided_slice %86 {offsets = [7, 0], sizes = [1, 128], strides = [1, 1]} : vector<8x128xf32> to vector<1x128xf32>
    %110 = arith.select %106, %108, %109 : vector<1x128xi1>, vector<1x128xf32>
    %111 = arith.truncf %107 : vector<1x32xf32> to vector<1x32xbf16>
    %cst_70 = arith.constant dense<0.000000e+00> : vector<1x128xf32>
    %112 = tpu.matmul %111, %87, %cst_70 {dimension_numbers = #tpu.dot_dimension_numbers<[1], [0], [0], [1], [0, 0, 1, 1], [], []>} : vector<1x32xbf16>, vector<32x128xbf16>, vector<1x128xf32> -> vector<1x128xf32>
    %113 = arith.addf %110, %112 : vector<1x128xf32>
    %114 = arith.negf %113 : vector<1x128xf32>
    %115 = math.exp %114 : vector<1x128xf32>
    %cst_71 = arith.constant 1.000000e+00 : f32
    %116 = vector.broadcast %cst_71 : f32 to vector<1x128xf32>
    %117 = arith.addf %116, %115 : vector<1x128xf32>
    %118 = arith.divf %116, %117 : vector<1x128xf32>
    %119 = math.tanh %113 : vector<1x128xf32>
    %120 = vector.extract_strided_slice %118 {offsets = [0, 0], sizes = [1, 32], strides = [1, 1]} : vector<1x128xf32> to vector<1x32xf32>
    %121 = vector.extract_strided_slice %118 {offsets = [0, 32], sizes = [1, 32], strides = [1, 1]} : vector<1x128xf32> to vector<1x32xf32>
    %122 = vector.extract_strided_slice %119 {offsets = [0, 64], sizes = [1, 32], strides = [1, 1]} : vector<1x128xf32> to vector<1x32xf32>
    %123 = vector.extract_strided_slice %118 {offsets = [0, 96], sizes = [1, 32], strides = [1, 1]} : vector<1x128xf32> to vector<1x32xf32>
    %124 = arith.mulf %121, %107 : vector<1x32xf32>
    %125 = arith.mulf %120, %122 : vector<1x32xf32>
    %126 = arith.addf %124, %125 : vector<1x32xf32>
    %127 = math.tanh %126 : vector<1x32xf32>
    %128 = arith.mulf %123, %127 : vector<1x32xf32>
    %129 = vector.extract_strided_slice %86 {offsets = [1, 0], sizes = [1, 128], strides = [1, 1]} : vector<8x128xf32> to vector<1x128xf32>
    %130 = vector.extract_strided_slice %86 {offsets = [6, 0], sizes = [1, 128], strides = [1, 1]} : vector<8x128xf32> to vector<1x128xf32>
    %131 = arith.select %106, %129, %130 : vector<1x128xi1>, vector<1x128xf32>
    %132 = arith.truncf %128 : vector<1x32xf32> to vector<1x32xbf16>
    %cst_72 = arith.constant dense<0.000000e+00> : vector<1x128xf32>
    %133 = tpu.matmul %132, %87, %cst_72 {dimension_numbers = #tpu.dot_dimension_numbers<[1], [0], [0], [1], [0, 0, 1, 1], [], []>} : vector<1x32xbf16>, vector<32x128xbf16>, vector<1x128xf32> -> vector<1x128xf32>
    %134 = arith.addf %131, %133 : vector<1x128xf32>
    %135 = arith.negf %134 : vector<1x128xf32>
    %136 = math.exp %135 : vector<1x128xf32>
    %cst_73 = arith.constant 1.000000e+00 : f32
    %137 = vector.broadcast %cst_73 : f32 to vector<1x128xf32>
    %138 = arith.addf %137, %136 : vector<1x128xf32>
    %139 = arith.divf %137, %138 : vector<1x128xf32>
    %140 = math.tanh %134 : vector<1x128xf32>
    %141 = vector.extract_strided_slice %139 {offsets = [0, 0], sizes = [1, 32], strides = [1, 1]} : vector<1x128xf32> to vector<1x32xf32>
    %142 = vector.extract_strided_slice %139 {offsets = [0, 32], sizes = [1, 32], strides = [1, 1]} : vector<1x128xf32> to vector<1x32xf32>
    %143 = vector.extract_strided_slice %140 {offsets = [0, 64], sizes = [1, 32], strides = [1, 1]} : vector<1x128xf32> to vector<1x32xf32>
    %144 = vector.extract_strided_slice %139 {offsets = [0, 96], sizes = [1, 32], strides = [1, 1]} : vector<1x128xf32> to vector<1x32xf32>
    %145 = arith.mulf %142, %126 : vector<1x32xf32>
    %146 = arith.mulf %141, %143 : vector<1x32xf32>
    %147 = arith.addf %145, %146 : vector<1x32xf32>
    %148 = math.tanh %147 : vector<1x32xf32>
    %149 = arith.mulf %144, %148 : vector<1x32xf32>
    %150 = vector.extract_strided_slice %86 {offsets = [2, 0], sizes = [1, 128], strides = [1, 1]} : vector<8x128xf32> to vector<1x128xf32>
    %151 = vector.extract_strided_slice %86 {offsets = [5, 0], sizes = [1, 128], strides = [1, 1]} : vector<8x128xf32> to vector<1x128xf32>
    %152 = arith.select %106, %150, %151 : vector<1x128xi1>, vector<1x128xf32>
    %153 = arith.truncf %149 : vector<1x32xf32> to vector<1x32xbf16>
    %cst_74 = arith.constant dense<0.000000e+00> : vector<1x128xf32>
    %154 = tpu.matmul %153, %87, %cst_74 {dimension_numbers = #tpu.dot_dimension_numbers<[1], [0], [0], [1], [0, 0, 1, 1], [], []>} : vector<1x32xbf16>, vector<32x128xbf16>, vector<1x128xf32> -> vector<1x128xf32>
    %155 = arith.addf %152, %154 : vector<1x128xf32>
    %156 = arith.negf %155 : vector<1x128xf32>
    %157 = math.exp %156 : vector<1x128xf32>
    %cst_75 = arith.constant 1.000000e+00 : f32
    %158 = vector.broadcast %cst_75 : f32 to vector<1x128xf32>
    %159 = arith.addf %158, %157 : vector<1x128xf32>
    %160 = arith.divf %158, %159 : vector<1x128xf32>
    %161 = math.tanh %155 : vector<1x128xf32>
    %162 = vector.extract_strided_slice %160 {offsets = [0, 0], sizes = [1, 32], strides = [1, 1]} : vector<1x128xf32> to vector<1x32xf32>
    %163 = vector.extract_strided_slice %160 {offsets = [0, 32], sizes = [1, 32], strides = [1, 1]} : vector<1x128xf32> to vector<1x32xf32>
    %164 = vector.extract_strided_slice %161 {offsets = [0, 64], sizes = [1, 32], strides = [1, 1]} : vector<1x128xf32> to vector<1x32xf32>
    %165 = vector.extract_strided_slice %160 {offsets = [0, 96], sizes = [1, 32], strides = [1, 1]} : vector<1x128xf32> to vector<1x32xf32>
    %166 = arith.mulf %163, %147 : vector<1x32xf32>
    %167 = arith.mulf %162, %164 : vector<1x32xf32>
    %168 = arith.addf %166, %167 : vector<1x32xf32>
    %169 = math.tanh %168 : vector<1x32xf32>
    %170 = arith.mulf %165, %169 : vector<1x32xf32>
    %171 = vector.extract_strided_slice %86 {offsets = [3, 0], sizes = [1, 128], strides = [1, 1]} : vector<8x128xf32> to vector<1x128xf32>
    %172 = vector.extract_strided_slice %86 {offsets = [4, 0], sizes = [1, 128], strides = [1, 1]} : vector<8x128xf32> to vector<1x128xf32>
    %173 = arith.select %106, %171, %172 : vector<1x128xi1>, vector<1x128xf32>
    %174 = arith.truncf %170 : vector<1x32xf32> to vector<1x32xbf16>
    %cst_76 = arith.constant dense<0.000000e+00> : vector<1x128xf32>
    %175 = tpu.matmul %174, %87, %cst_76 {dimension_numbers = #tpu.dot_dimension_numbers<[1], [0], [0], [1], [0, 0, 1, 1], [], []>} : vector<1x32xbf16>, vector<32x128xbf16>, vector<1x128xf32> -> vector<1x128xf32>
    %176 = arith.addf %173, %175 : vector<1x128xf32>
    %177 = arith.negf %176 : vector<1x128xf32>
    %178 = math.exp %177 : vector<1x128xf32>
    %cst_77 = arith.constant 1.000000e+00 : f32
    %179 = vector.broadcast %cst_77 : f32 to vector<1x128xf32>
    %180 = arith.addf %179, %178 : vector<1x128xf32>
    %181 = arith.divf %179, %180 : vector<1x128xf32>
    %182 = math.tanh %176 : vector<1x128xf32>
    %183 = vector.extract_strided_slice %181 {offsets = [0, 0], sizes = [1, 32], strides = [1, 1]} : vector<1x128xf32> to vector<1x32xf32>
    %184 = vector.extract_strided_slice %181 {offsets = [0, 32], sizes = [1, 32], strides = [1, 1]} : vector<1x128xf32> to vector<1x32xf32>
    %185 = vector.extract_strided_slice %182 {offsets = [0, 64], sizes = [1, 32], strides = [1, 1]} : vector<1x128xf32> to vector<1x32xf32>
    %186 = vector.extract_strided_slice %181 {offsets = [0, 96], sizes = [1, 32], strides = [1, 1]} : vector<1x128xf32> to vector<1x32xf32>
    %187 = arith.mulf %184, %168 : vector<1x32xf32>
    %188 = arith.mulf %183, %185 : vector<1x32xf32>
    %189 = arith.addf %187, %188 : vector<1x32xf32>
    %190 = math.tanh %189 : vector<1x32xf32>
    %191 = arith.mulf %186, %190 : vector<1x32xf32>
    %192 = vector.extract_strided_slice %86 {offsets = [4, 0], sizes = [1, 128], strides = [1, 1]} : vector<8x128xf32> to vector<1x128xf32>
    %193 = vector.extract_strided_slice %86 {offsets = [3, 0], sizes = [1, 128], strides = [1, 1]} : vector<8x128xf32> to vector<1x128xf32>
    %194 = arith.select %106, %192, %193 : vector<1x128xi1>, vector<1x128xf32>
    %195 = arith.truncf %191 : vector<1x32xf32> to vector<1x32xbf16>
    %cst_78 = arith.constant dense<0.000000e+00> : vector<1x128xf32>
    %196 = tpu.matmul %195, %87, %cst_78 {dimension_numbers = #tpu.dot_dimension_numbers<[1], [0], [0], [1], [0, 0, 1, 1], [], []>} : vector<1x32xbf16>, vector<32x128xbf16>, vector<1x128xf32> -> vector<1x128xf32>
    %197 = arith.addf %194, %196 : vector<1x128xf32>
    %198 = arith.negf %197 : vector<1x128xf32>
    %199 = math.exp %198 : vector<1x128xf32>
    %cst_79 = arith.constant 1.000000e+00 : f32
    %200 = vector.broadcast %cst_79 : f32 to vector<1x128xf32>
    %201 = arith.addf %200, %199 : vector<1x128xf32>
    %202 = arith.divf %200, %201 : vector<1x128xf32>
    %203 = math.tanh %197 : vector<1x128xf32>
    %204 = vector.extract_strided_slice %202 {offsets = [0, 0], sizes = [1, 32], strides = [1, 1]} : vector<1x128xf32> to vector<1x32xf32>
    %205 = vector.extract_strided_slice %202 {offsets = [0, 32], sizes = [1, 32], strides = [1, 1]} : vector<1x128xf32> to vector<1x32xf32>
    %206 = vector.extract_strided_slice %203 {offsets = [0, 64], sizes = [1, 32], strides = [1, 1]} : vector<1x128xf32> to vector<1x32xf32>
    %207 = vector.extract_strided_slice %202 {offsets = [0, 96], sizes = [1, 32], strides = [1, 1]} : vector<1x128xf32> to vector<1x32xf32>
    %208 = arith.mulf %205, %189 : vector<1x32xf32>
    %209 = arith.mulf %204, %206 : vector<1x32xf32>
    %210 = arith.addf %208, %209 : vector<1x32xf32>
    %211 = math.tanh %210 : vector<1x32xf32>
    %212 = arith.mulf %207, %211 : vector<1x32xf32>
    %213 = vector.extract_strided_slice %86 {offsets = [5, 0], sizes = [1, 128], strides = [1, 1]} : vector<8x128xf32> to vector<1x128xf32>
    %214 = vector.extract_strided_slice %86 {offsets = [2, 0], sizes = [1, 128], strides = [1, 1]} : vector<8x128xf32> to vector<1x128xf32>
    %215 = arith.select %106, %213, %214 : vector<1x128xi1>, vector<1x128xf32>
    %216 = arith.truncf %212 : vector<1x32xf32> to vector<1x32xbf16>
    %cst_80 = arith.constant dense<0.000000e+00> : vector<1x128xf32>
    %217 = tpu.matmul %216, %87, %cst_80 {dimension_numbers = #tpu.dot_dimension_numbers<[1], [0], [0], [1], [0, 0, 1, 1], [], []>} : vector<1x32xbf16>, vector<32x128xbf16>, vector<1x128xf32> -> vector<1x128xf32>
    %218 = arith.addf %215, %217 : vector<1x128xf32>
    %219 = arith.negf %218 : vector<1x128xf32>
    %220 = math.exp %219 : vector<1x128xf32>
    %cst_81 = arith.constant 1.000000e+00 : f32
    %221 = vector.broadcast %cst_81 : f32 to vector<1x128xf32>
    %222 = arith.addf %221, %220 : vector<1x128xf32>
    %223 = arith.divf %221, %222 : vector<1x128xf32>
    %224 = math.tanh %218 : vector<1x128xf32>
    %225 = vector.extract_strided_slice %223 {offsets = [0, 0], sizes = [1, 32], strides = [1, 1]} : vector<1x128xf32> to vector<1x32xf32>
    %226 = vector.extract_strided_slice %223 {offsets = [0, 32], sizes = [1, 32], strides = [1, 1]} : vector<1x128xf32> to vector<1x32xf32>
    %227 = vector.extract_strided_slice %224 {offsets = [0, 64], sizes = [1, 32], strides = [1, 1]} : vector<1x128xf32> to vector<1x32xf32>
    %228 = vector.extract_strided_slice %223 {offsets = [0, 96], sizes = [1, 32], strides = [1, 1]} : vector<1x128xf32> to vector<1x32xf32>
    %229 = arith.mulf %226, %210 : vector<1x32xf32>
    %230 = arith.mulf %225, %227 : vector<1x32xf32>
    %231 = arith.addf %229, %230 : vector<1x32xf32>
    %232 = math.tanh %231 : vector<1x32xf32>
    %233 = arith.mulf %228, %232 : vector<1x32xf32>
    %234 = vector.extract_strided_slice %86 {offsets = [6, 0], sizes = [1, 128], strides = [1, 1]} : vector<8x128xf32> to vector<1x128xf32>
    %235 = vector.extract_strided_slice %86 {offsets = [1, 0], sizes = [1, 128], strides = [1, 1]} : vector<8x128xf32> to vector<1x128xf32>
    %236 = arith.select %106, %234, %235 : vector<1x128xi1>, vector<1x128xf32>
    %237 = arith.truncf %233 : vector<1x32xf32> to vector<1x32xbf16>
    %cst_82 = arith.constant dense<0.000000e+00> : vector<1x128xf32>
    %238 = tpu.matmul %237, %87, %cst_82 {dimension_numbers = #tpu.dot_dimension_numbers<[1], [0], [0], [1], [0, 0, 1, 1], [], []>} : vector<1x32xbf16>, vector<32x128xbf16>, vector<1x128xf32> -> vector<1x128xf32>
    %239 = arith.addf %236, %238 : vector<1x128xf32>
    %240 = arith.negf %239 : vector<1x128xf32>
    %241 = math.exp %240 : vector<1x128xf32>
    %cst_83 = arith.constant 1.000000e+00 : f32
    %242 = vector.broadcast %cst_83 : f32 to vector<1x128xf32>
    %243 = arith.addf %242, %241 : vector<1x128xf32>
    %244 = arith.divf %242, %243 : vector<1x128xf32>
    %245 = math.tanh %239 : vector<1x128xf32>
    %246 = vector.extract_strided_slice %244 {offsets = [0, 0], sizes = [1, 32], strides = [1, 1]} : vector<1x128xf32> to vector<1x32xf32>
    %247 = vector.extract_strided_slice %244 {offsets = [0, 32], sizes = [1, 32], strides = [1, 1]} : vector<1x128xf32> to vector<1x32xf32>
    %248 = vector.extract_strided_slice %245 {offsets = [0, 64], sizes = [1, 32], strides = [1, 1]} : vector<1x128xf32> to vector<1x32xf32>
    %249 = vector.extract_strided_slice %244 {offsets = [0, 96], sizes = [1, 32], strides = [1, 1]} : vector<1x128xf32> to vector<1x32xf32>
    %250 = arith.mulf %247, %231 : vector<1x32xf32>
    %251 = arith.mulf %246, %248 : vector<1x32xf32>
    %252 = arith.addf %250, %251 : vector<1x32xf32>
    %253 = math.tanh %252 : vector<1x32xf32>
    %254 = arith.mulf %249, %253 : vector<1x32xf32>
    %255 = vector.extract_strided_slice %86 {offsets = [7, 0], sizes = [1, 128], strides = [1, 1]} : vector<8x128xf32> to vector<1x128xf32>
    %256 = vector.extract_strided_slice %86 {offsets = [0, 0], sizes = [1, 128], strides = [1, 1]} : vector<8x128xf32> to vector<1x128xf32>
    %257 = arith.select %106, %255, %256 : vector<1x128xi1>, vector<1x128xf32>
    %258 = arith.truncf %254 : vector<1x32xf32> to vector<1x32xbf16>
    %cst_84 = arith.constant dense<0.000000e+00> : vector<1x128xf32>
    %259 = tpu.matmul %258, %87, %cst_84 {dimension_numbers = #tpu.dot_dimension_numbers<[1], [0], [0], [1], [0, 0, 1, 1], [], []>} : vector<1x32xbf16>, vector<32x128xbf16>, vector<1x128xf32> -> vector<1x128xf32>
    %260 = arith.addf %257, %259 : vector<1x128xf32>
    %261 = arith.negf %260 : vector<1x128xf32>
    %262 = math.exp %261 : vector<1x128xf32>
    %cst_85 = arith.constant 1.000000e+00 : f32
    %263 = vector.broadcast %cst_85 : f32 to vector<1x128xf32>
    %264 = arith.addf %263, %262 : vector<1x128xf32>
    %265 = arith.divf %263, %264 : vector<1x128xf32>
    %266 = math.tanh %260 : vector<1x128xf32>
    %267 = vector.extract_strided_slice %265 {offsets = [0, 0], sizes = [1, 32], strides = [1, 1]} : vector<1x128xf32> to vector<1x32xf32>
    %268 = vector.extract_strided_slice %265 {offsets = [0, 32], sizes = [1, 32], strides = [1, 1]} : vector<1x128xf32> to vector<1x32xf32>
    %269 = vector.extract_strided_slice %266 {offsets = [0, 64], sizes = [1, 32], strides = [1, 1]} : vector<1x128xf32> to vector<1x32xf32>
    %270 = vector.extract_strided_slice %265 {offsets = [0, 96], sizes = [1, 32], strides = [1, 1]} : vector<1x128xf32> to vector<1x32xf32>
    %271 = arith.mulf %268, %252 : vector<1x32xf32>
    %272 = arith.mulf %267, %269 : vector<1x32xf32>
    %273 = arith.addf %271, %272 : vector<1x32xf32>
    %274 = math.tanh %273 : vector<1x32xf32>
    %275 = arith.mulf %270, %274 : vector<1x32xf32>
    %276 = tpu.iota {dimensions = array<i32: 1>} : vector<1x32xi32>
    %c16_i32_86 = arith.constant 16 : i32
    %277 = vector.broadcast %c16_i32_86 : i32 to vector<1x32xi32>
    %278 = arith.cmpi slt, %276, %277 : vector<1x32xi32>
    %279 = arith.select %278, %128, %275 : vector<1x32xi1>, vector<1x32xf32>
    %280 = arith.select %278, %149, %254 : vector<1x32xi1>, vector<1x32xf32>
    %281 = arith.select %278, %170, %233 : vector<1x32xi1>, vector<1x32xf32>
    %282 = arith.select %278, %191, %212 : vector<1x32xi1>, vector<1x32xf32>
    %283 = arith.select %278, %212, %191 : vector<1x32xi1>, vector<1x32xf32>
    %284 = arith.select %278, %233, %170 : vector<1x32xi1>, vector<1x32xf32>
    %285 = arith.select %278, %254, %149 : vector<1x32xi1>, vector<1x32xf32>
    %286 = arith.select %278, %275, %128 : vector<1x32xi1>, vector<1x32xf32>
    %287 = tpu.concatenate %279, %280, %281, %282, %283, %284, %285, %286 in 0 : vector<1x32xf32>, vector<1x32xf32>, vector<1x32xf32>, vector<1x32xf32>, vector<1x32xf32>, vector<1x32xf32>, vector<1x32xf32>, vector<1x32xf32> -> vector<8x32xf32>
    %288 = arith.truncf %287 : vector<8x32xf32> to vector<8x32xbf16>
    %c0_87 = arith.constant 0 : index
    %c0_88 = arith.constant 0 : index
    %289 = vector.load %arg6[%c0_87, %c0_88] : memref<32x8xbf16, #tpu.memory_space<vmem>>, vector<32x8xbf16>
    %cst_89 = arith.constant dense<0.000000e+00> : vector<8x8xf32>
    %290 = tpu.matmul %288, %289, %cst_89 {dimension_numbers = #tpu.dot_dimension_numbers<[1], [0], [0], [1], [0, 0, 1, 1], [], []>} : vector<8x32xbf16>, vector<32x8xbf16>, vector<8x8xf32> -> vector<8x8xf32>
    %c0_90 = arith.constant 0 : index
    %c0_91 = arith.constant 0 : index
    %291 = vector.load %arg7[%c0_90, %c0_91] : memref<1x8xf32, #tpu.memory_space<vmem>>, vector<1x8xf32>
    %292 = vector.broadcast %291 : vector<1x8xf32> to vector<8x8xf32>
    %293 = arith.addf %290, %292 : vector<8x8xf32>
    %c0_92 = arith.constant 0 : index
    %c0_93 = arith.constant 0 : index
    %294 = vector.load %arg8[%c0_92, %c0_93] : memref<8x8xf32, #tpu.memory_space<vmem>>, vector<8x8xf32>
    %295 = tpu.iota {dimensions = array<i32: 1>} : vector<1x8xi32>
    %296 = tpu.iota {dimensions = array<i32: 1>} : vector<8x8xi32>
    %c6_i32_94 = arith.constant 6 : i32
    %297 = vector.broadcast %c6_i32_94 : i32 to vector<1x8xi32>
    %298 = arith.cmpi eq, %295, %297 : vector<1x8xi32>
    %cst_95 = arith.constant 0.000000e+00 : f32
    %cst_96 = arith.constant -1.000000e+04 : f32
    %299 = vector.broadcast %cst_95 : f32 to vector<1x8xf32>
    %300 = vector.broadcast %cst_96 : f32 to vector<1x8xf32>
    %301 = arith.select %298, %299, %300 : vector<1x8xi1>, vector<1x8xf32>
    %302 = vector.broadcast %301 : vector<1x8xf32> to vector<8x8xf32>
    %303 = arith.addf %294, %302 : vector<8x8xf32>
    %cst_97 = arith.constant dense<0xFF800000> : vector<8xf32>
    %304 = vector.multi_reduction <maximumf>, %303, %cst_97 [1] : vector<8x8xf32> to vector<8xf32>
    %305 = vector.shape_cast %304 : vector<8xf32> to vector<1x8xf32>
    %306 = vector.extract_strided_slice %293 {offsets = [0, 0], sizes = [1, 8], strides = [1, 1]} : vector<8x8xf32> to vector<1x8xf32>
    %307 = arith.addf %305, %306 : vector<1x8xf32>
    %308 = vector.broadcast %307 : vector<1x8xf32> to vector<8x8xf32>
    %309 = arith.addf %294, %308 : vector<8x8xf32>
    %cst_98 = arith.constant dense<0xFF800000> : vector<8xf32>
    %310 = vector.multi_reduction <maximumf>, %309, %cst_98 [1] : vector<8x8xf32> to vector<8xf32>
    %311 = vector.shape_cast %310 : vector<8xf32> to vector<8x1xf32>
    %312 = vector.broadcast %311 : vector<8x1xf32> to vector<8x8xf32>
    %313 = arith.cmpf oeq, %309, %312 : vector<8x8xf32>
    %c8_i32 = arith.constant 8 : i32
    %314 = vector.broadcast %c8_i32 : i32 to vector<8x8xi32>
    %315 = arith.select %313, %296, %314 : vector<8x8xi1>, vector<8x8xi32>
    %cst_99 = arith.constant dense<2147483647> : vector<8xi32>
    %316 = vector.multi_reduction <minsi>, %315, %cst_99 [1] : vector<8x8xi32> to vector<8xi32>
    %317 = vector.shape_cast %316 : vector<8xi32> to vector<1x8xi32>
    %cst_100 = arith.constant dense<0xFF800000> : vector<8xf32>
    %318 = vector.multi_reduction <maximumf>, %309, %cst_100 [1] : vector<8x8xf32> to vector<8xf32>
    %319 = vector.shape_cast %318 : vector<8xf32> to vector<1x8xf32>
    %320 = vector.extract_strided_slice %293 {offsets = [1, 0], sizes = [1, 8], strides = [1, 1]} : vector<8x8xf32> to vector<1x8xf32>
    %321 = arith.addf %319, %320 : vector<1x8xf32>
    %322 = vector.broadcast %321 : vector<1x8xf32> to vector<8x8xf32>
    %323 = arith.addf %294, %322 : vector<8x8xf32>
    %cst_101 = arith.constant dense<0xFF800000> : vector<8xf32>
    %324 = vector.multi_reduction <maximumf>, %323, %cst_101 [1] : vector<8x8xf32> to vector<8xf32>
    %325 = vector.shape_cast %324 : vector<8xf32> to vector<8x1xf32>
    %326 = vector.broadcast %325 : vector<8x1xf32> to vector<8x8xf32>
    %327 = arith.cmpf oeq, %323, %326 : vector<8x8xf32>
    %c8_i32_102 = arith.constant 8 : i32
    %328 = vector.broadcast %c8_i32_102 : i32 to vector<8x8xi32>
    %329 = arith.select %327, %296, %328 : vector<8x8xi1>, vector<8x8xi32>
    %cst_103 = arith.constant dense<2147483647> : vector<8xi32>
    %330 = vector.multi_reduction <minsi>, %329, %cst_103 [1] : vector<8x8xi32> to vector<8xi32>
    %331 = vector.shape_cast %330 : vector<8xi32> to vector<1x8xi32>
    %cst_104 = arith.constant dense<0xFF800000> : vector<8xf32>
    %332 = vector.multi_reduction <maximumf>, %323, %cst_104 [1] : vector<8x8xf32> to vector<8xf32>
    %333 = vector.shape_cast %332 : vector<8xf32> to vector<1x8xf32>
    %334 = vector.extract_strided_slice %293 {offsets = [2, 0], sizes = [1, 8], strides = [1, 1]} : vector<8x8xf32> to vector<1x8xf32>
    %335 = arith.addf %333, %334 : vector<1x8xf32>
    %336 = vector.broadcast %335 : vector<1x8xf32> to vector<8x8xf32>
    %337 = arith.addf %294, %336 : vector<8x8xf32>
    %cst_105 = arith.constant dense<0xFF800000> : vector<8xf32>
    %338 = vector.multi_reduction <maximumf>, %337, %cst_105 [1] : vector<8x8xf32> to vector<8xf32>
    %339 = vector.shape_cast %338 : vector<8xf32> to vector<8x1xf32>
    %340 = vector.broadcast %339 : vector<8x1xf32> to vector<8x8xf32>
    %341 = arith.cmpf oeq, %337, %340 : vector<8x8xf32>
    %c8_i32_106 = arith.constant 8 : i32
    %342 = vector.broadcast %c8_i32_106 : i32 to vector<8x8xi32>
    %343 = arith.select %341, %296, %342 : vector<8x8xi1>, vector<8x8xi32>
    %cst_107 = arith.constant dense<2147483647> : vector<8xi32>
    %344 = vector.multi_reduction <minsi>, %343, %cst_107 [1] : vector<8x8xi32> to vector<8xi32>
    %345 = vector.shape_cast %344 : vector<8xi32> to vector<1x8xi32>
    %cst_108 = arith.constant dense<0xFF800000> : vector<8xf32>
    %346 = vector.multi_reduction <maximumf>, %337, %cst_108 [1] : vector<8x8xf32> to vector<8xf32>
    %347 = vector.shape_cast %346 : vector<8xf32> to vector<1x8xf32>
    %348 = vector.extract_strided_slice %293 {offsets = [3, 0], sizes = [1, 8], strides = [1, 1]} : vector<8x8xf32> to vector<1x8xf32>
    %349 = arith.addf %347, %348 : vector<1x8xf32>
    %350 = vector.broadcast %349 : vector<1x8xf32> to vector<8x8xf32>
    %351 = arith.addf %294, %350 : vector<8x8xf32>
    %cst_109 = arith.constant dense<0xFF800000> : vector<8xf32>
    %352 = vector.multi_reduction <maximumf>, %351, %cst_109 [1] : vector<8x8xf32> to vector<8xf32>
    %353 = vector.shape_cast %352 : vector<8xf32> to vector<8x1xf32>
    %354 = vector.broadcast %353 : vector<8x1xf32> to vector<8x8xf32>
    %355 = arith.cmpf oeq, %351, %354 : vector<8x8xf32>
    %c8_i32_110 = arith.constant 8 : i32
    %356 = vector.broadcast %c8_i32_110 : i32 to vector<8x8xi32>
    %357 = arith.select %355, %296, %356 : vector<8x8xi1>, vector<8x8xi32>
    %cst_111 = arith.constant dense<2147483647> : vector<8xi32>
    %358 = vector.multi_reduction <minsi>, %357, %cst_111 [1] : vector<8x8xi32> to vector<8xi32>
    %359 = vector.shape_cast %358 : vector<8xi32> to vector<1x8xi32>
    %cst_112 = arith.constant dense<0xFF800000> : vector<8xf32>
    %360 = vector.multi_reduction <maximumf>, %351, %cst_112 [1] : vector<8x8xf32> to vector<8xf32>
    %361 = vector.shape_cast %360 : vector<8xf32> to vector<1x8xf32>
    %362 = vector.extract_strided_slice %293 {offsets = [4, 0], sizes = [1, 8], strides = [1, 1]} : vector<8x8xf32> to vector<1x8xf32>
    %363 = arith.addf %361, %362 : vector<1x8xf32>
    %364 = vector.broadcast %363 : vector<1x8xf32> to vector<8x8xf32>
    %365 = arith.addf %294, %364 : vector<8x8xf32>
    %cst_113 = arith.constant dense<0xFF800000> : vector<8xf32>
    %366 = vector.multi_reduction <maximumf>, %365, %cst_113 [1] : vector<8x8xf32> to vector<8xf32>
    %367 = vector.shape_cast %366 : vector<8xf32> to vector<8x1xf32>
    %368 = vector.broadcast %367 : vector<8x1xf32> to vector<8x8xf32>
    %369 = arith.cmpf oeq, %365, %368 : vector<8x8xf32>
    %c8_i32_114 = arith.constant 8 : i32
    %370 = vector.broadcast %c8_i32_114 : i32 to vector<8x8xi32>
    %371 = arith.select %369, %296, %370 : vector<8x8xi1>, vector<8x8xi32>
    %cst_115 = arith.constant dense<2147483647> : vector<8xi32>
    %372 = vector.multi_reduction <minsi>, %371, %cst_115 [1] : vector<8x8xi32> to vector<8xi32>
    %373 = vector.shape_cast %372 : vector<8xi32> to vector<1x8xi32>
    %cst_116 = arith.constant dense<0xFF800000> : vector<8xf32>
    %374 = vector.multi_reduction <maximumf>, %365, %cst_116 [1] : vector<8x8xf32> to vector<8xf32>
    %375 = vector.shape_cast %374 : vector<8xf32> to vector<1x8xf32>
    %376 = vector.extract_strided_slice %293 {offsets = [5, 0], sizes = [1, 8], strides = [1, 1]} : vector<8x8xf32> to vector<1x8xf32>
    %377 = arith.addf %375, %376 : vector<1x8xf32>
    %378 = vector.broadcast %377 : vector<1x8xf32> to vector<8x8xf32>
    %379 = arith.addf %294, %378 : vector<8x8xf32>
    %cst_117 = arith.constant dense<0xFF800000> : vector<8xf32>
    %380 = vector.multi_reduction <maximumf>, %379, %cst_117 [1] : vector<8x8xf32> to vector<8xf32>
    %381 = vector.shape_cast %380 : vector<8xf32> to vector<8x1xf32>
    %382 = vector.broadcast %381 : vector<8x1xf32> to vector<8x8xf32>
    %383 = arith.cmpf oeq, %379, %382 : vector<8x8xf32>
    %c8_i32_118 = arith.constant 8 : i32
    %384 = vector.broadcast %c8_i32_118 : i32 to vector<8x8xi32>
    %385 = arith.select %383, %296, %384 : vector<8x8xi1>, vector<8x8xi32>
    %cst_119 = arith.constant dense<2147483647> : vector<8xi32>
    %386 = vector.multi_reduction <minsi>, %385, %cst_119 [1] : vector<8x8xi32> to vector<8xi32>
    %387 = vector.shape_cast %386 : vector<8xi32> to vector<1x8xi32>
    %cst_120 = arith.constant dense<0xFF800000> : vector<8xf32>
    %388 = vector.multi_reduction <maximumf>, %379, %cst_120 [1] : vector<8x8xf32> to vector<8xf32>
    %389 = vector.shape_cast %388 : vector<8xf32> to vector<1x8xf32>
    %390 = vector.extract_strided_slice %293 {offsets = [6, 0], sizes = [1, 8], strides = [1, 1]} : vector<8x8xf32> to vector<1x8xf32>
    %391 = arith.addf %389, %390 : vector<1x8xf32>
    %392 = vector.broadcast %391 : vector<1x8xf32> to vector<8x8xf32>
    %393 = arith.addf %294, %392 : vector<8x8xf32>
    %cst_121 = arith.constant dense<0xFF800000> : vector<8xf32>
    %394 = vector.multi_reduction <maximumf>, %393, %cst_121 [1] : vector<8x8xf32> to vector<8xf32>
    %395 = vector.shape_cast %394 : vector<8xf32> to vector<8x1xf32>
    %396 = vector.broadcast %395 : vector<8x1xf32> to vector<8x8xf32>
    %397 = arith.cmpf oeq, %393, %396 : vector<8x8xf32>
    %c8_i32_122 = arith.constant 8 : i32
    %398 = vector.broadcast %c8_i32_122 : i32 to vector<8x8xi32>
    %399 = arith.select %397, %296, %398 : vector<8x8xi1>, vector<8x8xi32>
    %cst_123 = arith.constant dense<2147483647> : vector<8xi32>
    %400 = vector.multi_reduction <minsi>, %399, %cst_123 [1] : vector<8x8xi32> to vector<8xi32>
    %401 = vector.shape_cast %400 : vector<8xi32> to vector<1x8xi32>
    %cst_124 = arith.constant dense<0xFF800000> : vector<8xf32>
    %402 = vector.multi_reduction <maximumf>, %393, %cst_124 [1] : vector<8x8xf32> to vector<8xf32>
    %403 = vector.shape_cast %402 : vector<8xf32> to vector<1x8xf32>
    %404 = vector.extract_strided_slice %293 {offsets = [7, 0], sizes = [1, 8], strides = [1, 1]} : vector<8x8xf32> to vector<1x8xf32>
    %405 = arith.addf %403, %404 : vector<1x8xf32>
    %406 = vector.extract_strided_slice %294 {offsets = [7, 0], sizes = [1, 8], strides = [1, 1]} : vector<8x8xf32> to vector<1x8xf32>
    %407 = arith.addf %405, %406 : vector<1x8xf32>
    %cst_125 = arith.constant dense<0xFF800000> : vector<1xf32>
    %408 = vector.multi_reduction <maximumf>, %407, %cst_125 [1] : vector<1x8xf32> to vector<1xf32>
    %409 = vector.shape_cast %408 : vector<1xf32> to vector<1x1xf32>
    %410 = vector.broadcast %409 : vector<1x1xf32> to vector<1x8xf32>
    %411 = arith.cmpf oeq, %407, %410 : vector<1x8xf32>
    %c8_i32_126 = arith.constant 8 : i32
    %412 = vector.broadcast %c8_i32_126 : i32 to vector<1x8xi32>
    %413 = arith.select %411, %295, %412 : vector<1x8xi1>, vector<1x8xi32>
    %cst_127 = arith.constant dense<2147483647> : vector<1xi32>
    %414 = vector.multi_reduction <minsi>, %413, %cst_127 [1] : vector<1x8xi32> to vector<1xi32>
    %415 = vector.shape_cast %414 : vector<1xi32> to vector<1x1xi32>
    %c0_128 = arith.constant 0 : index
    %c0_129 = arith.constant 0 : index
    %c0_130 = arith.constant 0 : index
    %416 = vector.load %arg9[%c0_128, %c0_129, %c0_130] : memref<1x1x1xf32, #tpu.memory_space<vmem>>, vector<1x1x1xf32>
    %417 = vector.shape_cast %416 : vector<1x1x1xf32> to vector<1x1xf32>
    %418 = vector.shape_cast %409 : vector<1x1xf32> to vector<1x1x1xf32>
    tpu.vector_store %arg9[%c0_128, %c0_129, %c0_130], %418 {strides = array<i32>} : memref<1x1x1xf32, #tpu.memory_space<vmem>>, vector<1x1x1xf32>,
    %419 = tpu.iota {dimensions = array<i32: 1>} : vector<1x8xi32>
    %c7_i32_131 = arith.constant 7 : i32
    %420 = vector.broadcast %c7_i32_131 : i32 to vector<1x8xi32>
    %421 = arith.cmpi eq, %419, %420 : vector<1x8xi32>
    %c0_i32_132 = arith.constant 0 : i32
    %422 = vector.shape_cast %415 : vector<1x1xi32> to vector<1x1xi32>
    %423 = vector.broadcast %422 : vector<1x1xi32> to vector<1x8xi32>
    %424 = vector.broadcast %c0_i32_132 : i32 to vector<1x8xi32>
    %425 = arith.select %421, %423, %424 : vector<1x8xi1>, vector<1x8xi32>
    %426 = vector.broadcast %415 : vector<1x1xi32> to vector<1x8xi32>
    %427 = arith.cmpi eq, %295, %426 : vector<1x8xi32>
    %c0_i32_133 = arith.constant 0 : i32
    %428 = vector.broadcast %c0_i32_133 : i32 to vector<1x8xi32>
    %429 = arith.select %427, %401, %428 : vector<1x8xi1>, vector<1x8xi32>
    %cst_134 = arith.constant dense<0> : vector<1xi32>
    %430 = vector.multi_reduction <add>, %429, %cst_134 [1] : vector<1x8xi32> to vector<1xi32>
    %431 = vector.shape_cast %430 : vector<1xi32> to vector<1x1xi32>
    %c6_i32_135 = arith.constant 6 : i32
    %432 = vector.broadcast %c6_i32_135 : i32 to vector<1x8xi32>
    %433 = arith.cmpi eq, %419, %432 : vector<1x8xi32>
    %434 = vector.shape_cast %431 : vector<1x1xi32> to vector<1x1xi32>
    %435 = vector.broadcast %434 : vector<1x1xi32> to vector<1x8xi32>
    %436 = arith.select %433, %435, %425 : vector<1x8xi1>, vector<1x8xi32>
    %437 = vector.broadcast %431 : vector<1x1xi32> to vector<1x8xi32>
    %438 = arith.cmpi eq, %295, %437 : vector<1x8xi32>
    %c0_i32_136 = arith.constant 0 : i32
    %439 = vector.broadcast %c0_i32_136 : i32 to vector<1x8xi32>
    %440 = arith.select %438, %387, %439 : vector<1x8xi1>, vector<1x8xi32>
    %cst_137 = arith.constant dense<0> : vector<1xi32>
    %441 = vector.multi_reduction <add>, %440, %cst_137 [1] : vector<1x8xi32> to vector<1xi32>
    %442 = vector.shape_cast %441 : vector<1xi32> to vector<1x1xi32>
    %c5_i32_138 = arith.constant 5 : i32
    %443 = vector.broadcast %c5_i32_138 : i32 to vector<1x8xi32>
    %444 = arith.cmpi eq, %419, %443 : vector<1x8xi32>
    %445 = vector.shape_cast %442 : vector<1x1xi32> to vector<1x1xi32>
    %446 = vector.broadcast %445 : vector<1x1xi32> to vector<1x8xi32>
    %447 = arith.select %444, %446, %436 : vector<1x8xi1>, vector<1x8xi32>
    %448 = vector.broadcast %442 : vector<1x1xi32> to vector<1x8xi32>
    %449 = arith.cmpi eq, %295, %448 : vector<1x8xi32>
    %c0_i32_139 = arith.constant 0 : i32
    %450 = vector.broadcast %c0_i32_139 : i32 to vector<1x8xi32>
    %451 = arith.select %449, %373, %450 : vector<1x8xi1>, vector<1x8xi32>
    %cst_140 = arith.constant dense<0> : vector<1xi32>
    %452 = vector.multi_reduction <add>, %451, %cst_140 [1] : vector<1x8xi32> to vector<1xi32>
    %453 = vector.shape_cast %452 : vector<1xi32> to vector<1x1xi32>
    %c4_i32_141 = arith.constant 4 : i32
    %454 = vector.broadcast %c4_i32_141 : i32 to vector<1x8xi32>
    %455 = arith.cmpi eq, %419, %454 : vector<1x8xi32>
    %456 = vector.shape_cast %453 : vector<1x1xi32> to vector<1x1xi32>
    %457 = vector.broadcast %456 : vector<1x1xi32> to vector<1x8xi32>
    %458 = arith.select %455, %457, %447 : vector<1x8xi1>, vector<1x8xi32>
    %459 = vector.broadcast %453 : vector<1x1xi32> to vector<1x8xi32>
    %460 = arith.cmpi eq, %295, %459 : vector<1x8xi32>
    %c0_i32_142 = arith.constant 0 : i32
    %461 = vector.broadcast %c0_i32_142 : i32 to vector<1x8xi32>
    %462 = arith.select %460, %359, %461 : vector<1x8xi1>, vector<1x8xi32>
    %cst_143 = arith.constant dense<0> : vector<1xi32>
    %463 = vector.multi_reduction <add>, %462, %cst_143 [1] : vector<1x8xi32> to vector<1xi32>
    %464 = vector.shape_cast %463 : vector<1xi32> to vector<1x1xi32>
    %c3_i32_144 = arith.constant 3 : i32
    %465 = vector.broadcast %c3_i32_144 : i32 to vector<1x8xi32>
    %466 = arith.cmpi eq, %419, %465 : vector<1x8xi32>
    %467 = vector.shape_cast %464 : vector<1x1xi32> to vector<1x1xi32>
    %468 = vector.broadcast %467 : vector<1x1xi32> to vector<1x8xi32>
    %469 = arith.select %466, %468, %458 : vector<1x8xi1>, vector<1x8xi32>
    %470 = vector.broadcast %464 : vector<1x1xi32> to vector<1x8xi32>
    %471 = arith.cmpi eq, %295, %470 : vector<1x8xi32>
    %c0_i32_145 = arith.constant 0 : i32
    %472 = vector.broadcast %c0_i32_145 : i32 to vector<1x8xi32>
    %473 = arith.select %471, %345, %472 : vector<1x8xi1>, vector<1x8xi32>
    %cst_146 = arith.constant dense<0> : vector<1xi32>
    %474 = vector.multi_reduction <add>, %473, %cst_146 [1] : vector<1x8xi32> to vector<1xi32>
    %475 = vector.shape_cast %474 : vector<1xi32> to vector<1x1xi32>
    %c2_i32_147 = arith.constant 2 : i32
    %476 = vector.broadcast %c2_i32_147 : i32 to vector<1x8xi32>
    %477 = arith.cmpi eq, %419, %476 : vector<1x8xi32>
    %478 = vector.shape_cast %475 : vector<1x1xi32> to vector<1x1xi32>
    %479 = vector.broadcast %478 : vector<1x1xi32> to vector<1x8xi32>
    %480 = arith.select %477, %479, %469 : vector<1x8xi1>, vector<1x8xi32>
    %481 = vector.broadcast %475 : vector<1x1xi32> to vector<1x8xi32>
    %482 = arith.cmpi eq, %295, %481 : vector<1x8xi32>
    %c0_i32_148 = arith.constant 0 : i32
    %483 = vector.broadcast %c0_i32_148 : i32 to vector<1x8xi32>
    %484 = arith.select %482, %331, %483 : vector<1x8xi1>, vector<1x8xi32>
    %cst_149 = arith.constant dense<0> : vector<1xi32>
    %485 = vector.multi_reduction <add>, %484, %cst_149 [1] : vector<1x8xi32> to vector<1xi32>
    %486 = vector.shape_cast %485 : vector<1xi32> to vector<1x1xi32>
    %c1_i32_150 = arith.constant 1 : i32
    %487 = vector.broadcast %c1_i32_150 : i32 to vector<1x8xi32>
    %488 = arith.cmpi eq, %419, %487 : vector<1x8xi32>
    %489 = vector.shape_cast %486 : vector<1x1xi32> to vector<1x1xi32>
    %490 = vector.broadcast %489 : vector<1x1xi32> to vector<1x8xi32>
    %491 = arith.select %488, %490, %480 : vector<1x8xi1>, vector<1x8xi32>
    %492 = vector.broadcast %486 : vector<1x1xi32> to vector<1x8xi32>
    %493 = arith.cmpi eq, %295, %492 : vector<1x8xi32>
    %c0_i32_151 = arith.constant 0 : i32
    %494 = vector.broadcast %c0_i32_151 : i32 to vector<1x8xi32>
    %495 = arith.select %493, %317, %494 : vector<1x8xi1>, vector<1x8xi32>
    %cst_152 = arith.constant dense<0> : vector<1xi32>
    %496 = vector.multi_reduction <add>, %495, %cst_152 [1] : vector<1x8xi32> to vector<1xi32>
    %497 = vector.shape_cast %496 : vector<1xi32> to vector<1x1xi32>
    %c0_i32_153 = arith.constant 0 : i32
    %498 = vector.broadcast %c0_i32_153 : i32 to vector<1x8xi32>
    %499 = arith.cmpi eq, %419, %498 : vector<1x8xi32>
    %500 = vector.shape_cast %497 : vector<1x1xi32> to vector<1x1xi32>
    %501 = vector.broadcast %500 : vector<1x1xi32> to vector<1x8xi32>
    %502 = arith.select %499, %501, %491 : vector<1x8xi1>, vector<1x8xi32>
    %c0_154 = arith.constant 0 : index
    %c0_155 = arith.constant 0 : index
    %c0_156 = arith.constant 0 : index
    %503 = vector.load %arg10[%c0_154, %c0_155, %c0_156] : memref<1x1x8xi32, #tpu.memory_space<vmem>>, vector<1x1x8xi32>
    %504 = vector.shape_cast %503 : vector<1x1x8xi32> to vector<1x8xi32>
    %505 = vector.shape_cast %502 : vector<1x8xi32> to vector<1x1x8xi32>
    tpu.vector_store %arg10[%c0_154, %c0_155, %c0_156], %505 {strides = array<i32>} : memref<1x1x8xi32, #tpu.memory_space<vmem>>, vector<1x1x8xi32>,
    return
  }
  func.func @transform_1(%arg0: i32, %arg1: memref<2x8xi32, #tpu.memory_space<smem>>) -> (i32, i32) {
    %c0_i32 = arith.constant 0 : i32
    %c0_i32_0 = arith.constant 0 : i32
    %c0_i32_1 = arith.constant 0 : i32
    return %c0_i32, %c0_i32_0 : i32, i32
  }
  func.func @transform_2(%arg0: i32, %arg1: memref<2x8xi32, #tpu.memory_space<smem>>) -> (i32, i32) {
    %c0_i32 = arith.constant 0 : i32
    %c0_i32_0 = arith.constant 0 : i32
    %c0_i32_1 = arith.constant 0 : i32
    return %c0_i32, %c0_i32_0 : i32, i32
  }
  func.func @transform_3(%arg0: i32, %arg1: memref<2x8xi32, #tpu.memory_space<smem>>) -> (i32, i32) {
    %c0_i32 = arith.constant 0 : i32
    %c0_i32_0 = arith.constant 0 : i32
    %c0_i32_1 = arith.constant 0 : i32
    return %c0_i32, %c0_i32_0 : i32, i32
  }
  func.func @transform_4(%arg0: i32, %arg1: memref<2x8xi32, #tpu.memory_space<smem>>) -> (i32, i32) {
    %c0_i32 = arith.constant 0 : i32
    %c0_i32_0 = arith.constant 0 : i32
    %c0_i32_1 = arith.constant 0 : i32
    return %c0_i32, %c0_i32_0 : i32, i32
  }
  func.func @transform_5(%arg0: i32, %arg1: memref<2x8xi32, #tpu.memory_space<smem>>) -> (i32, i32) {
    %c0_i32 = arith.constant 0 : i32
    %c0_i32_0 = arith.constant 0 : i32
    %c0_i32_1 = arith.constant 0 : i32
    return %c0_i32, %c0_i32_0 : i32, i32
  }
  func.func @transform_6(%arg0: i32, %arg1: memref<2x8xi32, #tpu.memory_space<smem>>) -> (i32, i32) {
    %c0_i32 = arith.constant 0 : i32
    %c0_i32_0 = arith.constant 0 : i32
    %c0_i32_1 = arith.constant 0 : i32
    return %c0_i32, %c0_i32_0 : i32, i32
  }
  func.func @transform_7(%arg0: i32, %arg1: memref<2x8xi32, #tpu.memory_space<smem>>) -> (i32, i32, i32) {
    %c0_i32 = arith.constant 0 : i32
    %c0_i32_0 = arith.constant 0 : i32
    %c0_i32_1 = arith.constant 0 : i32
    return %arg0, %c0_i32, %c0_i32_0 : i32, i32, i32
  }
  func.func @transform_8(%arg0: i32, %arg1: memref<2x8xi32, #tpu.memory_space<smem>>) -> (i32, i32, i32) {
    %c0_i32 = arith.constant 0 : i32
    %c0_i32_0 = arith.constant 0 : i32
    %c0_i32_1 = arith.constant 0 : i32
    return %arg0, %c0_i32, %c0_i32_0 : i32, i32, i32
  }
}

</mosaic_0001>

<llo_original>
// kernel: tpu_custom_call.1
$region0: #{tpu_custom_call.1}
  #allocation0 [shape = 'u32[]', space=smem, size = 0x4, offset = 0x4, fixed_abs, tag = 'smem constant byte address 0x4 - core index']
  #allocation1 [shape = 'u32[144,128]{1,0:T(1,128)}', space=vmem, size = 0x12000, scoped, tag = 'internal scratch']
  #allocation2 [shape = 'f32[8,32]{1,0:T(8,128)}', space=vmem, size = 0x1000, scoped, tag = 'scratch operand']
  #allocation3 [shape = 's32[8]{0}', space=sflag, size = 0x20, scoped, tag = 'scratch operand']
  #allocation4 [shape = 's32[1]{0}', space=sflag, size = 0x4, scoped, tag = 'scoped memory for tpu_custom_call.1']
  #allocation5 [shape = 'u8[1024]{0}', space=smem, size = 0x400, scoped, tag = 'prefetched SMEM operand 0']
  #allocation8 [shape = 's32[]', space=sflag, size = 0x4, offset = 0, fixed_abs, tag = 'sflag constant byte address 0x0 - dummy sync flag']
  #allocation9 [shape = 's32[]', space=sflag, size = 0x4, offset = 0, fixed_abs, tag = 'sflag constant byte address 0x0 - dummy sync flag']
  #allocation10 [shape = 's32[]', space=sflag, size = 0x4, offset = 0, fixed_abs, tag = 'sflag constant byte address 0x0 - dummy sync flag']
  #allocation11 [shape = 's32[]', space=sflag, size = 0x4, offset = 0, fixed_abs, tag = 'sflag constant byte address 0x0 - dummy sync flag']
  #allocation12 [shape = 's32[]', space=sflag, size = 0x4, offset = 0, fixed_abs, tag = 'sflag constant byte address 0x0 - dummy sync flag']
  #allocation13 [shape = 's32[]', space=sflag, size = 0x4, offset = 0, fixed_abs, tag = 'sflag constant byte address 0x0 - dummy sync flag']
  #allocation14 [shape = 's32[]', space=sflag, size = 0x4, offset = 0, fixed_abs, tag = 'sflag constant byte address 0x0 - dummy sync flag']
  #allocation15 [shape = 's32[]', space=sflag, size = 0x4, offset = 0, fixed_abs, tag = 'sflag constant byte address 0x0 - dummy sync flag']
  %s0 = inlined_call_operand.vmem [shape: s32[2,8], index: 0, kind: input, shape index: {}]
  %s1 = inlined_call_operand.vmem [shape: f32[100,32], index: 1, kind: input, shape index: {}]
  %s2 = inlined_call_operand.vmem [shape: bf16[32,128], index: 2, kind: input, shape index: {}]
  %s3 = inlined_call_operand.vmem [shape: bf16[32,128], index: 3, kind: input, shape index: {}]
  %s4 = inlined_call_operand.vmem [shape: f32[1,128], index: 4, kind: input, shape index: {}]
  %s5 = inlined_call_operand.vmem [shape: bf16[32,8], index: 5, kind: input, shape index: {}]
  %s6 = inlined_call_operand.vmem [shape: f32[1,8], index: 6, kind: input, shape index: {}]
  %s7 = inlined_call_operand.vmem [shape: f32[8,8], index: 7, kind: input, shape index: {}]
  %s8 = inlined_call_operand.vmem [shape: f32[2,1,1], index: 8, kind: output, shape index: {0}]
  %s9 = inlined_call_operand.hbm [shape: s32[2,1,8], index: 9, kind: output, shape index: {1}]
  %10 = xla_tuple %s8, %s9
  %s11 = sld [smem:[#allocation0]]
  $region305: #{tpu_custom_call.1} parent=0
    _
  %s13 = ssub.s32 1, %s11
  %s14 = scalar_select 0, %s13, %s11
  %s15 = sshll.u32 %s0, 4
  %s16 = int_to_ptr.vmem [resolvable:$true] %s15
  %18 = dma.vmem_to_smem %s16, 32, [#allocation5], [#allocation4]
  %19 = dma.done [#allocation4], 32
  %20 = sfence
  $region1: #{tpu_custom_call.1} parent=0
    #allocation6 [shape = 'u8[1024]{0}', space=vmem, size = 0x400, scoped, tag = 'output window, operand 1']
    #allocation7 [shape = 's32[2]{0}', space=sflag, size = 0x8, scoped, tag = 'scoped memory for tpu_custom_call.1']
    %21 = vsyncpa [#allocation7], 0
    %s22 = scalar_lea.sflag [#allocation7], 1
    %23 = vsyncpa %s22, 0
    loop: start=0, step=1, limit=4
    $region2: #{tpu_custom_call.1} parent=1 // loop_pre_header
      _
    $region3: #{tpu_custom_call.1} parent=1 // loop_header
      %s25 = sphi 0, %s29
      %p26 = scmp.ge.s32.totalorder %s25, 4
      %s33 = sphi 0, %s33
      %s35 = sphi 0, %s33
      %s36 = sphi 0, %s35
      %s50 = sphi 0, %s36
      %s54 = sphi 0, %s54
      %s56 = sphi 0, %s54
      %s57 = sphi 0, %s56
      %s71 = sphi 0, %s57
      %s75 = sphi 0, %s75
      %s77 = sphi 0, %s75
      %s78 = sphi 0, %s77
      %s92 = sphi 0, %s78
      %s96 = sphi 0, %s96
      %s98 = sphi 0, %s96
      %s99 = sphi 0, %s98
      %s113 = sphi 0, %s99
      %s117 = sphi 0, %s117
      %s119 = sphi 0, %s117
      %s120 = sphi 0, %s119
      %s134 = sphi 0, %s120
      %s138 = sphi 0, %s138
      %s140 = sphi 0, %s138
      %s141 = sphi 0, %s140
      %s155 = sphi 0, %s141
      %s161 = sphi 0, %s163
      %s164 = sphi 0, %s161
      %s165 = sphi 0, %s164
      %s181 = sphi 0, %s165
      %s187 = sphi 0, %s189
      %s190 = sphi 0, %s187
      %s191 = sphi 0, %s190
      %s207 = sphi 0, %s191
    $region4: #{tpu_custom_call.1} parent=1 // loop_header_branch
      %28 = sbr.rel (%p26) target = $region8
    $region5: #{tpu_custom_call.1} parent=1 // loop_body
      %s30 = ssub.s32 %s25, 1
      %s31 = ssub.s32 %s25, 2
      %s32 = sadd.s32 %s25, 1
      %s34 = sadd.s32 %s33, 1
      %p37 = scmp.eq.s32.totalorder %s25, 1
      %p38 = scmp.ne.s32.totalorder %s33, %s35
      %p39 = scmp.eq.s32.totalorder %s25, 0
      %p40 = por %p38, %p39
      %p41 = scmp.ne.s32.totalorder %s33, %s35
      %p42 = scmp.eq.s32.totalorder %s30, 1
      %p43 = por %p41, %p42
      %p44 = scmp.ne.s32.totalorder %s35, %s36
      %p45 = scmp.eq.s32.totalorder %s30, 0
      %p46 = por %p44, %p45
      %p47 = scmp.ne.s32.totalorder %s35, %s36
      %p48 = scmp.eq.s32.totalorder %s31, 1
      %p49 = por %p47, %p48
      %p51 = scmp.ne.s32.totalorder %s36, %s50
      %p52 = scmp.eq.s32.totalorder %s31, 0
      %p53 = por %p51, %p52
      %s55 = sadd.s32 %s54, 1
      %p58 = scmp.eq.s32.totalorder %s25, 1
      %p59 = scmp.ne.s32.totalorder %s54, %s56
      %p60 = scmp.eq.s32.totalorder %s25, 0
      %p61 = por %p59, %p60
      %p62 = scmp.ne.s32.totalorder %s54, %s56
      %p63 = scmp.eq.s32.totalorder %s30, 1
      %p64 = por %p62, %p63
      %p65 = scmp.ne.s32.totalorder %s56, %s57
      %p66 = scmp.eq.s32.totalorder %s30, 0
      %p67 = por %p65, %p66
      %p68 = scmp.ne.s32.totalorder %s56, %s57
      %p69 = scmp.eq.s32.totalorder %s31, 1
      %p70 = por %p68, %p69
      %p72 = scmp.ne.s32.totalorder %s57, %s71
      %p73 = scmp.eq.s32.totalorder %s31, 0
      %p74 = por %p72, %p73
      %s76 = sadd.s32 %s75, 1
      %p79 = scmp.eq.s32.totalorder %s25, 1
      %p80 = scmp.ne.s32.totalorder %s75, %s77
      %p81 = scmp.eq.s32.totalorder %s25, 0
      %p82 = por %p80, %p81
      %p83 = scmp.ne.s32.totalorder %s75, %s77
      %p84 = scmp.eq.s32.totalorder %s30, 1
      %p85 = por %p83, %p84
      %p86 = scmp.ne.s32.totalorder %s77, %s78
      %p87 = scmp.eq.s32.totalorder %s30, 0
      %p88 = por %p86, %p87
      %p89 = scmp.ne.s32.totalorder %s77, %s78
      %p90 = scmp.eq.s32.totalorder %s31, 1
      %p91 = por %p89, %p90
      %p93 = scmp.ne.s32.totalorder %s78, %s92
      %p94 = scmp.eq.s32.totalorder %s31, 0
      %p95 = por %p93, %p94
      %s97 = sadd.s32 %s96, 1
      %p100 = scmp.eq.s32.totalorder %s25, 1
      %p101 = scmp.ne.s32.totalorder %s96, %s98
      %p102 = scmp.eq.s32.totalorder %s25, 0
      %p103 = por %p101, %p102
      %p104 = scmp.ne.s32.totalorder %s96, %s98
      %p105 = scmp.eq.s32.totalorder %s30, 1
      %p106 = por %p104, %p105
      %p107 = scmp.ne.s32.totalorder %s98, %s99
      %p108 = scmp.eq.s32.totalorder %s30, 0
      %p109 = por %p107, %p108
      %p110 = scmp.ne.s32.totalorder %s98, %s99
      %p111 = scmp.eq.s32.totalorder %s31, 1
      %p112 = por %p110, %p111
      %p114 = scmp.ne.s32.totalorder %s99, %s113
      %p115 = scmp.eq.s32.totalorder %s31, 0
      %p116 = por %p114, %p115
      %s118 = sadd.s32 %s117, 1
      %p121 = scmp.eq.s32.totalorder %s25, 1
      %p122 = scmp.ne.s32.totalorder %s117, %s119
      %p123 = scmp.eq.s32.totalorder %s25, 0
      %p124 = por %p122, %p123
      %p125 = scmp.ne.s32.totalorder %s117, %s119
      %p126 = scmp.eq.s32.totalorder %s30, 1
      %p127 = por %p125, %p126
      %p128 = scmp.ne.s32.totalorder %s119, %s120
      %p129 = scmp.eq.s32.totalorder %s30, 0
      %p130 = por %p128, %p129
      %p131 = scmp.ne.s32.totalorder %s119, %s120
      %p132 = scmp.eq.s32.totalorder %s31, 1
      %p133 = por %p131, %p132
      %p135 = scmp.ne.s32.totalorder %s120, %s134
      %p136 = scmp.eq.s32.totalorder %s31, 0
      %p137 = por %p135, %p136
      %s139 = sadd.s32 %s138, 1
      %p142 = scmp.eq.s32.totalorder %s25, 1
      %p143 = scmp.ne.s32.totalorder %s138, %s140
      %p144 = scmp.eq.s32.totalorder %s25, 0
      %p145 = por %p143, %p144
      %p146 = scmp.ne.s32.totalorder %s138, %s140
      %p147 = scmp.eq.s32.totalorder %s30, 1
      %p148 = por %p146, %p147
      %p149 = scmp.ne.s32.totalorder %s140, %s141
      %p150 = scmp.eq.s32.totalorder %s30, 0
      %p151 = por %p149, %p150
      %p152 = scmp.ne.s32.totalorder %s140, %s141
      %p153 = scmp.eq.s32.totalorder %s31, 1
      %p154 = por %p152, %p153
      %p156 = scmp.ne.s32.totalorder %s141, %s155
      %p157 = scmp.eq.s32.totalorder %s31, 0
      %p158 = por %p156, %p157
      %s159 = ssub.s32 %s25, %s32
      %p160 = scmp.eq.s32.totalorder %s159, 0
      %s162 = sadd.s32 %s161, 1
      %s163 = scalar_select %p160, %s161, %s162
      %p166 = pneg %p160
      %p167 = scmp.eq.s32.totalorder %s25, 1
      %p168 = por %p166, %p167
      %p169 = scmp.ne.s32.totalorder %s161, %s164
      %p170 = scmp.eq.s32.totalorder %s25, 0
      %p171 = por %p169, %p170
      %p172 = scmp.ne.s32.totalorder %s161, %s164
      %p173 = scmp.eq.s32.totalorder %s30, 1
      %p174 = por %p172, %p173
      %p175 = scmp.ne.s32.totalorder %s164, %s165
      %p176 = scmp.eq.s32.totalorder %s30, 0
      %p177 = por %p175, %p176
      %p178 = scmp.ne.s32.totalorder %s164, %s165
      %p179 = scmp.eq.s32.totalorder %s31, 1
      %p180 = por %p178, %p179
      %p182 = scmp.ne.s32.totalorder %s165, %s181
      %p183 = scmp.eq.s32.totalorder %s31, 0
      %p184 = por %p182, %p183
      %s185 = ssub.s32 %s25, %s32
      %p186 = scmp.eq.s32.totalorder %s185, 0
      %s188 = sadd.s32 %s187, 1
      %s189 = scalar_select %p186, %s187, %s188
      %p192 = pneg %p186
      %p193 = scmp.eq.s32.totalorder %s25, 1
      %p194 = por %p192, %p193
      %p195 = scmp.ne.s32.totalorder %s187, %s190
      %p196 = scmp.eq.s32.totalorder %s25, 0
      %p197 = por %p195, %p196
      %p198 = scmp.ne.s32.totalorder %s187, %s190
      %p199 = scmp.eq.s32.totalorder %s30, 1
      %p200 = por %p198, %p199
      %p201 = scmp.ne.s32.totalorder %s190, %s191
      %p202 = scmp.eq.s32.totalorder %s30, 0
      %p203 = por %p201, %p202
      %p204 = scmp.ne.s32.totalorder %s190, %s191
      %p205 = scmp.eq.s32.totalorder %s31, 1
      %p206 = por %p204, %p205
      %p208 = scmp.ne.s32.totalorder %s191, %s207
      %p209 = scmp.eq.s32.totalorder %s31, 0
      %p210 = por %p208, %p209
      %p211 = scmp.le.s32.totalorder 1, %s25
      %p212 = scmp.lt.s32.totalorder %s25, 3
      %p213 = pnand %p211, %p212
      %p214 = pneg %p213
      // Predicated region
      $region9: #{tpu_custom_call.1} parent=5 // pred_check
        _
      $region10: #{tpu_custom_call.1} parent=5 // pred_check_branch
        %216 = sbr.rel (%p213) target = $region12
      $region11: #{tpu_custom_call.1} parent=5 // pred_region
        %s217 = ssub.s32 %s25, 1
        // Predicated region
        $region13: #{tpu_custom_call.1} parent=11 // pred_check
          %p218 = pneg %p46
        $region14: #{tpu_custom_call.1} parent=11 // pred_check_branch
          %220 = sbr.rel (%p218) target = $region16
        $region15: #{tpu_custom_call.1} parent=11 // pred_region
          _
        $region16: #{tpu_custom_call.1} parent=11 // pred_fallthru
          _
        // Predicated region
        $region17: #{tpu_custom_call.1} parent=11 // pred_check
          %p221 = pneg %p67
        $region18: #{tpu_custom_call.1} parent=11 // pred_check_branch
          %223 = sbr.rel (%p221) target = $region20
        $region19: #{tpu_custom_call.1} parent=11 // pred_region
          _
        $region20: #{tpu_custom_call.1} parent=11 // pred_fallthru
          _
        // Predicated region
        $region21: #{tpu_custom_call.1} parent=11 // pred_check
          %p224 = pneg %p88
        $region22: #{tpu_custom_call.1} parent=11 // pred_check_branch
          %226 = sbr.rel (%p224) target = $region24
        $region23: #{tpu_custom_call.1} parent=11 // pred_region
          _
        $region24: #{tpu_custom_call.1} parent=11 // pred_fallthru
          _
        // Predicated region
        $region25: #{tpu_custom_call.1} parent=11 // pred_check
          %p227 = pneg %p109
        $region26: #{tpu_custom_call.1} parent=11 // pred_check_branch
          %229 = sbr.rel (%p227) target = $region28
        $region27: #{tpu_custom_call.1} parent=11 // pred_region
          _
        $region28: #{tpu_custom_call.1} parent=11 // pred_fallthru
          _
        // Predicated region
        $region29: #{tpu_custom_call.1} parent=11 // pred_check
          %p230 = pneg %p130
        $region30: #{tpu_custom_call.1} parent=11 // pred_check_branch
          %232 = sbr.rel (%p230) target = $region32
        $region31: #{tpu_custom_call.1} parent=11 // pred_region
          _
        $region32: #{tpu_custom_call.1} parent=11 // pred_fallthru
          _
        // Predicated region
        $region33: #{tpu_custom_call.1} parent=11 // pred_check
          %p233 = pneg %p151
        $region34: #{tpu_custom_call.1} parent=11 // pred_check_branch
          %235 = sbr.rel (%p233) target = $region36
        $region35: #{tpu_custom_call.1} parent=11 // pred_region
          _
        $region36: #{tpu_custom_call.1} parent=11 // pred_fallthru
          _
      $region12: #{tpu_custom_call.1} parent=5 // pred_fallthru
        _
      %p236 = scmp.lt.s32.totalorder %s25, 2
      // Predicated region
      $region37: #{tpu_custom_call.1} parent=5 // pred_check
        %p237 = pneg %p236
      $region38: #{tpu_custom_call.1} parent=5 // pred_check_branch
        %239 = sbr.rel (%p237) target = $region40
      $region39: #{tpu_custom_call.1} parent=5 // pred_region
        _
      $region40: #{tpu_custom_call.1} parent=5 // pred_fallthru
        _
      %p240 = scmp.le.s32.totalorder 1, %s25
      %p241 = scmp.lt.s32.totalorder %s25, 3
      %p242 = pnand %p240, %p241
      %p243 = pneg %p242
      // Predicated region
      $region41: #{tpu_custom_call.1} parent=5 // pred_check
        _
      $region42: #{tpu_custom_call.1} parent=5 // pred_check_branch
        %245 = sbr.rel (%p242) target = $region44
      $region43: #{tpu_custom_call.1} parent=5 // pred_region
        %s246 = ssub.s32 %s25, 1
        %p247 = pneg %p46
        %p248 = pneg %p43
        %p249 = pneg %p67
        %p250 = pneg %p64
        %p251 = pneg %p88
        %p252 = pneg %p85
        %p253 = pneg %p109
        %p254 = pneg %p106
        %p255 = pneg %p130
        %p256 = pneg %p127
        %p257 = pneg %p151
        %p258 = pneg %p148
        %p259 = pneg %p177
        %p260 = pneg %p174
        %p261 = scmp.lt.s32.totalorder %s30, 1
        %s262 = scalar_select %p261, %s30, 1
        %s263 = scalar_lea.vmem %s8, %s262
        %p264 = pneg %p203
        %p265 = pneg %p200
        %s266 = sand.u32 %s190, 1
        %s267 = scalar_lea.sflag [#allocation7], %s266
        %s268 = sand.u32 %s190, 1
        %s269 = scalar_lea.vmem [#allocation6], %s268
        %p270 = scmp.lt.s32.totalorder %s30, 1
        %s271 = scalar_select %p270, %s30, 1
        %s272 = scalar_lea.vmem %s8, %s271
        %s274 = smul.u32 %s30, 128
        %s275 = sld [smem:[#allocation5 + %s274]]
        %s276 = scalar_lea.vmem %s1, %s275
        %p278 = scmp.lt.u32.totalorder 1, 8
        %p279 = pneg %p278
        // Predicated region
        $region45: #{tpu_custom_call.1} parent=43 // pred_check
          _
        $region46: #{tpu_custom_call.1} parent=43 // pred_check_branch
          %281 = sbr.rel (%p278) target = $region48
        $region47: #{tpu_custom_call.1} parent=43 // pred_region
          %s296 = sand.u32 1, 7
          %p297 = scmp.eq.s32.totalorder %s296, 0
          %p298 = pneg %p297
          // Predicated region
          $region60: #{tpu_custom_call.1} parent=47 // pred_check
            _
          $region61: #{tpu_custom_call.1} parent=47 // pred_check_branch
            %300 = sbr.rel (%p297) target = $region63
          $region62: #{tpu_custom_call.1} parent=47 // pred_region
            %s301 = sand.u32 1, 7
            %s302 = ssub.s32 1, %s301
            %s303 = scalar_lea.vmem %s276, %s302
            %s304 = ssub.s32 1, %s301
            %s305 = scalar_lea.vmem [#allocation2], %s304
            %s306 = sshllo.u32 0, %s301
            loop: start=0, step=1, limit=1
            $region64: #{tpu_custom_call.1} parent=62 // loop_pre_header
              _
            $region65: #{tpu_custom_call.1} parent=62 // loop_header
              %s308 = sphi 0, %s312
              %p309 = scmp.ge.s32.totalorder %s308, 1
              %s313 = sphi %s303, %s303
              %s314 = sphi %s305, %s305
            $region66: #{tpu_custom_call.1} parent=62 // loop_header_branch
              %311 = sbr.rel (%p309) target = $region70
            $region67: #{tpu_custom_call.1} parent=62 // loop_body
              %v315 = vld [vmem:[%s313] sm:%s306]
              %316 = vst [vmem:[%s314] sm:%s306] %v315
            $region68: #{tpu_custom_call.1} parent=62 // loop_footer
              %s312 = sadd.s32 1, %s308
            $region69: #{tpu_custom_call.1} parent=62 // loop_footer_branch
              %307 = sbr.rel target = $region65
            $region70: #{tpu_custom_call.1} parent=62 // loop_exit
              _
          $region63: #{tpu_custom_call.1} parent=47 // pred_fallthru
            _
        $region48: #{tpu_custom_call.1} parent=43 // pred_fallthru
          _
        // Predicated region
        $region49: #{tpu_custom_call.1} parent=43 // pred_check
          %p282 = pneg %p278
        $region50: #{tpu_custom_call.1} parent=43 // pred_check_branch
          %284 = sbr.rel (%p282) target = $region52
        $region51: #{tpu_custom_call.1} parent=43 // pred_region
          %s285 = sshllo.u32 0, 1
          loop: start=0, step=1, limit=1
          $region53: #{tpu_custom_call.1} parent=51 // loop_pre_header
            _
          $region54: #{tpu_custom_call.1} parent=51 // loop_header
            %s287 = sphi 0, %s291
            %p288 = scmp.ge.s32.totalorder %s287, 1
            %s292 = sphi %s276, %s276
            %s293 = sphi [#allocation2], [#allocation2]
          $region55: #{tpu_custom_call.1} parent=51 // loop_header_branch
            %290 = sbr.rel (%p288) target = $region59
          $region56: #{tpu_custom_call.1} parent=51 // loop_body
            %v294 = vld [vmem:[%s292] sm:%s285]
            %295 = vst [vmem:[%s293] sm:%s285] %v294
          $region57: #{tpu_custom_call.1} parent=51 // loop_footer
            %s291 = sadd.s32 1, %s287
          $region58: #{tpu_custom_call.1} parent=51 // loop_footer_branch
            %286 = sbr.rel target = $region54
          $region59: #{tpu_custom_call.1} parent=51 // loop_exit
            _
        $region52: #{tpu_custom_call.1} parent=43 // pred_fallthru
          _
        // Predicated region
        $region71: #{tpu_custom_call.1} parent=43 // pred_check
          _
        $region72: #{tpu_custom_call.1} parent=43 // pred_check_branch
          %319 = sbr.rel (0) target = $region74
        $region73: #{tpu_custom_call.1} parent=43 // pred_region
          %320 = vsyncadd [#allocation3], 16
        $region74: #{tpu_custom_call.1} parent=43 // pred_fallthru
          _
        %s321 = sadd.s32 %s274, 1
        %s322 = sld [smem:[#allocation5 + %s321]]
        %s323 = scalar_lea.vmem %s1, %s322
        %s324 = scalar_lea.vmem [#allocation2], 1
        %s325 = scalar_lea.sflag [#allocation3], 1
        %p327 = scmp.lt.u32.totalorder 1, 8
        %p328 = pneg %p327
        // Predicated region
        $region75: #{tpu_custom_call.1} parent=43 // pred_check
          _
        $region76: #{tpu_custom_call.1} parent=43 // pred_check_branch
          %330 = sbr.rel (%p327) target = $region78
        $region77: #{tpu_custom_call.1} parent=43 // pred_region
          %s345 = sand.u32 1, 7
          %p346 = scmp.eq.s32.totalorder %s345, 0
          %p347 = pneg %p346
          // Predicated region
          $region90: #{tpu_custom_call.1} parent=77 // pred_check
            _
          $region91: #{tpu_custom_call.1} parent=77 // pred_check_branch
            %349 = sbr.rel (%p346) target = $region93
          $region92: #{tpu_custom_call.1} parent=77 // pred_region
            %s350 = sand.u32 1, 7
            %s351 = ssub.s32 1, %s350
            %s352 = scalar_lea.vmem %s323, %s351
            %s353 = ssub.s32 1, %s350
            %s354 = scalar_lea.vmem %s324, %s353 [#allocation2]
            %s355 = sshllo.u32 0, %s350
            loop: start=0, step=1, limit=1
            $region94: #{tpu_custom_call.1} parent=92 // loop_pre_header
              _
            $region95: #{tpu_custom_call.1} parent=92 // loop_header
              %s357 = sphi 0, %s361
              %p358 = scmp.ge.s32.totalorder %s357, 1
              %s362 = sphi %s352, %s352
              %s363 = sphi %s354, %s354
            $region96: #{tpu_custom_call.1} parent=92 // loop_header_branch
              %360 = sbr.rel (%p358) target = $region100
            $region97: #{tpu_custom_call.1} parent=92 // loop_body
              %v364 = vld [vmem:[%s362] sm:%s355]
              %365 = vst [vmem:[%s363] sm:%s355] %v364
            $region98: #{tpu_custom_call.1} parent=92 // loop_footer
              %s361 = sadd.s32 1, %s357
            $region99: #{tpu_custom_call.1} parent=92 // loop_footer_branch
              %356 = sbr.rel target = $region95
            $region100: #{tpu_custom_call.1} parent=92 // loop_exit
              _
          $region93: #{tpu_custom_call.1} parent=77 // pred_fallthru
            _
        $region78: #{tpu_custom_call.1} parent=43 // pred_fallthru
          _
        // Predicated region
        $region79: #{tpu_custom_call.1} parent=43 // pred_check
          %p331 = pneg %p327
        $region80: #{tpu_custom_call.1} parent=43 // pred_check_branch
          %333 = sbr.rel (%p331) target = $region82
        $region81: #{tpu_custom_call.1} parent=43 // pred_region
          %s334 = sshllo.u32 0, 1
          loop: start=0, step=1, limit=1
          $region83: #{tpu_custom_call.1} parent=81 // loop_pre_header
            _
          $region84: #{tpu_custom_call.1} parent=81 // loop_header
            %s336 = sphi 0, %s340
            %p337 = scmp.ge.s32.totalorder %s336, 1
            %s341 = sphi %s323, %s323
            %s342 = sphi %s324, %s324
          $region85: #{tpu_custom_call.1} parent=81 // loop_header_branch
            %339 = sbr.rel (%p337) target = $region89
          $region86: #{tpu_custom_call.1} parent=81 // loop_body
            %v343 = vld [vmem:[%s341] sm:%s334]
            %344 = vst [vmem:[%s342] sm:%s334] %v343
          $region87: #{tpu_custom_call.1} parent=81 // loop_footer
            %s340 = sadd.s32 1, %s336
          $region88: #{tpu_custom_call.1} parent=81 // loop_footer_branch
            %335 = sbr.rel target = $region84
          $region89: #{tpu_custom_call.1} parent=81 // loop_exit
            _
        $region82: #{tpu_custom_call.1} parent=43 // pred_fallthru
          _
        // Predicated region
        $region101: #{tpu_custom_call.1} parent=43 // pred_check
          _
        $region102: #{tpu_custom_call.1} parent=43 // pred_check_branch
          %368 = sbr.rel (0) target = $region104
        $region103: #{tpu_custom_call.1} parent=43 // pred_region
          %369 = vsyncadd %s325, 16
        $region104: #{tpu_custom_call.1} parent=43 // pred_fallthru
          _
        %s370 = sadd.s32 %s274, 2
        %s371 = sld [smem:[#allocation5 + %s370]]
        %s372 = scalar_lea.vmem %s1, %s371
        %s373 = scalar_lea.vmem [#allocation2], 2
        %s374 = scalar_lea.sflag [#allocation3], 2
        %p376 = scmp.lt.u32.totalorder 1, 8
        %p377 = pneg %p376
        // Predicated region
        $region105: #{tpu_custom_call.1} parent=43 // pred_check
          _
        $region106: #{tpu_custom_call.1} parent=43 // pred_check_branch
          %379 = sbr.rel (%p376) target = $region108
        $region107: #{tpu_custom_call.1} parent=43 // pred_region
          %s394 = sand.u32 1, 7
          %p395 = scmp.eq.s32.totalorder %s394, 0
          %p396 = pneg %p395
          // Predicated region
          $region120: #{tpu_custom_call.1} parent=107 // pred_check
            _
          $region121: #{tpu_custom_call.1} parent=107 // pred_check_branch
            %398 = sbr.rel (%p395) target = $region123
          $region122: #{tpu_custom_call.1} parent=107 // pred_region
            %s399 = sand.u32 1, 7
            %s400 = ssub.s32 1, %s399
            %s401 = scalar_lea.vmem %s372, %s400
            %s402 = ssub.s32 1, %s399
            %s403 = scalar_lea.vmem %s373, %s402 [#allocation2]
            %s404 = sshllo.u32 0, %s399
            loop: start=0, step=1, limit=1
            $region124: #{tpu_custom_call.1} parent=122 // loop_pre_header
              _
            $region125: #{tpu_custom_call.1} parent=122 // loop_header
              %s406 = sphi 0, %s410
              %p407 = scmp.ge.s32.totalorder %s406, 1
              %s411 = sphi %s401, %s401
              %s412 = sphi %s403, %s403
            $region126: #{tpu_custom_call.1} parent=122 // loop_header_branch
              %409 = sbr.rel (%p407) target = $region130
            $region127: #{tpu_custom_call.1} parent=122 // loop_body
              %v413 = vld [vmem:[%s411] sm:%s404]
              %414 = vst [vmem:[%s412] sm:%s404] %v413
            $region128: #{tpu_custom_call.1} parent=122 // loop_footer
              %s410 = sadd.s32 1, %s406
            $region129: #{tpu_custom_call.1} parent=122 // loop_footer_branch
              %405 = sbr.rel target = $region125
            $region130: #{tpu_custom_call.1} parent=122 // loop_exit
              _
          $region123: #{tpu_custom_call.1} parent=107 // pred_fallthru
            _
        $region108: #{tpu_custom_call.1} parent=43 // pred_fallthru
          _
        // Predicated region
        $region109: #{tpu_custom_call.1} parent=43 // pred_check
          %p380 = pneg %p376
        $region110: #{tpu_custom_call.1} parent=43 // pred_check_branch
          %382 = sbr.rel (%p380) target = $region112
        $region111: #{tpu_custom_call.1} parent=43 // pred_region
          %s383 = sshllo.u32 0, 1
          loop: start=0, step=1, limit=1
          $region113: #{tpu_custom_call.1} parent=111 // loop_pre_header
            _
          $region114: #{tpu_custom_call.1} parent=111 // loop_header
            %s385 = sphi 0, %s389
            %p386 = scmp.ge.s32.totalorder %s385, 1
            %s390 = sphi %s372, %s372
            %s391 = sphi %s373, %s373
          $region115: #{tpu_custom_call.1} parent=111 // loop_header_branch
            %388 = sbr.rel (%p386) target = $region119
          $region116: #{tpu_custom_call.1} parent=111 // loop_body
            %v392 = vld [vmem:[%s390] sm:%s383]
            %393 = vst [vmem:[%s391] sm:%s383] %v392
          $region117: #{tpu_custom_call.1} parent=111 // loop_footer
            %s389 = sadd.s32 1, %s385
          $region118: #{tpu_custom_call.1} parent=111 // loop_footer_branch
            %384 = sbr.rel target = $region114
          $region119: #{tpu_custom_call.1} parent=111 // loop_exit
            _
        $region112: #{tpu_custom_call.1} parent=43 // pred_fallthru
          _
        // Predicated region
        $region131: #{tpu_custom_call.1} parent=43 // pred_check
          _
        $region132: #{tpu_custom_call.1} parent=43 // pred_check_branch
          %417 = sbr.rel (0) target = $region134
        $region133: #{tpu_custom_call.1} parent=43 // pred_region
          %418 = vsyncadd %s374, 16
        $region134: #{tpu_custom_call.1} parent=43 // pred_fallthru
          _
        %s419 = sadd.s32 %s274, 3
        %s420 = sld [smem:[#allocation5 + %s419]]
        %s421 = scalar_lea.vmem %s1, %s420
        %s422 = scalar_lea.vmem [#allocation2], 3
        %s423 = scalar_lea.sflag [#allocation3], 3
        %p425 = scmp.lt.u32.totalorder 1, 8
        %p426 = pneg %p425
        // Predicated region
        $region135: #{tpu_custom_call.1} parent=43 // pred_check
          _
        $region136: #{tpu_custom_call.1} parent=43 // pred_check_branch
          %428 = sbr.rel (%p425) target = $region138
        $region137: #{tpu_custom_call.1} parent=43 // pred_region
          %s443 = sand.u32 1, 7
          %p444 = scmp.eq.s32.totalorder %s443, 0
          %p445 = pneg %p444
          // Predicated region
          $region150: #{tpu_custom_call.1} parent=137 // pred_check
            _
          $region151: #{tpu_custom_call.1} parent=137 // pred_check_branch
            %447 = sbr.rel (%p444) target = $region153
          $region152: #{tpu_custom_call.1} parent=137 // pred_region
            %s448 = sand.u32 1, 7
            %s449 = ssub.s32 1, %s448
            %s450 = scalar_lea.vmem %s421, %s449
            %s451 = ssub.s32 1, %s448
            %s452 = scalar_lea.vmem %s422, %s451 [#allocation2]
            %s453 = sshllo.u32 0, %s448
            loop: start=0, step=1, limit=1
            $region154: #{tpu_custom_call.1} parent=152 // loop_pre_header
              _
            $region155: #{tpu_custom_call.1} parent=152 // loop_header
              %s455 = sphi 0, %s459
              %p456 = scmp.ge.s32.totalorder %s455, 1
              %s460 = sphi %s450, %s450
              %s461 = sphi %s452, %s452
            $region156: #{tpu_custom_call.1} parent=152 // loop_header_branch
              %458 = sbr.rel (%p456) target = $region160
            $region157: #{tpu_custom_call.1} parent=152 // loop_body
              %v462 = vld [vmem:[%s460] sm:%s453]
              %463 = vst [vmem:[%s461] sm:%s453] %v462
            $region158: #{tpu_custom_call.1} parent=152 // loop_footer
              %s459 = sadd.s32 1, %s455
            $region159: #{tpu_custom_call.1} parent=152 // loop_footer_branch
              %454 = sbr.rel target = $region155
            $region160: #{tpu_custom_call.1} parent=152 // loop_exit
              _
          $region153: #{tpu_custom_call.1} parent=137 // pred_fallthru
            _
        $region138: #{tpu_custom_call.1} parent=43 // pred_fallthru
          _
        // Predicated region
        $region139: #{tpu_custom_call.1} parent=43 // pred_check
          %p429 = pneg %p425
        $region140: #{tpu_custom_call.1} parent=43 // pred_check_branch
          %431 = sbr.rel (%p429) target = $region142
        $region141: #{tpu_custom_call.1} parent=43 // pred_region
          %s432 = sshllo.u32 0, 1
          loop: start=0, step=1, limit=1
          $region143: #{tpu_custom_call.1} parent=141 // loop_pre_header
            _
          $region144: #{tpu_custom_call.1} parent=141 // loop_header
            %s434 = sphi 0, %s438
            %p435 = scmp.ge.s32.totalorder %s434, 1
            %s439 = sphi %s421, %s421
            %s440 = sphi %s422, %s422
          $region145: #{tpu_custom_call.1} parent=141 // loop_header_branch
            %437 = sbr.rel (%p435) target = $region149
          $region146: #{tpu_custom_call.1} parent=141 // loop_body
            %v441 = vld [vmem:[%s439] sm:%s432]
            %442 = vst [vmem:[%s440] sm:%s432] %v441
          $region147: #{tpu_custom_call.1} parent=141 // loop_footer
            %s438 = sadd.s32 1, %s434
          $region148: #{tpu_custom_call.1} parent=141 // loop_footer_branch
            %433 = sbr.rel target = $region144
          $region149: #{tpu_custom_call.1} parent=141 // loop_exit
            _
        $region142: #{tpu_custom_call.1} parent=43 // pred_fallthru
          _
        // Predicated region
        $region161: #{tpu_custom_call.1} parent=43 // pred_check
          _
        $region162: #{tpu_custom_call.1} parent=43 // pred_check_branch
          %466 = sbr.rel (0) target = $region164
        $region163: #{tpu_custom_call.1} parent=43 // pred_region
          %467 = vsyncadd %s423, 16
        $region164: #{tpu_custom_call.1} parent=43 // pred_fallthru
          _
        %s468 = sadd.s32 %s274, 4
        %s469 = sld [smem:[#allocation5 + %s468]]
        %s470 = scalar_lea.vmem %s1, %s469
        %s471 = scalar_lea.vmem [#allocation2], 4
        %s472 = scalar_lea.sflag [#allocation3], 4
        %p474 = scmp.lt.u32.totalorder 1, 8
        %p475 = pneg %p474
        // Predicated region
        $region165: #{tpu_custom_call.1} parent=43 // pred_check
          _
        $region166: #{tpu_custom_call.1} parent=43 // pred_check_branch
          %477 = sbr.rel (%p474) target = $region168
        $region167: #{tpu_custom_call.1} parent=43 // pred_region
          %s492 = sand.u32 1, 7
          %p493 = scmp.eq.s32.totalorder %s492, 0
          %p494 = pneg %p493
          // Predicated region
          $region180: #{tpu_custom_call.1} parent=167 // pred_check
            _
          $region181: #{tpu_custom_call.1} parent=167 // pred_check_branch
            %496 = sbr.rel (%p493) target = $region183
          $region182: #{tpu_custom_call.1} parent=167 // pred_region
            %s497 = sand.u32 1, 7
            %s498 = ssub.s32 1, %s497
            %s499 = scalar_lea.vmem %s470, %s498
            %s500 = ssub.s32 1, %s497
            %s501 = scalar_lea.vmem %s471, %s500 [#allocation2]
            %s502 = sshllo.u32 0, %s497
            loop: start=0, step=1, limit=1
            $region184: #{tpu_custom_call.1} parent=182 // loop_pre_header
              _
            $region185: #{tpu_custom_call.1} parent=182 // loop_header
              %s504 = sphi 0, %s508
              %p505 = scmp.ge.s32.totalorder %s504, 1
              %s509 = sphi %s499, %s499
              %s510 = sphi %s501, %s501
            $region186: #{tpu_custom_call.1} parent=182 // loop_header_branch
              %507 = sbr.rel (%p505) target = $region190
            $region187: #{tpu_custom_call.1} parent=182 // loop_body
              %v511 = vld [vmem:[%s509] sm:%s502]
              %512 = vst [vmem:[%s510] sm:%s502] %v511
            $region188: #{tpu_custom_call.1} parent=182 // loop_footer
              %s508 = sadd.s32 1, %s504
            $region189: #{tpu_custom_call.1} parent=182 // loop_footer_branch
              %503 = sbr.rel target = $region185
            $region190: #{tpu_custom_call.1} parent=182 // loop_exit
              _
          $region183: #{tpu_custom_call.1} parent=167 // pred_fallthru
            _
        $region168: #{tpu_custom_call.1} parent=43 // pred_fallthru
          _
        // Predicated region
        $region169: #{tpu_custom_call.1} parent=43 // pred_check
          %p478 = pneg %p474
        $region170: #{tpu_custom_call.1} parent=43 // pred_check_branch
          %480 = sbr.rel (%p478) target = $region172
        $region171: #{tpu_custom_call.1} parent=43 // pred_region
          %s481 = sshllo.u32 0, 1
          loop: start=0, step=1, limit=1
          $region173: #{tpu_custom_call.1} parent=171 // loop_pre_header
            _
          $region174: #{tpu_custom_call.1} parent=171 // loop_header
            %s483 = sphi 0, %s487
            %p484 = scmp.ge.s32.totalorder %s483, 1
            %s488 = sphi %s470, %s470
            %s489 = sphi %s471, %s471
          $region175: #{tpu_custom_call.1} parent=171 // loop_header_branch
            %486 = sbr.rel (%p484) target = $region179
          $region176: #{tpu_custom_call.1} parent=171 // loop_body
            %v490 = vld [vmem:[%s488] sm:%s481]
            %491 = vst [vmem:[%s489] sm:%s481] %v490
          $region177: #{tpu_custom_call.1} parent=171 // loop_footer
            %s487 = sadd.s32 1, %s483
          $region178: #{tpu_custom_call.1} parent=171 // loop_footer_branch
            %482 = sbr.rel target = $region174
          $region179: #{tpu_custom_call.1} parent=171 // loop_exit
            _
        $region172: #{tpu_custom_call.1} parent=43 // pred_fallthru
          _
        // Predicated region
        $region191: #{tpu_custom_call.1} parent=43 // pred_check
          _
        $region192: #{tpu_custom_call.1} parent=43 // pred_check_branch
          %515 = sbr.rel (0) target = $region194
        $region193: #{tpu_custom_call.1} parent=43 // pred_region
          %516 = vsyncadd %s472, 16
        $region194: #{tpu_custom_call.1} parent=43 // pred_fallthru
          _
        %s517 = sadd.s32 %s274, 5
        %s518 = sld [smem:[#allocation5 + %s517]]
        %s519 = scalar_lea.vmem %s1, %s518
        %s520 = scalar_lea.vmem [#allocation2], 5
        %s521 = scalar_lea.sflag [#allocation3], 5
        %p523 = scmp.lt.u32.totalorder 1, 8
        %p524 = pneg %p523
        // Predicated region
        $region195: #{tpu_custom_call.1} parent=43 // pred_check
          _
        $region196: #{tpu_custom_call.1} parent=43 // pred_check_branch
          %526 = sbr.rel (%p523) target = $region198
        $region197: #{tpu_custom_call.1} parent=43 // pred_region
          %s541 = sand.u32 1, 7
          %p542 = scmp.eq.s32.totalorder %s541, 0
          %p543 = pneg %p542
          // Predicated region
          $region210: #{tpu_custom_call.1} parent=197 // pred_check
            _
          $region211: #{tpu_custom_call.1} parent=197 // pred_check_branch
            %545 = sbr.rel (%p542) target = $region213
          $region212: #{tpu_custom_call.1} parent=197 // pred_region
            %s546 = sand.u32 1, 7
            %s547 = ssub.s32 1, %s546
            %s548 = scalar_lea.vmem %s519, %s547
            %s549 = ssub.s32 1, %s546
            %s550 = scalar_lea.vmem %s520, %s549 [#allocation2]
            %s551 = sshllo.u32 0, %s546
            loop: start=0, step=1, limit=1
            $region214: #{tpu_custom_call.1} parent=212 // loop_pre_header
              _
            $region215: #{tpu_custom_call.1} parent=212 // loop_header
              %s553 = sphi 0, %s557
              %p554 = scmp.ge.s32.totalorder %s553, 1
              %s558 = sphi %s548, %s548
              %s559 = sphi %s550, %s550
            $region216: #{tpu_custom_call.1} parent=212 // loop_header_branch
              %556 = sbr.rel (%p554) target = $region220
            $region217: #{tpu_custom_call.1} parent=212 // loop_body
              %v560 = vld [vmem:[%s558] sm:%s551]
              %561 = vst [vmem:[%s559] sm:%s551] %v560
            $region218: #{tpu_custom_call.1} parent=212 // loop_footer
              %s557 = sadd.s32 1, %s553
            $region219: #{tpu_custom_call.1} parent=212 // loop_footer_branch
              %552 = sbr.rel target = $region215
            $region220: #{tpu_custom_call.1} parent=212 // loop_exit
              _
          $region213: #{tpu_custom_call.1} parent=197 // pred_fallthru
            _
        $region198: #{tpu_custom_call.1} parent=43 // pred_fallthru
          _
        // Predicated region
        $region199: #{tpu_custom_call.1} parent=43 // pred_check
          %p527 = pneg %p523
        $region200: #{tpu_custom_call.1} parent=43 // pred_check_branch
          %529 = sbr.rel (%p527) target = $region202
        $region201: #{tpu_custom_call.1} parent=43 // pred_region
          %s530 = sshllo.u32 0, 1
          loop: start=0, step=1, limit=1
          $region203: #{tpu_custom_call.1} parent=201 // loop_pre_header
            _
          $region204: #{tpu_custom_call.1} parent=201 // loop_header
            %s532 = sphi 0, %s536
            %p533 = scmp.ge.s32.totalorder %s532, 1
            %s537 = sphi %s519, %s519
            %s538 = sphi %s520, %s520
          $region205: #{tpu_custom_call.1} parent=201 // loop_header_branch
            %535 = sbr.rel (%p533) target = $region209
          $region206: #{tpu_custom_call.1} parent=201 // loop_body
            %v539 = vld [vmem:[%s537] sm:%s530]
            %540 = vst [vmem:[%s538] sm:%s530] %v539
          $region207: #{tpu_custom_call.1} parent=201 // loop_footer
            %s536 = sadd.s32 1, %s532
          $region208: #{tpu_custom_call.1} parent=201 // loop_footer_branch
            %531 = sbr.rel target = $region204
          $region209: #{tpu_custom_call.1} parent=201 // loop_exit
            _
        $region202: #{tpu_custom_call.1} parent=43 // pred_fallthru
          _
        // Predicated region
        $region221: #{tpu_custom_call.1} parent=43 // pred_check
          _
        $region222: #{tpu_custom_call.1} parent=43 // pred_check_branch
          %564 = sbr.rel (0) target = $region224
        $region223: #{tpu_custom_call.1} parent=43 // pred_region
          %565 = vsyncadd %s521, 16
        $region224: #{tpu_custom_call.1} parent=43 // pred_fallthru
          _
        %s566 = sadd.s32 %s274, 6
        %s567 = sld [smem:[#allocation5 + %s566]]
        %s568 = scalar_lea.vmem %s1, %s567
        %s569 = scalar_lea.vmem [#allocation2], 6
        %s570 = scalar_lea.sflag [#allocation3], 6
        %p572 = scmp.lt.u32.totalorder 1, 8
        %p573 = pneg %p572
        // Predicated region
        $region225: #{tpu_custom_call.1} parent=43 // pred_check
          _
        $region226: #{tpu_custom_call.1} parent=43 // pred_check_branch
          %575 = sbr.rel (%p572) target = $region228
        $region227: #{tpu_custom_call.1} parent=43 // pred_region
          %s590 = sand.u32 1, 7
          %p591 = scmp.eq.s32.totalorder %s590, 0
          %p592 = pneg %p591
          // Predicated region
          $region240: #{tpu_custom_call.1} parent=227 // pred_check
            _
          $region241: #{tpu_custom_call.1} parent=227 // pred_check_branch
            %594 = sbr.rel (%p591) target = $region243
          $region242: #{tpu_custom_call.1} parent=227 // pred_region
            %s595 = sand.u32 1, 7
            %s596 = ssub.s32 1, %s595
            %s597 = scalar_lea.vmem %s568, %s596
            %s598 = ssub.s32 1, %s595
            %s599 = scalar_lea.vmem %s569, %s598 [#allocation2]
            %s600 = sshllo.u32 0, %s595
            loop: start=0, step=1, limit=1
            $region244: #{tpu_custom_call.1} parent=242 // loop_pre_header
              _
            $region245: #{tpu_custom_call.1} parent=242 // loop_header
              %s602 = sphi 0, %s606
              %p603 = scmp.ge.s32.totalorder %s602, 1
              %s607 = sphi %s597, %s597
              %s608 = sphi %s599, %s599
            $region246: #{tpu_custom_call.1} parent=242 // loop_header_branch
              %605 = sbr.rel (%p603) target = $region250
            $region247: #{tpu_custom_call.1} parent=242 // loop_body
              %v609 = vld [vmem:[%s607] sm:%s600]
              %610 = vst [vmem:[%s608] sm:%s600] %v609
            $region248: #{tpu_custom_call.1} parent=242 // loop_footer
              %s606 = sadd.s32 1, %s602
            $region249: #{tpu_custom_call.1} parent=242 // loop_footer_branch
              %601 = sbr.rel target = $region245
            $region250: #{tpu_custom_call.1} parent=242 // loop_exit
              _
          $region243: #{tpu_custom_call.1} parent=227 // pred_fallthru
            _
        $region228: #{tpu_custom_call.1} parent=43 // pred_fallthru
          _
        // Predicated region
        $region229: #{tpu_custom_call.1} parent=43 // pred_check
          %p576 = pneg %p572
        $region230: #{tpu_custom_call.1} parent=43 // pred_check_branch
          %578 = sbr.rel (%p576) target = $region232
        $region231: #{tpu_custom_call.1} parent=43 // pred_region
          %s579 = sshllo.u32 0, 1
          loop: start=0, step=1, limit=1
          $region233: #{tpu_custom_call.1} parent=231 // loop_pre_header
            _
          $region234: #{tpu_custom_call.1} parent=231 // loop_header
            %s581 = sphi 0, %s585
            %p582 = scmp.ge.s32.totalorder %s581, 1
            %s586 = sphi %s568, %s568
            %s587 = sphi %s569, %s569
          $region235: #{tpu_custom_call.1} parent=231 // loop_header_branch
            %584 = sbr.rel (%p582) target = $region239
          $region236: #{tpu_custom_call.1} parent=231 // loop_body
            %v588 = vld [vmem:[%s586] sm:%s579]
            %589 = vst [vmem:[%s587] sm:%s579] %v588
          $region237: #{tpu_custom_call.1} parent=231 // loop_footer
            %s585 = sadd.s32 1, %s581
          $region238: #{tpu_custom_call.1} parent=231 // loop_footer_branch
            %580 = sbr.rel target = $region234
          $region239: #{tpu_custom_call.1} parent=231 // loop_exit
            _
        $region232: #{tpu_custom_call.1} parent=43 // pred_fallthru
          _
        // Predicated region
        $region251: #{tpu_custom_call.1} parent=43 // pred_check
          _
        $region252: #{tpu_custom_call.1} parent=43 // pred_check_branch
          %613 = sbr.rel (0) target = $region254
        $region253: #{tpu_custom_call.1} parent=43 // pred_region
          %614 = vsyncadd %s570, 16
        $region254: #{tpu_custom_call.1} parent=43 // pred_fallthru
          _
        %s615 = sadd.s32 %s274, 7
        %s616 = sld [smem:[#allocation5 + %s615]]
        %s617 = scalar_lea.vmem %s1, %s616
        %s618 = scalar_lea.vmem [#allocation2], 7
        %s619 = scalar_lea.sflag [#allocation3], 7
        %p621 = scmp.lt.u32.totalorder 1, 8
        %p622 = pneg %p621
        // Predicated region
        $region255: #{tpu_custom_call.1} parent=43 // pred_check
          _
        $region256: #{tpu_custom_call.1} parent=43 // pred_check_branch
          %624 = sbr.rel (%p621) target = $region258
        $region257: #{tpu_custom_call.1} parent=43 // pred_region
          %s639 = sand.u32 1, 7
          %p640 = scmp.eq.s32.totalorder %s639, 0
          %p641 = pneg %p640
          // Predicated region
          $region270: #{tpu_custom_call.1} parent=257 // pred_check
            _
          $region271: #{tpu_custom_call.1} parent=257 // pred_check_branch
            %643 = sbr.rel (%p640) target = $region273
          $region272: #{tpu_custom_call.1} parent=257 // pred_region
            %s644 = sand.u32 1, 7
            %s645 = ssub.s32 1, %s644
            %s646 = scalar_lea.vmem %s617, %s645
            %s647 = ssub.s32 1, %s644
            %s648 = scalar_lea.vmem %s618, %s647 [#allocation2]
            %s649 = sshllo.u32 0, %s644
            loop: start=0, step=1, limit=1
            $region274: #{tpu_custom_call.1} parent=272 // loop_pre_header
              _
            $region275: #{tpu_custom_call.1} parent=272 // loop_header
              %s651 = sphi 0, %s655
              %p652 = scmp.ge.s32.totalorder %s651, 1
              %s656 = sphi %s646, %s646
              %s657 = sphi %s648, %s648
            $region276: #{tpu_custom_call.1} parent=272 // loop_header_branch
              %654 = sbr.rel (%p652) target = $region280
            $region277: #{tpu_custom_call.1} parent=272 // loop_body
              %v658 = vld [vmem:[%s656] sm:%s649]
              %659 = vst [vmem:[%s657] sm:%s649] %v658
            $region278: #{tpu_custom_call.1} parent=272 // loop_footer
              %s655 = sadd.s32 1, %s651
            $region279: #{tpu_custom_call.1} parent=272 // loop_footer_branch
              %650 = sbr.rel target = $region275
            $region280: #{tpu_custom_call.1} parent=272 // loop_exit
              _
          $region273: #{tpu_custom_call.1} parent=257 // pred_fallthru
            _
        $region258: #{tpu_custom_call.1} parent=43 // pred_fallthru
          _
        // Predicated region
        $region259: #{tpu_custom_call.1} parent=43 // pred_check
          %p625 = pneg %p621
        $region260: #{tpu_custom_call.1} parent=43 // pred_check_branch
          %627 = sbr.rel (%p625) target = $region262
        $region261: #{tpu_custom_call.1} parent=43 // pred_region
          %s628 = sshllo.u32 0, 1
          loop: start=0, step=1, limit=1
          $region263: #{tpu_custom_call.1} parent=261 // loop_pre_header
            _
          $region264: #{tpu_custom_call.1} parent=261 // loop_header
            %s630 = sphi 0, %s634
            %p631 = scmp.ge.s32.totalorder %s630, 1
            %s635 = sphi %s617, %s617
            %s636 = sphi %s618, %s618
          $region265: #{tpu_custom_call.1} parent=261 // loop_header_branch
            %633 = sbr.rel (%p631) target = $region269
          $region266: #{tpu_custom_call.1} parent=261 // loop_body
            %v637 = vld [vmem:[%s635] sm:%s628]
            %638 = vst [vmem:[%s636] sm:%s628] %v637
          $region267: #{tpu_custom_call.1} parent=261 // loop_footer
            %s634 = sadd.s32 1, %s630
          $region268: #{tpu_custom_call.1} parent=261 // loop_footer_branch
            %629 = sbr.rel target = $region264
          $region269: #{tpu_custom_call.1} parent=261 // loop_exit
            _
        $region262: #{tpu_custom_call.1} parent=43 // pred_fallthru
          _
        // Predicated region
        $region281: #{tpu_custom_call.1} parent=43 // pred_check
          _
        $region282: #{tpu_custom_call.1} parent=43 // pred_check_branch
          %662 = sbr.rel (0) target = $region284
        $region283: #{tpu_custom_call.1} parent=43 // pred_region
          %663 = vsyncadd %s619, 16
        $region284: #{tpu_custom_call.1} parent=43 // pred_fallthru
          _
        %s664 = smul.u32 1, 1
        %s665 = sshll.u32 %s664, 4
        %666 = dma.done [#allocation3], %s665
        %s667 = sshll.u32 %s664, 4
        %668 = dma.done %s325, %s667
        %s669 = sshll.u32 %s664, 4
        %670 = dma.done %s374, %s669
        %s671 = sshll.u32 %s664, 4
        %672 = dma.done %s423, %s671
        %s673 = sshll.u32 %s664, 4
        %674 = dma.done %s472, %s673
        %s675 = sshll.u32 %s664, 4
        %676 = dma.done %s521, %s675
        %s677 = sshll.u32 %s664, 4
        %678 = dma.done %s570, %s677
        %s679 = sshll.u32 %s664, 4
        %680 = dma.done %s619, %s679
        %v681 = vld [vmem:[#allocation2] sm:$0xff]
        %v682 = vpack.c.bf16 %v681, %v681
        %v683 = vld [vmem:[%s2] sm:$0xf]
        %v684 = vld [vmem:[%s2 + $0x4] sm:$0xf]
        %v685 = vld [vmem:[%s2 + $0x8] sm:$0xf]
        %v686 = vld [vmem:[%s2 + $0xc] sm:$0xf]
        %v687 = vld [vmem:[%s4] sm:$0x1]
        %v689 = vlaneseq
        %v690 = vshrl.u32 %v689, 7
        %v691 = vsub.s32 0, %v690
        %v692 = vrot.slane %v687, %v691
        %v698 = vunpack.c.l.b16 %v683
        %v699 = vunpack.c.l.b16 %v684
        %v700 = vunpack.c.l.b16 %v685
        %v701 = vunpack.c.l.b16 %v686
        %v702 = vpack.c.b16 %v699, %v698
        %v703 = vpack.c.b16 %v701, %v700
        %vm706 = vcmask 261120
        %v708 = vsel %vm706, %v682, 0
        %710 = vmatprep.subr.bf16.mxu0 0
        %711 = vmatpush1.bf16.msra.mxu0 %v702
        %712 = vmatprep.subr.bf16.mxu0 0
        %713 = vmatpush1.bf16.msra.mxu0 %v703
        %714 = vmatprep.subr.bf16.mxu0 0
        %715 = vmatpush1.bf16.msra.mxu0 0
        %716 = vmatprep.subr.bf16.mxu0 0
        %717 = vmatpush1.bf16.msra.mxu0 0
        %718 = vmatprep.subr.bf16.mxu0 0
        %719 = vmatpush1.bf16.msra.mxu0 0
        %720 = vmatprep.subr.bf16.mxu0 0
        %721 = vmatpush1.bf16.msra.mxu0 0
        %722 = vmatprep.subr.bf16.mxu0 0
        %723 = vmatpush1.bf16.msra.mxu0 0
        %724 = vmatprep.subr.bf16.mxu0 0
        %725 = vmatpush1.bf16.msra.mxu0 0
        %726 = vmatprep.subr.bf16.mxu0 0
        %727 = vmatpush1.bf16.msra.mxu0 0
        %728 = vmatprep.subr.bf16.mxu0 0
        %729 = vmatpush1.bf16.msra.mxu0 0
        %730 = vmatprep.subr.bf16.mxu0 0
        %731 = vmatpush1.bf16.msra.mxu0 0
        %732 = vmatprep.subr.bf16.mxu0 0
        %733 = vmatpush1.bf16.msra.mxu0 0
        %734 = vmatprep.subr.bf16.mxu0 0
        %735 = vmatpush1.bf16.msra.mxu0 0
        %736 = vmatprep.subr.bf16.mxu0 0
        %737 = vmatpush1.bf16.msra.mxu0 0
        %738 = vmatprep.subr.bf16.mxu0 0
        %739 = vmatpush1.bf16.msra.mxu0 0
        %740 = vmatprep.subr.bf16.mxu0 0
        %741 = vmatpush1.bf16.msra.mxu0 0
        %742 = vmatprep.mubr.bf16.mxu0 0
        %743 = vmatmul.mubr.bf16.gmra.mrb[0].mxu0 %v708
        %v744 = vpop.f32.mrb[0].mxu0
        %v745 = vadd.f32 %v692, %v744
        %v746 = vpop.f32.mrb[0].mxu0
        %v747 = vpop.f32.mrb[0].mxu0
        %v748 = vpop.f32.mrb[0].mxu0
        %749 = vdwg.mxu0
        %v750 = vld [vmem:[%s3] sm:$0xf]
        %v751 = vld [vmem:[%s3 + $0x4] sm:$0xf]
        %v752 = vld [vmem:[%s3 + $0x8] sm:$0xf]
        %v753 = vld [vmem:[%s3 + $0xc] sm:$0xf]
        %v754 = vlaneseq
        %v755 = vand.u32 %v754, 127
        %vm756 = vcmp.lt.s32.totalorder %v755, 0
        %v757 = vsub.s32 0, %v755
        %v758 = vsel %vm756, %v757, %v755
        %v759 = vshrl.u32 %v758, 5
        %v760 = vand.u32 %v758, 31
        %v761 = vsub.s32 0, %v760
        %v762 = vsel %vm756, %v761, %v760
        %vm763 = vcmp.ne.s32.totalorder %v762, 0
        %vm764 = vcmp.lt.s32.totalorder %v762, 0
        %vm765 = vmand %vm764, %vm763
        %v766 = vadd.s32 %v762, 32
        %v767 = vsel %vm765, %v766, %v762
        %vm768 = vcmp.lt.s32.totalorder %v767, 16
        %v770 = vrot.slane %v745, 7
        %v772 = vsel %vm768, %v745, %v770
        %v777 = vunpack.c.l.b16 %v750
        %v778 = vunpack.c.l.b16 %v751
        %v779 = vunpack.c.l.b16 %v752
        %v780 = vunpack.c.l.b16 %v753
        %v781 = vpack.c.b16 %v778, %v777
        %v782 = vpack.c.b16 %v780, %v779
        %v786 = vsel %vm706, 0, 0
        %788 = vmatprep.subr.bf16.mxu0 0
        %789 = vmatpush1.bf16.msra.mxu0 %v781
        %790 = vmatprep.subr.bf16.mxu0 0
        %791 = vmatpush1.bf16.msra.mxu0 %v782
        %792 = vmatprep.subr.bf16.mxu0 0
        %793 = vmatpush1.bf16.msra.mxu0 0
        %794 = vmatprep.subr.bf16.mxu0 0
        %795 = vmatpush1.bf16.msra.mxu0 0
        %796 = vmatprep.subr.bf16.mxu0 0
        %797 = vmatpush1.bf16.msra.mxu0 0
        %798 = vmatprep.subr.bf16.mxu0 0
        %799 = vmatpush1.bf16.msra.mxu0 0
        %800 = vmatprep.subr.bf16.mxu0 0
        %801 = vmatpush1.bf16.msra.mxu0 0
        %802 = vmatprep.subr.bf16.mxu0 0
        %803 = vmatpush1.bf16.msra.mxu0 0
        %804 = vmatprep.subr.bf16.mxu0 0
        %805 = vmatpush1.bf16.msra.mxu0 0
        %806 = vmatprep.subr.bf16.mxu0 0
        %807 = vmatpush1.bf16.msra.mxu0 0
        %808 = vmatprep.subr.bf16.mxu0 0
        %809 = vmatpush1.bf16.msra.mxu0 0
        %810 = vmatprep.subr.bf16.mxu0 0
        %811 = vmatpush1.bf16.msra.mxu0 0
        %812 = vmatprep.subr.bf16.mxu0 0
        %813 = vmatpush1.bf16.msra.mxu0 0
        %814 = vmatprep.subr.bf16.mxu0 0
        %815 = vmatpush1.bf16.msra.mxu0 0
        %816 = vmatprep.subr.bf16.mxu0 0
        %817 = vmatpush1.bf16.msra.mxu0 0
        %818 = vmatprep.subr.bf16.mxu0 0
        %819 = vmatpush1.bf16.msra.mxu0 0
        %820 = vmatprep.mubr.bf16.mxu0 0
        %821 = vmatmul.mubr.bf16.gmra.mrb[0].mxu0 %v786
        %v822 = vpop.f32.mrb[0].mxu0
        %v823 = vadd.f32 0.0, %v822
        %v824 = vpop.f32.mrb[0].mxu0
        %v825 = vpop.f32.mrb[0].mxu0
        %v826 = vpop.f32.mrb[0].mxu0
        %827 = vdwg.mxu0
        %v828 = vadd.f32 %v772, %v823
        %v829 = vxor.u32 %v828, 2147483648
        %v830 = vmul.f32 %v829, 1.442695
        %v831 = vpow.pop %v830
        %v832 = vadd.f32 %v831, 1.0
        %v833 = vrcp.pop %v832
        %v834 = vmul.f32 1.0, %v833
        %v835 = vtanh.pop %v828
        %v836 = vmul.f32 %v834, 0.0
        %838 = vrot.lane.b32.xlu0 %v835, 64
        %v839 = vpop.permute.xlu0 %838
        %v841 = vmul.f32 %v834, %v839
        %843 = vrot.lane.b32.xlu0 %v841, 32
        %v844 = vpop.permute.xlu0 %843
        %v846 = vadd.f32 %v836, %v844
        %v847 = vtanh.pop %v846
        %849 = vrot.lane.b32.xlu0 %v847, 64
        %v850 = vpop.permute.xlu0 %849
        %v852 = vmul.f32 %v834, %v850
        %v853 = vrot.slane %v745, 5
        %v855 = vsel %vm768, %v745, %v853
        %v856 = vpack.c.bf16 %v852, %v852
        %858 = vrot.lane.b32.xlu0 %v856, 32
        %v859 = vpop.permute.xlu0 %858
        %v861 = vsel %vm706, %v859, 0
        %863 = vmatprep.subr.bf16.mxu0 0
        %864 = vmatpush1.bf16.msra.mxu0 %v781
        %865 = vmatprep.subr.bf16.mxu0 0
        %866 = vmatpush1.bf16.msra.mxu0 %v782
        %867 = vmatprep.subr.bf16.mxu0 0
        %868 = vmatpush1.bf16.msra.mxu0 0
        %869 = vmatprep.subr.bf16.mxu0 0
        %870 = vmatpush1.bf16.msra.mxu0 0
        %871 = vmatprep.subr.bf16.mxu0 0
        %872 = vmatpush1.bf16.msra.mxu0 0
        %873 = vmatprep.subr.bf16.mxu0 0
        %874 = vmatpush1.bf16.msra.mxu0 0
        %875 = vmatprep.subr.bf16.mxu0 0
        %876 = vmatpush1.bf16.msra.mxu0 0
        %877 = vmatprep.subr.bf16.mxu0 0
        %878 = vmatpush1.bf16.msra.mxu0 0
        %879 = vmatprep.subr.bf16.mxu0 0
        %880 = vmatpush1.bf16.msra.mxu0 0
        %881 = vmatprep.subr.bf16.mxu0 0
        %882 = vmatpush1.bf16.msra.mxu0 0
        %883 = vmatprep.subr.bf16.mxu0 0
        %884 = vmatpush1.bf16.msra.mxu0 0
        %885 = vmatprep.subr.bf16.mxu0 0
        %886 = vmatpush1.bf16.msra.mxu0 0
        %887 = vmatprep.subr.bf16.mxu0 0
        %888 = vmatpush1.bf16.msra.mxu0 0
        %889 = vmatprep.subr.bf16.mxu0 0
        %890 = vmatpush1.bf16.msra.mxu0 0
        %891 = vmatprep.subr.bf16.mxu0 0
        %892 = vmatpush1.bf16.msra.mxu0 0
        %893 = vmatprep.subr.bf16.mxu0 0
        %894 = vmatpush1.bf16.msra.mxu0 0
        %895 = vmatprep.mubr.bf16.mxu0 0
        %896 = vmatmul.mubr.bf16.gmra.mrb[0].mxu0 %v861
        %v897 = vpop.f32.mrb[0].mxu0
        %v898 = vadd.f32 0.0, %v897
        %v899 = vpop.f32.mrb[0].mxu0
        %v900 = vpop.f32.mrb[0].mxu0
        %v901 = vpop.f32.mrb[0].mxu0
        %902 = vdwg.mxu0
        %v904 = vrot.slane %v898, 7
        %v906 = vadd.f32 %v855, %v904
        %v907 = vxor.u32 %v906, 2147483648
        %v908 = vmul.f32 %v907, 1.442695
        %v909 = vpow.pop %v908
        %v910 = vadd.f32 %v909, 1.0
        %v911 = vrcp.pop %v910
        %v912 = vmul.f32 1.0, %v911
        %v913 = vtanh.pop %v906
        %v915 = vrot.slane %v846, 7
        %v917 = vmul.f32 %v912, %v915
        %919 = vrot.lane.b32.xlu0 %v913, 64
        %v920 = vpop.permute.xlu0 %919
        %v922 = vmul.f32 %v912, %v920
        %924 = vrot.lane.b32.xlu0 %v922, 32
        %v925 = vpop.permute.xlu0 %924
        %v927 = vadd.f32 %v917, %v925
        %v928 = vtanh.pop %v927
        %930 = vrot.lane.b32.xlu0 %v928, 64
        %v931 = vpop.permute.xlu0 %930
        %v933 = vmul.f32 %v912, %v931
        %v934 = vrot.slane %v745, 3
        %v936 = vsel %vm768, %v745, %v934
        %v937 = vpack.c.bf16 %v933, %v933
        %v939 = vshrl.u32 %v937, 16
        %941 = vrot.lane.b32.xlu0 %v939, 32
        %v942 = vpop.permute.xlu0 %941
        %v944 = vsel %vm706, %v942, 0
        %946 = vmatprep.subr.bf16.mxu0 0
        %947 = vmatpush1.bf16.msra.mxu0 %v781
        %948 = vmatprep.subr.bf16.mxu0 0
        %949 = vmatpush1.bf16.msra.mxu0 %v782
        %950 = vmatprep.subr.bf16.mxu0 0
        %951 = vmatpush1.bf16.msra.mxu0 0
        %952 = vmatprep.subr.bf16.mxu0 0
        %953 = vmatpush1.bf16.msra.mxu0 0
        %954 = vmatprep.subr.bf16.mxu0 0
        %955 = vmatpush1.bf16.msra.mxu0 0
        %956 = vmatprep.subr.bf16.mxu0 0
        %957 = vmatpush1.bf16.msra.mxu0 0
        %958 = vmatprep.subr.bf16.mxu0 0
        %959 = vmatpush1.bf16.msra.mxu0 0
        %960 = vmatprep.subr.bf16.mxu0 0
        %961 = vmatpush1.bf16.msra.mxu0 0
        %962 = vmatprep.subr.bf16.mxu0 0
        %963 = vmatpush1.bf16.msra.mxu0 0
        %964 = vmatprep.subr.bf16.mxu0 0
        %965 = vmatpush1.bf16.msra.mxu0 0
        %966 = vmatprep.subr.bf16.mxu0 0
        %967 = vmatpush1.bf16.msra.mxu0 0
        %968 = vmatprep.subr.bf16.mxu0 0
        %969 = vmatpush1.bf16.msra.mxu0 0
        %970 = vmatprep.subr.bf16.mxu0 0
        %971 = vmatpush1.bf16.msra.mxu0 0
        %972 = vmatprep.subr.bf16.mxu0 0
        %973 = vmatpush1.bf16.msra.mxu0 0
        %974 = vmatprep.subr.bf16.mxu0 0
        %975 = vmatpush1.bf16.msra.mxu0 0
        %976 = vmatprep.subr.bf16.mxu0 0
        %977 = vmatpush1.bf16.msra.mxu0 0
        %978 = vmatprep.mubr.bf16.mxu0 0
        %979 = vmatmul.mubr.bf16.gmra.mrb[0].mxu0 %v944
        %v980 = vpop.f32.mrb[0].mxu0
        %v981 = vadd.f32 0.0, %v980
        %v982 = vpop.f32.mrb[0].mxu0
        %v983 = vpop.f32.mrb[0].mxu0
        %v984 = vpop.f32.mrb[0].mxu0
        %985 = vdwg.mxu0
        %v987 = vrot.slane %v981, 6
        %v989 = vadd.f32 %v936, %v987
        %v990 = vxor.u32 %v989, 2147483648
        %v991 = vmul.f32 %v990, 1.442695
        %v992 = vpow.pop %v991
        %v993 = vadd.f32 %v992, 1.0
        %v994 = vrcp.pop %v993
        %v995 = vmul.f32 1.0, %v994
        %v996 = vtanh.pop %v989
        %v998 = vrot.slane %v927, 7
        %v1000 = vmul.f32 %v995, %v998
        %1002 = vrot.lane.b32.xlu0 %v996, 64
        %v1003 = vpop.permute.xlu0 %1002
        %v1005 = vmul.f32 %v995, %v1003
        %1007 = vrot.lane.b32.xlu0 %v1005, 32
        %v1008 = vpop.permute.xlu0 %1007
        %v1010 = vadd.f32 %v1000, %v1008
        %v1011 = vtanh.pop %v1010
        %1013 = vrot.lane.b32.xlu0 %v1011, 64
        %v1014 = vpop.permute.xlu0 %1013
        %v1016 = vmul.f32 %v995, %v1014
        %v1017 = vrot.slane %v745, 1
        %v1019 = vsel %vm768, %v745, %v1017
        %v1020 = vpack.c.bf16 %v1016, %v1016
        %v1022 = vrot.slane %v1020, 1
        %1023 = vrot.lane.b32.xlu0 %v1022, 32
        %v1024 = vpop.permute.xlu0 %1023
        %v1026 = vsel %vm706, %v1024, 0
        %1028 = vmatprep.subr.bf16.mxu0 0
        %1029 = vmatpush1.bf16.msra.mxu0 %v781
        %1030 = vmatprep.subr.bf16.mxu0 0
        %1031 = vmatpush1.bf16.msra.mxu0 %v782
        %1032 = vmatprep.subr.bf16.mxu0 0
        %1033 = vmatpush1.bf16.msra.mxu0 0
        %1034 = vmatprep.subr.bf16.mxu0 0
        %1035 = vmatpush1.bf16.msra.mxu0 0
        %1036 = vmatprep.subr.bf16.mxu0 0
        %1037 = vmatpush1.bf16.msra.mxu0 0
        %1038 = vmatprep.subr.bf16.mxu0 0
        %1039 = vmatpush1.bf16.msra.mxu0 0
        %1040 = vmatprep.subr.bf16.mxu0 0
        %1041 = vmatpush1.bf16.msra.mxu0 0
        %1042 = vmatprep.subr.bf16.mxu0 0
        %1043 = vmatpush1.bf16.msra.mxu0 0
        %1044 = vmatprep.subr.bf16.mxu0 0
        %1045 = vmatpush1.bf16.msra.mxu0 0
        %1046 = vmatprep.subr.bf16.mxu0 0
        %1047 = vmatpush1.bf16.msra.mxu0 0
        %1048 = vmatprep.subr.bf16.mxu0 0
        %1049 = vmatpush1.bf16.msra.mxu0 0
        %1050 = vmatprep.subr.bf16.mxu0 0
        %1051 = vmatpush1.bf16.msra.mxu0 0
        %1052 = vmatprep.subr.bf16.mxu0 0
        %1053 = vmatpush1.bf16.msra.mxu0 0
        %1054 = vmatprep.subr.bf16.mxu0 0
        %1055 = vmatpush1.bf16.msra.mxu0 0
        %1056 = vmatprep.subr.bf16.mxu0 0
        %1057 = vmatpush1.bf16.msra.mxu0 0
        %1058 = vmatprep.subr.bf16.mxu0 0
        %1059 = vmatpush1.bf16.msra.mxu0 0
        %1060 = vmatprep.mubr.bf16.mxu0 0
        %1061 = vmatmul.mubr.bf16.gmra.mrb[0].mxu0 %v1026
        %v1062 = vpop.f32.mrb[0].mxu0
        %v1063 = vadd.f32 0.0, %v1062
        %v1064 = vpop.f32.mrb[0].mxu0
        %v1065 = vpop.f32.mrb[0].mxu0
        %v1066 = vpop.f32.mrb[0].mxu0
        %1067 = vdwg.mxu0
        %v1069 = vrot.slane %v1063, 5
        %v1071 = vadd.f32 %v1019, %v1069
        %v1072 = vxor.u32 %v1071, 2147483648
        %v1073 = vmul.f32 %v1072, 1.442695
        %v1074 = vpow.pop %v1073
        %v1075 = vadd.f32 %v1074, 1.0
        %v1076 = vrcp.pop %v1075
        %v1077 = vmul.f32 1.0, %v1076
        %v1078 = vtanh.pop %v1071
        %v1080 = vrot.slane %v1010, 7
        %v1082 = vmul.f32 %v1077, %v1080
        %1084 = vrot.lane.b32.xlu0 %v1078, 64
        %v1085 = vpop.permute.xlu0 %1084
        %v1087 = vmul.f32 %v1077, %v1085
        %1089 = vrot.lane.b32.xlu0 %v1087, 32
        %v1090 = vpop.permute.xlu0 %1089
        %v1092 = vadd.f32 %v1082, %v1090
        %v1093 = vtanh.pop %v1092
        %1095 = vrot.lane.b32.xlu0 %v1093, 64
        %v1096 = vpop.permute.xlu0 %1095
        %v1098 = vmul.f32 %v1077, %v1096
        %v1099 = vpack.c.bf16 %v1098, %v1098
        %v1101 = vshrl.u32 %v1099, 16
        %v1103 = vrot.slane %v1101, 1
        %1104 = vrot.lane.b32.xlu0 %v1103, 32
        %v1105 = vpop.permute.xlu0 %1104
        %v1107 = vsel %vm706, %v1105, 0
        %1109 = vmatprep.subr.bf16.mxu0 0
        %1110 = vmatpush1.bf16.msra.mxu0 %v781
        %1111 = vmatprep.subr.bf16.mxu0 0
        %1112 = vmatpush1.bf16.msra.mxu0 %v782
        %1113 = vmatprep.subr.bf16.mxu0 0
        %1114 = vmatpush1.bf16.msra.mxu0 0
        %1115 = vmatprep.subr.bf16.mxu0 0
        %1116 = vmatpush1.bf16.msra.mxu0 0
        %1117 = vmatprep.subr.bf16.mxu0 0
        %1118 = vmatpush1.bf16.msra.mxu0 0
        %1119 = vmatprep.subr.bf16.mxu0 0
        %1120 = vmatpush1.bf16.msra.mxu0 0
        %1121 = vmatprep.subr.bf16.mxu0 0
        %1122 = vmatpush1.bf16.msra.mxu0 0
        %1123 = vmatprep.subr.bf16.mxu0 0
        %1124 = vmatpush1.bf16.msra.mxu0 0
        %1125 = vmatprep.subr.bf16.mxu0 0
        %1126 = vmatpush1.bf16.msra.mxu0 0
        %1127 = vmatprep.subr.bf16.mxu0 0
        %1128 = vmatpush1.bf16.msra.mxu0 0
        %1129 = vmatprep.subr.bf16.mxu0 0
        %1130 = vmatpush1.bf16.msra.mxu0 0
        %1131 = vmatprep.subr.bf16.mxu0 0
        %1132 = vmatpush1.bf16.msra.mxu0 0
        %1133 = vmatprep.subr.bf16.mxu0 0
        %1134 = vmatpush1.bf16.msra.mxu0 0
        %1135 = vmatprep.subr.bf16.mxu0 0
        %1136 = vmatpush1.bf16.msra.mxu0 0
        %1137 = vmatprep.subr.bf16.mxu0 0
        %1138 = vmatpush1.bf16.msra.mxu0 0
        %1139 = vmatprep.subr.bf16.mxu0 0
        %1140 = vmatpush1.bf16.msra.mxu0 0
        %1141 = vmatprep.mubr.bf16.mxu0 0
        %1142 = vmatmul.mubr.bf16.gmra.mrb[0].mxu0 %v1107
        %v1143 = vpop.f32.mrb[0].mxu0
        %v1144 = vadd.f32 0.0, %v1143
        %v1145 = vpop.f32.mrb[0].mxu0
        %v1146 = vpop.f32.mrb[0].mxu0
        %v1147 = vpop.f32.mrb[0].mxu0
        %1148 = vdwg.mxu0
        %v1150 = vrot.slane %v1144, 4
        %v1152 = vadd.f32 %v772, %v1150
        %v1153 = vxor.u32 %v1152, 2147483648
        %v1154 = vmul.f32 %v1153, 1.442695
        %v1155 = vpow.pop %v1154
        %v1156 = vadd.f32 %v1155, 1.0
        %v1157 = vrcp.pop %v1156
        %v1158 = vmul.f32 1.0, %v1157
        %v1159 = vtanh.pop %v1152
        %v1161 = vrot.slane %v1092, 7
        %v1163 = vmul.f32 %v1158, %v1161
        %1165 = vrot.lane.b32.xlu0 %v1159, 64
        %v1166 = vpop.permute.xlu0 %1165
        %v1168 = vmul.f32 %v1158, %v1166
        %1170 = vrot.lane.b32.xlu0 %v1168, 32
        %v1171 = vpop.permute.xlu0 %1170
        %v1173 = vadd.f32 %v1163, %v1171
        %v1174 = vtanh.pop %v1173
        %1176 = vrot.lane.b32.xlu0 %v1174, 64
        %v1177 = vpop.permute.xlu0 %1176
        %v1179 = vmul.f32 %v1158, %v1177
        %v1180 = vpack.c.bf16 %v1179, %v1179
        %v1182 = vrot.slane %v1180, 2
        %1183 = vrot.lane.b32.xlu0 %v1182, 32
        %v1184 = vpop.permute.xlu0 %1183
        %v1186 = vsel %vm706, %v1184, 0
        %1188 = vmatprep.subr.bf16.mxu0 0
        %1189 = vmatpush1.bf16.msra.mxu0 %v781
        %1190 = vmatprep.subr.bf16.mxu0 0
        %1191 = vmatpush1.bf16.msra.mxu0 %v782
        %1192 = vmatprep.subr.bf16.mxu0 0
        %1193 = vmatpush1.bf16.msra.mxu0 0
        %1194 = vmatprep.subr.bf16.mxu0 0
        %1195 = vmatpush1.bf16.msra.mxu0 0
        %1196 = vmatprep.subr.bf16.mxu0 0
        %1197 = vmatpush1.bf16.msra.mxu0 0
        %1198 = vmatprep.subr.bf16.mxu0 0
        %1199 = vmatpush1.bf16.msra.mxu0 0
        %1200 = vmatprep.subr.bf16.mxu0 0
        %1201 = vmatpush1.bf16.msra.mxu0 0
        %1202 = vmatprep.subr.bf16.mxu0 0
        %1203 = vmatpush1.bf16.msra.mxu0 0
        %1204 = vmatprep.subr.bf16.mxu0 0
        %1205 = vmatpush1.bf16.msra.mxu0 0
        %1206 = vmatprep.subr.bf16.mxu0 0
        %1207 = vmatpush1.bf16.msra.mxu0 0
        %1208 = vmatprep.subr.bf16.mxu0 0
        %1209 = vmatpush1.bf16.msra.mxu0 0
        %1210 = vmatprep.subr.bf16.mxu0 0
        %1211 = vmatpush1.bf16.msra.mxu0 0
        %1212 = vmatprep.subr.bf16.mxu0 0
        %1213 = vmatpush1.bf16.msra.mxu0 0
        %1214 = vmatprep.subr.bf16.mxu0 0
        %1215 = vmatpush1.bf16.msra.mxu0 0
        %1216 = vmatprep.subr.bf16.mxu0 0
        %1217 = vmatpush1.bf16.msra.mxu0 0
        %1218 = vmatprep.subr.bf16.mxu0 0
        %1219 = vmatpush1.bf16.msra.mxu0 0
        %1220 = vmatprep.mubr.bf16.mxu0 0
        %1221 = vmatmul.mubr.bf16.gmra.mrb[0].mxu0 %v1186
        %v1222 = vpop.f32.mrb[0].mxu0
        %v1223 = vadd.f32 0.0, %v1222
        %v1224 = vpop.f32.mrb[0].mxu0
        %v1225 = vpop.f32.mrb[0].mxu0
        %v1226 = vpop.f32.mrb[0].mxu0
        %1227 = vdwg.mxu0
        %v1229 = vrot.slane %v1223, 3
        %v1231 = vadd.f32 %v855, %v1229
        %v1232 = vxor.u32 %v1231, 2147483648
        %v1233 = vmul.f32 %v1232, 1.442695
        %v1234 = vpow.pop %v1233
        %v1235 = vadd.f32 %v1234, 1.0
        %v1236 = vrcp.pop %v1235
        %v1237 = vmul.f32 1.0, %v1236
        %v1238 = vtanh.pop %v1231
        %v1240 = vrot.slane %v1173, 7
        %v1242 = vmul.f32 %v1237, %v1240
        %1244 = vrot.lane.b32.xlu0 %v1238, 64
        %v1245 = vpop.permute.xlu0 %1244
        %v1247 = vmul.f32 %v1237, %v1245
        %1249 = vrot.lane.b32.xlu0 %v1247, 32
        %v1250 = vpop.permute.xlu0 %1249
        %v1252 = vadd.f32 %v1242, %v1250
        %v1253 = vtanh.pop %v1252
        %1255 = vrot.lane.b32.xlu0 %v1253, 64
        %v1256 = vpop.permute.xlu0 %1255
        %v1258 = vmul.f32 %v1237, %v1256
        %v1259 = vpack.c.bf16 %v1258, %v1258
        %v1261 = vshrl.u32 %v1259, 16
        %v1263 = vrot.slane %v1261, 2
        %1264 = vrot.lane.b32.xlu0 %v1263, 32
        %v1265 = vpop.permute.xlu0 %1264
        %v1267 = vsel %vm706, %v1265, 0
        %1269 = vmatprep.subr.bf16.mxu0 0
        %1270 = vmatpush1.bf16.msra.mxu0 %v781
        %1271 = vmatprep.subr.bf16.mxu0 0
        %1272 = vmatpush1.bf16.msra.mxu0 %v782
        %1273 = vmatprep.subr.bf16.mxu0 0
        %1274 = vmatpush1.bf16.msra.mxu0 0
        %1275 = vmatprep.subr.bf16.mxu0 0
        %1276 = vmatpush1.bf16.msra.mxu0 0
        %1277 = vmatprep.subr.bf16.mxu0 0
        %1278 = vmatpush1.bf16.msra.mxu0 0
        %1279 = vmatprep.subr.bf16.mxu0 0
        %1280 = vmatpush1.bf16.msra.mxu0 0
        %1281 = vmatprep.subr.bf16.mxu0 0
        %1282 = vmatpush1.bf16.msra.mxu0 0
        %1283 = vmatprep.subr.bf16.mxu0 0
        %1284 = vmatpush1.bf16.msra.mxu0 0
        %1285 = vmatprep.subr.bf16.mxu0 0
        %1286 = vmatpush1.bf16.msra.mxu0 0
        %1287 = vmatprep.subr.bf16.mxu0 0
        %1288 = vmatpush1.bf16.msra.mxu0 0
        %1289 = vmatprep.subr.bf16.mxu0 0
        %1290 = vmatpush1.bf16.msra.mxu0 0
        %1291 = vmatprep.subr.bf16.mxu0 0
        %1292 = vmatpush1.bf16.msra.mxu0 0
        %1293 = vmatprep.subr.bf16.mxu0 0
        %1294 = vmatpush1.bf16.msra.mxu0 0
        %1295 = vmatprep.subr.bf16.mxu0 0
        %1296 = vmatpush1.bf16.msra.mxu0 0
        %1297 = vmatprep.subr.bf16.mxu0 0
        %1298 = vmatpush1.bf16.msra.mxu0 0
        %1299 = vmatprep.subr.bf16.mxu0 0
        %1300 = vmatpush1.bf16.msra.mxu0 0
        %1301 = vmatprep.mubr.bf16.mxu0 0
        %1302 = vmatmul.mubr.bf16.gmra.mrb[0].mxu0 %v1267
        %v1303 = vpop.f32.mrb[0].mxu0
        %v1304 = vadd.f32 0.0, %v1303
        %v1305 = vpop.f32.mrb[0].mxu0
        %v1306 = vpop.f32.mrb[0].mxu0
        %v1307 = vpop.f32.mrb[0].mxu0
        %1308 = vdwg.mxu0
        %v1310 = vrot.slane %v1304, 2
        %v1312 = vadd.f32 %v936, %v1310
        %v1313 = vxor.u32 %v1312, 2147483648
        %v1314 = vmul.f32 %v1313, 1.442695
        %v1315 = vpow.pop %v1314
        %v1316 = vadd.f32 %v1315, 1.0
        %v1317 = vrcp.pop %v1316
        %v1318 = vmul.f32 1.0, %v1317
        %v1319 = vtanh.pop %v1312
        %v1321 = vrot.slane %v1252, 7
        %v1323 = vmul.f32 %v1318, %v1321
        %1325 = vrot.lane.b32.xlu0 %v1319, 64
        %v1326 = vpop.permute.xlu0 %1325
        %v1328 = vmul.f32 %v1318, %v1326
        %1330 = vrot.lane.b32.xlu0 %v1328, 32
        %v1331 = vpop.permute.xlu0 %1330
        %v1333 = vadd.f32 %v1323, %v1331
        %v1334 = vtanh.pop %v1333
        %1336 = vrot.lane.b32.xlu0 %v1334, 64
        %v1337 = vpop.permute.xlu0 %1336
        %v1339 = vmul.f32 %v1318, %v1337
        %v1340 = vpack.c.bf16 %v1339, %v1339
        %v1342 = vrot.slane %v1340, 3
        %1343 = vrot.lane.b32.xlu0 %v1342, 32
        %v1344 = vpop.permute.xlu0 %1343
        %v1346 = vsel %vm706, %v1344, 0
        %1348 = vmatprep.subr.bf16.mxu0 0
        %1349 = vmatpush1.bf16.msra.mxu0 %v781
        %1350 = vmatprep.subr.bf16.mxu0 0
        %1351 = vmatpush1.bf16.msra.mxu0 %v782
        %1352 = vmatprep.subr.bf16.mxu0 0
        %1353 = vmatpush1.bf16.msra.mxu0 0
        %1354 = vmatprep.subr.bf16.mxu0 0
        %1355 = vmatpush1.bf16.msra.mxu0 0
        %1356 = vmatprep.subr.bf16.mxu0 0
        %1357 = vmatpush1.bf16.msra.mxu0 0
        %1358 = vmatprep.subr.bf16.mxu0 0
        %1359 = vmatpush1.bf16.msra.mxu0 0
        %1360 = vmatprep.subr.bf16.mxu0 0
        %1361 = vmatpush1.bf16.msra.mxu0 0
        %1362 = vmatprep.subr.bf16.mxu0 0
        %1363 = vmatpush1.bf16.msra.mxu0 0
        %1364 = vmatprep.subr.bf16.mxu0 0
        %1365 = vmatpush1.bf16.msra.mxu0 0
        %1366 = vmatprep.subr.bf16.mxu0 0
        %1367 = vmatpush1.bf16.msra.mxu0 0
        %1368 = vmatprep.subr.bf16.mxu0 0
        %1369 = vmatpush1.bf16.msra.mxu0 0
        %1370 = vmatprep.subr.bf16.mxu0 0
        %1371 = vmatpush1.bf16.msra.mxu0 0
        %1372 = vmatprep.subr.bf16.mxu0 0
        %1373 = vmatpush1.bf16.msra.mxu0 0
        %1374 = vmatprep.subr.bf16.mxu0 0
        %1375 = vmatpush1.bf16.msra.mxu0 0
        %1376 = vmatprep.subr.bf16.mxu0 0
        %1377 = vmatpush1.bf16.msra.mxu0 0
        %1378 = vmatprep.subr.bf16.mxu0 0
        %1379 = vmatpush1.bf16.msra.mxu0 0
        %1380 = vmatprep.mubr.bf16.mxu0 0
        %1381 = vmatmul.mubr.bf16.gmra.mrb[0].mxu0 %v1346
        %v1382 = vpop.f32.mrb[0].mxu0
        %v1383 = vadd.f32 0.0, %v1382
        %v1384 = vpop.f32.mrb[0].mxu0
        %v1385 = vpop.f32.mrb[0].mxu0
        %v1386 = vpop.f32.mrb[0].mxu0
        %1387 = vdwg.mxu0
        %v1389 = vrot.slane %v1383, 1
        %v1391 = vadd.f32 %v1019, %v1389
        %v1392 = vxor.u32 %v1391, 2147483648
        %v1393 = vmul.f32 %v1392, 1.442695
        %v1394 = vpow.pop %v1393
        %v1395 = vadd.f32 %v1394, 1.0
        %v1396 = vrcp.pop %v1395
        %v1397 = vmul.f32 1.0, %v1396
        %v1398 = vtanh.pop %v1391
        %v1400 = vrot.slane %v1333, 7
        %v1402 = vmul.f32 %v1397, %v1400
        %1404 = vrot.lane.b32.xlu0 %v1398, 64
        %v1405 = vpop.permute.xlu0 %1404
        %v1407 = vmul.f32 %v1397, %v1405
        %1409 = vrot.lane.b32.xlu0 %v1407, 32
        %v1410 = vpop.permute.xlu0 %1409
        %v1412 = vadd.f32 %v1402, %v1410
        %v1413 = vtanh.pop %v1412
        %1415 = vrot.lane.b32.xlu0 %v1413, 64
        %v1416 = vpop.permute.xlu0 %1415
        %v1418 = vmul.f32 %v1397, %v1416
        %vm1419 = vcmp.lt.s32.totalorder %v755, 16
        %1421 = vrot.lane.b32.xlu0 %v852, 32
        %v1422 = vpop.permute.xlu0 %1421
        %v1425 = vrot.slane %v1418, 7
        %1426 = vrot.lane.b32.xlu0 %v1425, 32
        %v1427 = vpop.permute.xlu0 %1426
        %v1429 = vsel %vm1419, %v1422, %v1427
        %v1431 = vrot.slane %v933, 1
        %1432 = vrot.lane.b32.xlu0 %v1431, 32
        %v1433 = vpop.permute.xlu0 %1432
        %v1436 = vrot.slane %v1339, 6
        %1437 = vrot.lane.b32.xlu0 %v1436, 32
        %v1438 = vpop.permute.xlu0 %1437
        %v1440 = vsel %vm1419, %v1433, %v1438
        %v1442 = vrot.slane %v1016, 2
        %1443 = vrot.lane.b32.xlu0 %v1442, 32
        %v1444 = vpop.permute.xlu0 %1443
        %v1447 = vrot.slane %v1258, 5
        %1448 = vrot.lane.b32.xlu0 %v1447, 32
        %v1449 = vpop.permute.xlu0 %1448
        %v1451 = vsel %vm1419, %v1444, %v1449
        %v1453 = vrot.slane %v1098, 3
        %1454 = vrot.lane.b32.xlu0 %v1453, 32
        %v1455 = vpop.permute.xlu0 %1454
        %v1458 = vrot.slane %v1179, 4
        %1459 = vrot.lane.b32.xlu0 %v1458, 32
        %v1460 = vpop.permute.xlu0 %1459
        %v1462 = vsel %vm1419, %v1455, %v1460
        %v1463 = vsel %vm1419, %v1460, %v1455
        %v1464 = vsel %vm1419, %v1449, %v1444
        %v1465 = vsel %vm1419, %v1438, %v1433
        %v1466 = vsel %vm1419, %v1427, %v1422
        %v1468 = vrot.slane %v1440, 7
        %v1471 = vrot.slane %v1451, 6
        %v1474 = vrot.slane %v1462, 5
        %v1477 = vrot.slane %v1463, 4
        %v1480 = vrot.slane %v1464, 3
        %v1483 = vrot.slane %v1465, 2
        %v1486 = vrot.slane %v1466, 1
        %vm1488 = vcmask 1040384
        %v1489 = vsel %vm1488, %v1429, %v1468
        %vm1490 = vcmask 1041408
        %v1491 = vsel %vm1490, %v1489, %v1471
        %vm1492 = vcmask 1042432
        %v1493 = vsel %vm1492, %v1491, %v1474
        %vm1494 = vcmask 1043456
        %v1495 = vsel %vm1494, %v1493, %v1477
        %vm1496 = vcmask 1044480
        %v1497 = vsel %vm1496, %v1495, %v1480
        %vm1498 = vcmask 1045504
        %v1499 = vsel %vm1498, %v1497, %v1483
        %vm1500 = vcmask 1046528
        %v1501 = vsel %vm1500, %v1499, %v1486
        %v1502 = vpack.c.bf16 %v1501, %v1501
        %v1503 = vld [vmem:[%s5] sm:$0xf]
        %v1504 = vld [vmem:[%s5 + $0x4] sm:$0xf]
        %v1505 = vld [vmem:[%s5 + $0x8] sm:$0xf]
        %v1506 = vld [vmem:[%s5 + $0xc] sm:$0xf]
        %v1507 = vld [vmem:[%s6] sm:$0x1]
        %v1509 = vlaneseq
        %v1510 = vshrl.u32 %v1509, 7
        %v1511 = vsub.s32 0, %v1510
        %v1512 = vrot.slane %v1507, %v1511
        %v1518 = vunpack.c.l.b16 %v1503
        %v1519 = vunpack.c.l.b16 %v1504
        %v1520 = vunpack.c.l.b16 %v1505
        %v1521 = vunpack.c.l.b16 %v1506
        %v1522 = vpack.c.b16 %v1519, %v1518
        %v1523 = vpack.c.b16 %v1521, %v1520
        %v1527 = vsel %vm706, %v1502, 0
        %1529 = vmatprep.subr.bf16.mxu0 0
        %1530 = vmatpush1.bf16.msra.mxu0 %v1522
        %1531 = vmatprep.subr.bf16.mxu0 0
        %1532 = vmatpush1.bf16.msra.mxu0 %v1523
        %1533 = vmatprep.subr.bf16.mxu0 0
        %1534 = vmatpush1.bf16.msra.mxu0 0
        %1535 = vmatprep.subr.bf16.mxu0 0
        %1536 = vmatpush1.bf16.msra.mxu0 0
        %1537 = vmatprep.subr.bf16.mxu0 0
        %1538 = vmatpush1.bf16.msra.mxu0 0
        %1539 = vmatprep.subr.bf16.mxu0 0
        %1540 = vmatpush1.bf16.msra.mxu0 0
        %1541 = vmatprep.subr.bf16.mxu0 0
        %1542 = vmatpush1.bf16.msra.mxu0 0
        %1543 = vmatprep.subr.bf16.mxu0 0
        %1544 = vmatpush1.bf16.msra.mxu0 0
        %1545 = vmatprep.subr.bf16.mxu0 0
        %1546 = vmatpush1.bf16.msra.mxu0 0
        %1547 = vmatprep.subr.bf16.mxu0 0
        %1548 = vmatpush1.bf16.msra.mxu0 0
        %1549 = vmatprep.subr.bf16.mxu0 0
        %1550 = vmatpush1.bf16.msra.mxu0 0
        %1551 = vmatprep.subr.bf16.mxu0 0
        %1552 = vmatpush1.bf16.msra.mxu0 0
        %1553 = vmatprep.subr.bf16.mxu0 0
        %1554 = vmatpush1.bf16.msra.mxu0 0
        %1555 = vmatprep.subr.bf16.mxu0 0
        %1556 = vmatpush1.bf16.msra.mxu0 0
        %1557 = vmatprep.subr.bf16.mxu0 0
        %1558 = vmatpush1.bf16.msra.mxu0 0
        %1559 = vmatprep.subr.bf16.mxu0 0
        %1560 = vmatpush1.bf16.msra.mxu0 0
        %1561 = vmatprep.mubr.bf16.mxu0 0
        %1562 = vmatmul.mubr.bf16.gmra.mrb[0].mxu0 %v1527
        %v1563 = vpop.f32.mrb[0].mxu0
        %v1564 = vadd.f32 %v1512, %v1563
        %v1565 = vpop.f32.mrb[0].mxu0
        %v1566 = vpop.f32.mrb[0].mxu0
        %v1567 = vpop.f32.mrb[0].mxu0
        %1568 = vdwg.mxu0
        %v1569 = vld [vmem:[%s7] sm:$0xff]
        %vm1570 = vcmp.eq.s32.totalorder %v755, 6
        %v1571 = vsel %vm1570, 0.0, -10000.0
        %v1572 = vadd.f32 %v1569, %v1571
        %vm1573 = vcmask 64512
        %v1574 = vsel %vm1573, %v1572, -inf
        %1575 = vmax.xlane.f32.xlu0 %v1574
        %v1576 = vpop.xlane.xlu0 %1575
        %v1578 = vlaneseq
        %v1579 = vshrl.u32 %v1578, 7
        %v1580 = vsub.s32 0, %v1579
        %v1581 = vrot.slane %v1564, %v1580
        %1583 = vbcast.lane.b32.xlu0 %v1581, 256
        %v1584 = vpop.permute.xlu0 %1583
        %v1586 = vadd.f32 %v1576, %v1584
        %1588 = vset.pattern.permute.xlu0 0
        %1589 = vperm.xlu0 %1588, %v1586
        %v1590 = vpop.permute.xlu0 %1589
        %v1591 = vlaneseq
        %v1592 = vshrl.u32 %v1591, 7
        %v1593 = vsub.s32 %v755, %v1592
        %v1594 = vrot.slane %v1590, %v1593
        %vm1595 = vcmask 1042434
        %v1596 = vsel %vm1595, %v1594, %v1594
        %vm1597 = vcmask 1043459
        %v1598 = vsel %vm1597, %v1594, %v1596
        %vm1599 = vcmask 1044484
        %v1600 = vsel %vm1599, %v1594, %v1598
        %vm1601 = vcmask 1045509
        %v1602 = vsel %vm1601, %v1594, %v1600
        %vm1603 = vcmask 1046534
        %v1604 = vsel %vm1603, %v1594, %v1602
        %vm1605 = vcmask 1047559
        %v1606 = vsel %vm1605, %v1594, %v1604
        %v1608 = vadd.f32 %v1569, %v1606
        %v1609 = vsel %vm1573, %v1608, -inf
        %1610 = vmax.xlane.f32.xlu0 %v1609
        %v1611 = vpop.xlane.xlu0 %1610
        %vm1612 = vcmp.eq.f32.partialorder %v1608, %v1611
        %v1613 = vsel %vm1612, %v755, 8
        %v1614 = vsel %vm1573, %v1613, 2147483647
        %v1615 = vand.u32 %v1614, 65535
        %v1616 = vshra.s32 %v1614, 16
        %v1617 = vcvt.s32.f32 %v1615
        %v1618 = vcvt.s32.f32 %v1616
        %1619 = vmin.xlane.f32.xlu0 %v1618
        %v1620 = vpop.xlane.xlu0 %1619
        %vm1621 = vcmp.eq.f32.partialorder %v1618, %v1620
        %v1622 = vsel %vm1621, %v1617, inf
        %1623 = vmin.xlane.f32.xlu0 %v1622
        %v1624 = vpop.xlane.xlu0 %1623
        %v1625 = vcvt.f32.s32 %v1624
        %v1626 = vcvt.f32.s32 %v1620
        %v1627 = vshll.u32 %v1626, 16
        %v1628 = vadd.s32 %v1627, %v1625
        %v1629 = vlaneseq
        %v1630 = vshrl.u32 %v1629, 7
        %v1631 = vsub.s32 1, %v1630
        %v1632 = vrot.slane %v1564, %v1631
        %1634 = vbcast.lane.b32.xlu0 %v1632, 256
        %v1635 = vpop.permute.xlu0 %1634
        %v1637 = vadd.f32 %v1611, %v1635
        %1639 = vset.pattern.permute.xlu0 0
        %1640 = vperm.xlu0 %1639, %v1637
        %v1641 = vpop.permute.xlu0 %1640
        %v1642 = vlaneseq
        %v1643 = vshrl.u32 %v1642, 7
        %v1644 = vsub.s32 %v755, %v1643
        %v1645 = vrot.slane %v1641, %v1644
        %v1646 = vsel %vm1595, %v1645, %v1645
        %v1647 = vsel %vm1597, %v1645, %v1646
        %v1648 = vsel %vm1599, %v1645, %v1647
        %v1649 = vsel %vm1601, %v1645, %v1648
        %v1650 = vsel %vm1603, %v1645, %v1649
        %v1651 = vsel %vm1605, %v1645, %v1650
        %v1653 = vadd.f32 %v1569, %v1651
        %v1654 = vsel %vm1573, %v1653, -inf
        %1655 = vmax.xlane.f32.xlu0 %v1654
        %v1656 = vpop.xlane.xlu0 %1655
        %vm1657 = vcmp.eq.f32.partialorder %v1653, %v1656
        %v1658 = vsel %vm1657, %v755, 8
        %v1659 = vsel %vm1573, %v1658, 2147483647
        %v1660 = vand.u32 %v1659, 65535
        %v1661 = vshra.s32 %v1659, 16
        %v1662 = vcvt.s32.f32 %v1660
        %v1663 = vcvt.s32.f32 %v1661
        %1664 = vmin.xlane.f32.xlu0 %v1663
        %v1665 = vpop.xlane.xlu0 %1664
        %vm1666 = vcmp.eq.f32.partialorder %v1663, %v1665
        %v1667 = vsel %vm1666, %v1662, inf
        %1668 = vmin.xlane.f32.xlu0 %v1667
        %v1669 = vpop.xlane.xlu0 %1668
        %v1670 = vcvt.f32.s32 %v1669
        %v1671 = vcvt.f32.s32 %v1665
        %v1672 = vshll.u32 %v1671, 16
        %v1673 = vadd.s32 %v1672, %v1670
        %v1674 = vlaneseq
        %v1675 = vshrl.u32 %v1674, 7
        %v1676 = vsub.s32 2, %v1675
        %v1677 = vrot.slane %v1564, %v1676
        %1679 = vbcast.lane.b32.xlu0 %v1677, 256
        %v1680 = vpop.permute.xlu0 %1679
        %v1682 = vadd.f32 %v1656, %v1680
        %1684 = vset.pattern.permute.xlu0 0
        %1685 = vperm.xlu0 %1684, %v1682
        %v1686 = vpop.permute.xlu0 %1685
        %v1687 = vlaneseq
        %v1688 = vshrl.u32 %v1687, 7
        %v1689 = vsub.s32 %v755, %v1688
        %v1690 = vrot.slane %v1686, %v1689
        %v1691 = vsel %vm1595, %v1690, %v1690
        %v1692 = vsel %vm1597, %v1690, %v1691
        %v1693 = vsel %vm1599, %v1690, %v1692
        %v1694 = vsel %vm1601, %v1690, %v1693
        %v1695 = vsel %vm1603, %v1690, %v1694
        %v1696 = vsel %vm1605, %v1690, %v1695
        %v1698 = vadd.f32 %v1569, %v1696
        %v1699 = vsel %vm1573, %v1698, -inf
        %1700 = vmax.xlane.f32.xlu0 %v1699
        %v1701 = vpop.xlane.xlu0 %1700
        %vm1702 = vcmp.eq.f32.partialorder %v1698, %v1701
        %v1703 = vsel %vm1702, %v755, 8
        %v1704 = vsel %vm1573, %v1703, 2147483647
        %v1705 = vand.u32 %v1704, 65535
        %v1706 = vshra.s32 %v1704, 16
        %v1707 = vcvt.s32.f32 %v1705
        %v1708 = vcvt.s32.f32 %v1706
        %1709 = vmin.xlane.f32.xlu0 %v1708
        %v1710 = vpop.xlane.xlu0 %1709
        %vm1711 = vcmp.eq.f32.partialorder %v1708, %v1710
        %v1712 = vsel %vm1711, %v1707, inf
        %1713 = vmin.xlane.f32.xlu0 %v1712
        %v1714 = vpop.xlane.xlu0 %1713
        %v1715 = vcvt.f32.s32 %v1714
        %v1716 = vcvt.f32.s32 %v1710
        %v1717 = vshll.u32 %v1716, 16
        %v1718 = vadd.s32 %v1717, %v1715
        %v1719 = vlaneseq
        %v1720 = vshrl.u32 %v1719, 7
        %v1721 = vsub.s32 3, %v1720
        %v1722 = vrot.slane %v1564, %v1721
        %1724 = vbcast.lane.b32.xlu0 %v1722, 256
        %v1725 = vpop.permute.xlu0 %1724
        %v1727 = vadd.f32 %v1701, %v1725
        %1729 = vset.pattern.permute.xlu0 0
        %1730 = vperm.xlu0 %1729, %v1727
        %v1731 = vpop.permute.xlu0 %1730
        %v1732 = vlaneseq
        %v1733 = vshrl.u32 %v1732, 7
        %v1734 = vsub.s32 %v755, %v1733
        %v1735 = vrot.slane %v1731, %v1734
        %v1736 = vsel %vm1595, %v1735, %v1735
        %v1737 = vsel %vm1597, %v1735, %v1736
        %v1738 = vsel %vm1599, %v1735, %v1737
        %v1739 = vsel %vm1601, %v1735, %v1738
        %v1740 = vsel %vm1603, %v1735, %v1739
        %v1741 = vsel %vm1605, %v1735, %v1740
        %v1743 = vadd.f32 %v1569, %v1741
        %v1744 = vsel %vm1573, %v1743, -inf
        %1745 = vmax.xlane.f32.xlu0 %v1744
        %v1746 = vpop.xlane.xlu0 %1745
        %vm1747 = vcmp.eq.f32.partialorder %v1743, %v1746
        %v1748 = vsel %vm1747, %v755, 8
        %v1749 = vsel %vm1573, %v1748, 2147483647
        %v1750 = vand.u32 %v1749, 65535
        %v1751 = vshra.s32 %v1749, 16
        %v1752 = vcvt.s32.f32 %v1750
        %v1753 = vcvt.s32.f32 %v1751
        %1754 = vmin.xlane.f32.xlu0 %v1753
        %v1755 = vpop.xlane.xlu0 %1754
        %vm1756 = vcmp.eq.f32.partialorder %v1753, %v1755
        %v1757 = vsel %vm1756, %v1752, inf
        %1758 = vmin.xlane.f32.xlu0 %v1757
        %v1759 = vpop.xlane.xlu0 %1758
        %v1760 = vcvt.f32.s32 %v1759
        %v1761 = vcvt.f32.s32 %v1755
        %v1762 = vshll.u32 %v1761, 16
        %v1763 = vadd.s32 %v1762, %v1760
        %v1764 = vlaneseq
        %v1765 = vshrl.u32 %v1764, 7
        %v1766 = vsub.s32 4, %v1765
        %v1767 = vrot.slane %v1564, %v1766
        %1769 = vbcast.lane.b32.xlu0 %v1767, 256
        %v1770 = vpop.permute.xlu0 %1769
        %v1772 = vadd.f32 %v1746, %v1770
        %1774 = vset.pattern.permute.xlu0 0
        %1775 = vperm.xlu0 %1774, %v1772
        %v1776 = vpop.permute.xlu0 %1775
        %v1777 = vlaneseq
        %v1778 = vshrl.u32 %v1777, 7
        %v1779 = vsub.s32 %v755, %v1778
        %v1780 = vrot.slane %v1776, %v1779
        %v1781 = vsel %vm1595, %v1780, %v1780
        %v1782 = vsel %vm1597, %v1780, %v1781
        %v1783 = vsel %vm1599, %v1780, %v1782
        %v1784 = vsel %vm1601, %v1780, %v1783
        %v1785 = vsel %vm1603, %v1780, %v1784
        %v1786 = vsel %vm1605, %v1780, %v1785
        %v1788 = vadd.f32 %v1569, %v1786
        %v1789 = vsel %vm1573, %v1788, -inf
        %1790 = vmax.xlane.f32.xlu0 %v1789
        %v1791 = vpop.xlane.xlu0 %1790
        %vm1792 = vcmp.eq.f32.partialorder %v1788, %v1791
        %v1793 = vsel %vm1792, %v755, 8
        %v1794 = vsel %vm1573, %v1793, 2147483647
        %v1795 = vand.u32 %v1794, 65535
        %v1796 = vshra.s32 %v1794, 16
        %v1797 = vcvt.s32.f32 %v1795
        %v1798 = vcvt.s32.f32 %v1796
        %1799 = vmin.xlane.f32.xlu0 %v1798
        %v1800 = vpop.xlane.xlu0 %1799
        %vm1801 = vcmp.eq.f32.partialorder %v1798, %v1800
        %v1802 = vsel %vm1801, %v1797, inf
        %1803 = vmin.xlane.f32.xlu0 %v1802
        %v1804 = vpop.xlane.xlu0 %1803
        %v1805 = vcvt.f32.s32 %v1804
        %v1806 = vcvt.f32.s32 %v1800
        %v1807 = vshll.u32 %v1806, 16
        %v1808 = vadd.s32 %v1807, %v1805
        %v1809 = vlaneseq
        %v1810 = vshrl.u32 %v1809, 7
        %v1811 = vsub.s32 5, %v1810
        %v1812 = vrot.slane %v1564, %v1811
        %1814 = vbcast.lane.b32.xlu0 %v1812, 256
        %v1815 = vpop.permute.xlu0 %1814
        %v1817 = vadd.f32 %v1791, %v1815
        %1819 = vset.pattern.permute.xlu0 0
        %1820 = vperm.xlu0 %1819, %v1817
        %v1821 = vpop.permute.xlu0 %1820
        %v1822 = vlaneseq
        %v1823 = vshrl.u32 %v1822, 7
        %v1824 = vsub.s32 %v755, %v1823
        %v1825 = vrot.slane %v1821, %v1824
        %v1826 = vsel %vm1595, %v1825, %v1825
        %v1827 = vsel %vm1597, %v1825, %v1826
        %v1828 = vsel %vm1599, %v1825, %v1827
        %v1829 = vsel %vm1601, %v1825, %v1828
        %v1830 = vsel %vm1603, %v1825, %v1829
        %v1831 = vsel %vm1605, %v1825, %v1830
        %v1833 = vadd.f32 %v1569, %v1831
        %v1834 = vsel %vm1573, %v1833, -inf
        %1835 = vmax.xlane.f32.xlu0 %v1834
        %v1836 = vpop.xlane.xlu0 %1835
        %vm1837 = vcmp.eq.f32.partialorder %v1833, %v1836
        %v1838 = vsel %vm1837, %v755, 8
        %v1839 = vsel %vm1573, %v1838, 2147483647
        %v1840 = vand.u32 %v1839, 65535
        %v1841 = vshra.s32 %v1839, 16
        %v1842 = vcvt.s32.f32 %v1840
        %v1843 = vcvt.s32.f32 %v1841
        %1844 = vmin.xlane.f32.xlu0 %v1843
        %v1845 = vpop.xlane.xlu0 %1844
        %vm1846 = vcmp.eq.f32.partialorder %v1843, %v1845
        %v1847 = vsel %vm1846, %v1842, inf
        %1848 = vmin.xlane.f32.xlu0 %v1847
        %v1849 = vpop.xlane.xlu0 %1848
        %v1850 = vcvt.f32.s32 %v1849
        %v1851 = vcvt.f32.s32 %v1845
        %v1852 = vshll.u32 %v1851, 16
        %v1853 = vadd.s32 %v1852, %v1850
        %v1854 = vlaneseq
        %v1855 = vshrl.u32 %v1854, 7
        %v1856 = vsub.s32 6, %v1855
        %v1857 = vrot.slane %v1564, %v1856
        %1859 = vbcast.lane.b32.xlu0 %v1857, 256
        %v1860 = vpop.permute.xlu0 %1859
        %v1862 = vadd.f32 %v1836, %v1860
        %1864 = vset.pattern.permute.xlu0 0
        %1865 = vperm.xlu0 %1864, %v1862
        %v1866 = vpop.permute.xlu0 %1865
        %v1867 = vlaneseq
        %v1868 = vshrl.u32 %v1867, 7
        %v1869 = vsub.s32 %v755, %v1868
        %v1870 = vrot.slane %v1866, %v1869
        %v1871 = vsel %vm1595, %v1870, %v1870
        %v1872 = vsel %vm1597, %v1870, %v1871
        %v1873 = vsel %vm1599, %v1870, %v1872
        %v1874 = vsel %vm1601, %v1870, %v1873
        %v1875 = vsel %vm1603, %v1870, %v1874
        %v1876 = vsel %vm1605, %v1870, %v1875
        %v1878 = vadd.f32 %v1569, %v1876
        %v1879 = vsel %vm1573, %v1878, -inf
        %1880 = vmax.xlane.f32.xlu0 %v1879
        %v1881 = vpop.xlane.xlu0 %1880
        %vm1882 = vcmp.eq.f32.partialorder %v1878, %v1881
        %v1883 = vsel %vm1882, %v755, 8
        %v1884 = vsel %vm1573, %v1883, 2147483647
        %v1885 = vand.u32 %v1884, 65535
        %v1886 = vshra.s32 %v1884, 16
        %v1887 = vcvt.s32.f32 %v1885
        %v1888 = vcvt.s32.f32 %v1886
        %1889 = vmin.xlane.f32.xlu0 %v1888
        %v1890 = vpop.xlane.xlu0 %1889
        %vm1891 = vcmp.eq.f32.partialorder %v1888, %v1890
        %v1892 = vsel %vm1891, %v1887, inf
        %1893 = vmin.xlane.f32.xlu0 %v1892
        %v1894 = vpop.xlane.xlu0 %1893
        %v1895 = vcvt.f32.s32 %v1894
        %v1896 = vcvt.f32.s32 %v1890
        %v1897 = vshll.u32 %v1896, 16
        %v1898 = vadd.s32 %v1897, %v1895
        %v1899 = vlaneseq
        %v1900 = vshrl.u32 %v1899, 7
        %v1901 = vsub.s32 7, %v1900
        %v1902 = vrot.slane %v1564, %v1901
        %1904 = vbcast.lane.b32.xlu0 %v1902, 256
        %v1905 = vpop.permute.xlu0 %1904
        %v1907 = vadd.f32 %v1881, %v1905
        %v1909 = vlaneseq
        %v1910 = vshrl.u32 %v1909, 7
        %v1911 = vsub.s32 7, %v1910
        %v1912 = vrot.slane %v1569, %v1911
        %1914 = vbcast.lane.b32.xlu0 %v1912, 256
        %v1915 = vpop.permute.xlu0 %1914
        %v1917 = vadd.f32 %v1907, %v1915
        %vm1918 = vcmask 7168
        %v1919 = vsel %vm1918, %v1917, -inf
        %v1920 = vrot.slane %v1919, 4
        %v1921 = vmax.f32 %v1919, %v1920
        %v1922 = vrot.slane %v1921, 2
        %v1923 = vmax.f32 %v1921, %v1922
        %v1924 = vrot.slane %v1923, 1
        %v1925 = vmax.f32 %v1923, %v1924
        %1927 = vset.pattern.permute.xlu0 0
        %1928 = vperm.xlu0 %1927, %v1925
        %v1929 = vpop.permute.xlu0 %1928
        %vm1931 = vcmp.eq.f32.partialorder %v1917, %v1929
        %1933 = vbcast.lane.b32.xlu0 %v755, 256
        %v1934 = vpop.permute.xlu0 %1933
        %v1935 = vsel %vm1931, %v1934, 8
        %v1936 = vsel %vm1918, %v1935, 2147483647
        %v1937 = vrot.slane %v1936, 4
        %vm1938 = vcmp.lt.s32.totalorder %v1936, %v1937
        %v1939 = vsel %vm1938, %v1936, %v1937
        %v1940 = vrot.slane %v1939, 2
        %vm1941 = vcmp.lt.s32.totalorder %v1939, %v1940
        %v1942 = vsel %vm1941, %v1939, %v1940
        %v1943 = vrot.slane %v1942, 1
        %vm1944 = vcmp.lt.s32.totalorder %v1942, %v1943
        %v1945 = vsel %vm1944, %v1942, %v1943
        %vm1946 = vcmask 0
        %1947 = vst.msk [vmem:[%s272] sm:$0x1] %vm1946, %v1925
        %vm1948 = vcmp.eq.s32.totalorder %v755, 7
        %1949 = vset.pattern.permute.xlu0 0
        %1950 = vperm.xlu0 %1949, %v1945
        %v1951 = vpop.permute.xlu0 %1950
        %v1952 = vsel %vm1948, %v1951, 0
        %vm1953 = vcmp.eq.s32.totalorder %v755, %v1951
        %v1954 = vlaneseq
        %v1955 = vshrl.u32 %v1954, 7
        %v1956 = vsub.s32 %v755, %v1955
        %v1957 = vrot.slane %v1898, %v1956
        %v1958 = vsel %vm1953, %v1957, 0
        %vm1959 = vcmask 57344
        %v1960 = vsel %vm1959, %v1958, 0
        %v1961 = vand.u32 %v1960, 65535
        %v1962 = vshrl.u32 %v1960, 16
        %v1963 = vcvt.s32.f32 %v1961
        %v1964 = vcvt.s32.f32 %v1962
        %1965 = vadd.xlane.f32.xlu0 %v1963
        %v1966 = vpop.xlane.xlu0 %1965
        %1967 = vadd.xlane.f32.xlu0 %v1964
        %v1968 = vpop.xlane.xlu0 %1967
        %v1969 = vcvt.f32.s32 %v1966
        %v1970 = vcvt.f32.s32 %v1968
        %v1971 = vshll.u32 %v1970, 16
        %v1972 = vadd.s32 %v1971, %v1969
        %v1973 = vsel %vm1570, %v1972, %v1952
        %vm1974 = vcmp.eq.s32.totalorder %v755, %v1972
        %v1975 = vlaneseq
        %v1976 = vshrl.u32 %v1975, 7
        %v1977 = vsub.s32 %v755, %v1976
        %v1978 = vrot.slane %v1853, %v1977
        %v1979 = vsel %vm1974, %v1978, 0
        %v1980 = vsel %vm1959, %v1979, 0
        %v1981 = vand.u32 %v1980, 65535
        %v1982 = vshrl.u32 %v1980, 16
        %v1983 = vcvt.s32.f32 %v1981
        %v1984 = vcvt.s32.f32 %v1982
        %1985 = vadd.xlane.f32.xlu0 %v1983
        %v1986 = vpop.xlane.xlu0 %1985
        %1987 = vadd.xlane.f32.xlu0 %v1984
        %v1988 = vpop.xlane.xlu0 %1987
        %v1989 = vcvt.f32.s32 %v1986
        %v1990 = vcvt.f32.s32 %v1988
        %v1991 = vshll.u32 %v1990, 16
        %v1992 = vadd.s32 %v1991, %v1989
        %vm1993 = vcmp.eq.s32.totalorder %v755, 5
        %v1994 = vsel %vm1993, %v1992, %v1973
        %vm1995 = vcmp.eq.s32.totalorder %v755, %v1992
        %v1996 = vlaneseq
        %v1997 = vshrl.u32 %v1996, 7
        %v1998 = vsub.s32 %v755, %v1997
        %v1999 = vrot.slane %v1808, %v1998
        %v2000 = vsel %vm1995, %v1999, 0
        %v2001 = vsel %vm1959, %v2000, 0
        %v2002 = vand.u32 %v2001, 65535
        %v2003 = vshrl.u32 %v2001, 16
        %v2004 = vcvt.s32.f32 %v2002
        %v2005 = vcvt.s32.f32 %v2003
        %2006 = vadd.xlane.f32.xlu0 %v2004
        %v2007 = vpop.xlane.xlu0 %2006
        %2008 = vadd.xlane.f32.xlu0 %v2005
        %v2009 = vpop.xlane.xlu0 %2008
        %v2010 = vcvt.f32.s32 %v2007
        %v2011 = vcvt.f32.s32 %v2009
        %v2012 = vshll.u32 %v2011, 16
        %v2013 = vadd.s32 %v2012, %v2010
        %vm2014 = vcmp.eq.s32.totalorder %v755, 4
        %v2015 = vsel %vm2014, %v2013, %v1994
        %vm2016 = vcmp.eq.s32.totalorder %v755, %v2013
        %v2017 = vlaneseq
        %v2018 = vshrl.u32 %v2017, 7
        %v2019 = vsub.s32 %v755, %v2018
        %v2020 = vrot.slane %v1763, %v2019
        %v2021 = vsel %vm2016, %v2020, 0
        %v2022 = vsel %vm1959, %v2021, 0
        %v2023 = vand.u32 %v2022, 65535
        %v2024 = vshrl.u32 %v2022, 16
        %v2025 = vcvt.s32.f32 %v2023
        %v2026 = vcvt.s32.f32 %v2024
        %2027 = vadd.xlane.f32.xlu0 %v2025
        %v2028 = vpop.xlane.xlu0 %2027
        %2029 = vadd.xlane.f32.xlu0 %v2026
        %v2030 = vpop.xlane.xlu0 %2029
        %v2031 = vcvt.f32.s32 %v2028
        %v2032 = vcvt.f32.s32 %v2030
        %v2033 = vshll.u32 %v2032, 16
        %v2034 = vadd.s32 %v2033, %v2031
        %vm2035 = vcmp.eq.s32.totalorder %v755, 3
        %v2036 = vsel %vm2035, %v2034, %v2015
        %vm2037 = vcmp.eq.s32.totalorder %v755, %v2034
        %v2038 = vlaneseq
        %v2039 = vshrl.u32 %v2038, 7
        %v2040 = vsub.s32 %v755, %v2039
        %v2041 = vrot.slane %v1718, %v2040
        %v2042 = vsel %vm2037, %v2041, 0
        %v2043 = vsel %vm1959, %v2042, 0
        %v2044 = vand.u32 %v2043, 65535
        %v2045 = vshrl.u32 %v2043, 16
        %v2046 = vcvt.s32.f32 %v2044
        %v2047 = vcvt.s32.f32 %v2045
        %2048 = vadd.xlane.f32.xlu0 %v2046
        %v2049 = vpop.xlane.xlu0 %2048
        %2050 = vadd.xlane.f32.xlu0 %v2047
        %v2051 = vpop.xlane.xlu0 %2050
        %v2052 = vcvt.f32.s32 %v2049
        %v2053 = vcvt.f32.s32 %v2051
        %v2054 = vshll.u32 %v2053, 16
        %v2055 = vadd.s32 %v2054, %v2052
        %vm2056 = vcmp.eq.s32.totalorder %v755, 2
        %v2057 = vsel %vm2056, %v2055, %v2036
        %vm2058 = vcmp.eq.s32.totalorder %v755, %v2055
        %v2059 = vlaneseq
        %v2060 = vshrl.u32 %v2059, 7
        %v2061 = vsub.s32 %v755, %v2060
        %v2062 = vrot.slane %v1673, %v2061
        %v2063 = vsel %vm2058, %v2062, 0
        %v2064 = vsel %vm1959, %v2063, 0
        %v2065 = vand.u32 %v2064, 65535
        %v2066 = vshrl.u32 %v2064, 16
        %v2067 = vcvt.s32.f32 %v2065
        %v2068 = vcvt.s32.f32 %v2066
        %2069 = vadd.xlane.f32.xlu0 %v2067
        %v2070 = vpop.xlane.xlu0 %2069
        %2071 = vadd.xlane.f32.xlu0 %v2068
        %v2072 = vpop.xlane.xlu0 %2071
        %v2073 = vcvt.f32.s32 %v2070
        %v2074 = vcvt.f32.s32 %v2072
        %v2075 = vshll.u32 %v2074, 16
        %v2076 = vadd.s32 %v2075, %v2073
        %vm2077 = vcmp.eq.s32.totalorder %v755, 1
        %v2078 = vsel %vm2077, %v2076, %v2057
        %vm2079 = vcmp.eq.s32.totalorder %v755, %v2076
        %v2080 = vlaneseq
        %v2081 = vshrl.u32 %v2080, 7
        %v2082 = vsub.s32 %v755, %v2081
        %v2083 = vrot.slane %v1628, %v2082
        %v2084 = vsel %vm2079, %v2083, 0
        %v2085 = vsel %vm1959, %v2084, 0
        %v2086 = vand.u32 %v2085, 65535
        %v2087 = vshrl.u32 %v2085, 16
        %v2088 = vcvt.s32.f32 %v2086
        %v2089 = vcvt.s32.f32 %v2087
        %2090 = vadd.xlane.f32.xlu0 %v2088
        %v2091 = vpop.xlane.xlu0 %2090
        %2092 = vadd.xlane.f32.xlu0 %v2089
        %v2093 = vpop.xlane.xlu0 %2092
        %v2094 = vcvt.f32.s32 %v2091
        %v2095 = vcvt.f32.s32 %v2093
        %v2096 = vshll.u32 %v2095, 16
        %v2097 = vadd.s32 %v2096, %v2094
        %vm2098 = vcmp.eq.s32.totalorder %v755, 0
        %v2099 = vsel %vm2098, %v2097, %v2078
        %2100 = vst.msk [vmem:[%s269] sm:$0x1] %vm1959, %v2099
        %p2101 = scmp.lt.s32.totalorder %s30, 1
        %s2102 = scalar_select %p2101, %s30, 1
        %s2103 = scalar_lea.vmem %s8, %s2102
        %s2104 = sand.u32 %s190, 1
        %s2105 = scalar_lea.sflag [#allocation7], %s2104
        %s2106 = sand.u32 %s190, 1
        %s2107 = scalar_lea.vmem [#allocation6], %s2106
        // Predicated region
        $region285: #{tpu_custom_call.1} parent=43 // pred_check
          %p2108 = pneg %p174
        $region286: #{tpu_custom_call.1} parent=43 // pred_check_branch
          %2110 = sbr.rel (%p2108) target = $region288
        $region287: #{tpu_custom_call.1} parent=43 // pred_region
          _
        $region288: #{tpu_custom_call.1} parent=43 // pred_fallthru
          _
        // Predicated region
        $region289: #{tpu_custom_call.1} parent=43 // pred_check
          %p2111 = pneg %p200
        $region290: #{tpu_custom_call.1} parent=43 // pred_check_branch
          %2113 = sbr.rel (%p2111) target = $region292
        $region291: #{tpu_custom_call.1} parent=43 // pred_region
          %s2115 = ssub.s32 16, 16
          %2116 = vsyncadd %s2105, %s2115
          %s2117 = smul.addr %s30, 16
          %s2118 = scalar_lea.hbm %s9, %s2117
          %s2120 = sshll.u32 %s2107, 4
          %s2121 = int_to_ptr.vmem [resolvable:$true] %s2120
          %2123 = dma.vmem_to_hbm [thread:$0]  %s2121, 16, %s2118, %s2105
        $region292: #{tpu_custom_call.1} parent=43 // pred_fallthru
          _
      $region44: #{tpu_custom_call.1} parent=5 // pred_fallthru
        _
      %p2124 = scmp.le.s32.totalorder 2, %s25
      // Predicated region
      $region293: #{tpu_custom_call.1} parent=5 // pred_check
        %p2125 = pneg %p2124
      $region294: #{tpu_custom_call.1} parent=5 // pred_check_branch
        %2127 = sbr.rel (%p2125) target = $region296
      $region295: #{tpu_custom_call.1} parent=5 // pred_region
        %s2128 = ssub.s32 %s25, 2
        // Predicated region
        $region297: #{tpu_custom_call.1} parent=295 // pred_check
          %p2129 = pneg %p180
        $region298: #{tpu_custom_call.1} parent=295 // pred_check_branch
          %2131 = sbr.rel (%p2129) target = $region300
        $region299: #{tpu_custom_call.1} parent=295 // pred_region
          %p2132 = scmp.lt.s32.totalorder %s31, 1
          %s2133 = scalar_select %p2132, %s31, 1
          %s2134 = scalar_lea.vmem %s8, %s2133
        $region300: #{tpu_custom_call.1} parent=295 // pred_fallthru
          _
        // Predicated region
        $region301: #{tpu_custom_call.1} parent=295 // pred_check
          %p2135 = pneg %p206
        $region302: #{tpu_custom_call.1} parent=295 // pred_check_branch
          %2137 = sbr.rel (%p2135) target = $region304
        $region303: #{tpu_custom_call.1} parent=295 // pred_region
          %s2138 = sand.u32 %s191, 1
          %s2139 = scalar_lea.sflag [#allocation7], %s2138
          %s2140 = sand.u32 %s191, 1
          %s2141 = scalar_lea.vmem [#allocation6], %s2140
          %2142 = dma.done %s2139, 16
        $region304: #{tpu_custom_call.1} parent=295 // pred_fallthru
          _
      $region296: #{tpu_custom_call.1} parent=5 // pred_fallthru
        _
    $region6: #{tpu_custom_call.1} parent=1 // loop_footer
      %s29 = sadd.s32 1, %s25
    $region7: #{tpu_custom_call.1} parent=1 // loop_footer_branch
      %24 = sbr.rel target = $region3
    $region8: #{tpu_custom_call.1} parent=1 // loop_exit
      _
    %2143 = vsyncpa [#allocation7], 1
    %s2144 = scalar_lea.sflag [#allocation7], 1
    %2145 = vsyncpa %s2144, 1
  %2146 = vsyncmov [#allocation3]
  %s2147 = vpop.sfrf %2146
  %p2148 = scmp.eq.s32.totalorder %s2147, 0
  %p2149 = pneg %p2148
  %2151 = shalt.err (%p2149)
  %s2152 = scalar_lea.sflag [#allocation3], 1
  %2153 = vsyncmov %s2152
  %s2154 = vpop.sfrf %2153
  %p2155 = scmp.eq.s32.totalorder %s2154, 0
  %p2156 = pneg %p2155
  %2158 = shalt.err (%p2156)
  %s2159 = scalar_lea.sflag [#allocation3], 2
  %2160 = vsyncmov %s2159
  %s2161 = vpop.sfrf %2160
  %p2162 = scmp.eq.s32.totalorder %s2161, 0
  %p2163 = pneg %p2162
  %2165 = shalt.err (%p2163)
  %s2166 = scalar_lea.sflag [#allocation3], 3
  %2167 = vsyncmov %s2166
  %s2168 = vpop.sfrf %2167
  %p2169 = scmp.eq.s32.totalorder %s2168, 0
  %p2170 = pneg %p2169
  %2172 = shalt.err (%p2170)
  %s2173 = scalar_lea.sflag [#allocation3], 4
  %2174 = vsyncmov %s2173
  %s2175 = vpop.sfrf %2174
  %p2176 = scmp.eq.s32.totalorder %s2175, 0
  %p2177 = pneg %p2176
  %2179 = shalt.err (%p2177)
  %s2180 = scalar_lea.sflag [#allocation3], 5
  %2181 = vsyncmov %s2180
  %s2182 = vpop.sfrf %2181
  %p2183 = scmp.eq.s32.totalorder %s2182, 0
  %p2184 = pneg %p2183
  %2186 = shalt.err (%p2184)
  %s2187 = scalar_lea.sflag [#allocation3], 6
  %2188 = vsyncmov %s2187
  %s2189 = vpop.sfrf %2188
  %p2190 = scmp.eq.s32.totalorder %s2189, 0
  %p2191 = pneg %p2190
  %2193 = shalt.err (%p2191)
  %s2194 = scalar_lea.sflag [#allocation3], 7
  %2195 = vsyncmov %s2194
  %s2196 = vpop.sfrf %2195
  %p2197 = scmp.eq.s32.totalorder %s2196, 0
  %p2198 = pneg %p2197
  %2200 = shalt.err (%p2198)

</llo_original>
